<compile_context>
chip_gen: v7x
topology: tpu7x:2x2x1
jax: 0.10.0
libtpu: 0.0.40
codegen_flags: <defaults>
</compile_context>

<pallas_src>
import functools

import jax
import jax.numpy as jnp
from jax.experimental import pallas as pl
from jax.experimental.pallas import tpu as pltpu


# --------------------------------------------------------------------------
# Pallas kernel (one batch block of TB rows per grid step)
# --------------------------------------------------------------------------
def gnn_max_rnn_kernel(
    x_ref,       # (TB, F)         raw observation rows
    h_ref,       # (TB, H)         previous GRU hidden state
    w_emb_ref,   # (n_ent, F, 4H)  embedded branch weights [self, allies, enemies]
    b_self_ref,  # (1, 4H)         self bias (lanes 0:H, zeros elsewhere)
    w_gf_ref,    # (4H, 4H)        fused GRU feature->gate weight
    w_gh_ref,    # (H, 4H)         fused GRU hidden->gate weight
    b_g_ref,     # (1, 4H)         fused GRU bias
    w_out_ref,   # (H, A)          action head weight (transposed)
    b_out_ref,   # (1, A)
    q_ref,       # (TB, A)         output: Q values
    h_out_ref,   # (TB, H)         output: new hidden state
    *,
    n_ally,
    n_enemy,
    H,
):
    f32 = jnp.float32
    dot = functools.partial(jnp.dot, preferred_element_type=f32)

    x = x_ref[...]                                         # (TB, F)
    h_in = h_ref[...]                                      # (TB, H)

    # --- self branch (live lanes 0:H), gather folded into the weight --------
    feat = jnp.maximum(dot(x, w_emb_ref[0]) + b_self_ref[...], 0.0)   # (TB, 4H)

    # --- ally branch: gather-free per-entity dots, entity max, relu (H:2H) --
    ag = dot(x, w_emb_ref[1])
    for e in range(1, n_ally):
        ag = jnp.maximum(ag, dot(x, w_emb_ref[1 + e]))
    # --- enemy branch (lanes 2H:3H) -----------------------------------------
    en = dot(x, w_emb_ref[1 + n_ally])
    for e in range(1, n_enemy):
        en = jnp.maximum(en, dot(x, w_emb_ref[1 + n_ally + e]))
    # relu(max) == max(relu) (monotone); disjoint lane support -> plain adds
    feat = feat + jnp.maximum(ag, 0.0) + jnp.maximum(en, 0.0)          # (TB, 4H)

    # --- fused GRUCell: two accumulating lane-dense dots ---------------------
    g = dot(feat, w_gf_ref[...]) + dot(h_in, w_gh_ref[...]) + b_g_ref[...]
    r = jax.nn.sigmoid(g[:, 0 * H:1 * H])
    z = jax.nn.sigmoid(g[:, 1 * H:2 * H])
    n = jnp.tanh(g[:, 2 * H:3 * H] + r * g[:, 3 * H:4 * H])
    h_new = (1.0 - z) * n + z * h_in                                   # (TB, H)

    # --- output head ----------------------------------------------------------
    q_ref[...] = dot(h_new, w_out_ref[...]) + b_out_ref[...]
    h_out_ref[...] = h_new


# --------------------------------------------------------------------------
# One-time weight fusion: folds the feature gather + GRU fan-out into weights
# --------------------------------------------------------------------------
def fuse_params(params, cfg, input_dim):
    move = cfg["move_feats_size"]
    ef, ne = cfg["enemy_feats_size"], cfg["enemies_num"]
    af, na = cfg["agent_feats_size"], cfg["agents_num"]
    H = cfg["arn_hidden_size"]
    n_ally = na - 1
    f32 = jnp.float32
    H4 = 4 * H

    # feature-index bookkeeping (mirrors the PyTorch __init__)
    enemies_feat_start = move
    agents_feat_start = move + ef * ne + 1
    blood_feat_start = move + ef * ne + 1 + af * n_ally + 1

    # ---- embedded branch weights: (n_ent, F, 4H), zero outside the live rows/cols
    n_ent = 1 + n_ally + ne
    w_emb = jnp.zeros((n_ent, input_dim, H4), f32)
    w_self = params["w_self"].astype(f32)                   # (5, H): 4 move + blood
    w_emb = w_emb.at[0, 0:move, 0:H].set(w_self[0:move])
    w_emb = w_emb.at[0, blood_feat_start, 0:H].set(w_self[move])
    w_ag = params["w_ag"].astype(f32)                        # (af, H)
    for i in range(n_ally):
        s = agents_feat_start + i * af
        w_emb = w_emb.at[1 + i, s:s + af, H:2 * H].set(w_ag)
    w_en = params["w_en"].astype(f32)                        # (ef, H)
    for i in range(ne):
        s = enemies_feat_start + i * ef
        w_emb = w_emb.at[1 + n_ally + i, s:s + ef, 2 * H:3 * H].set(w_en)

    b_self = jnp.zeros((1, H4), f32).at[:, 0:H].set(params["b_self"].astype(f32))

    # ---- fused GRU weights:  g = feat @ W_gf + h @ W_gh + b_g
    #      g = [i_r+h_r | i_z+h_z | i_n | h_n]
    w_ih, w_hh = params["w_ih"].astype(f32), params["w_hh"].astype(f32)
    b_ih, b_hh = params["b_ih"].astype(f32), params["b_hh"].astype(f32)
    w_gf = jnp.zeros((H4, H4), f32).at[0:3 * H, 0:3 * H].set(w_ih)
    w_gh = jnp.zeros((H, H4), f32)
    w_gh = w_gh.at[:, 0:2 * H].set(w_hh[:, 0:2 * H])
    w_gh = w_gh.at[:, 3 * H:4 * H].set(w_hh[:, 2 * H:3 * H])
    b_g = jnp.concatenate(
        [b_ih[:, :2 * H] + b_hh[:, :2 * H], b_ih[:, 2 * H:], b_hh[:, 2 * H:]],
        axis=1,
    )

    return {
        "w_emb": w_emb, "b_self": b_self,
        "w_gf": w_gf, "w_gh": w_gh, "b_g": b_g,
        "w_out": params["w_out"].astype(f32), "b_out": params["b_out"].astype(f32),
    }


# --------------------------------------------------------------------------
# Batch-block size: big tiles, but aim for >= 2 blocks (v7x megacore)
# --------------------------------------------------------------------------
def _choose_block_rows(B, block_b):
    block_b = max(128, (int(block_b) // 128) * 128)
    tb = min(block_b, max(128, ((B + 1) // 2 + 127) // 128 * 128))
    if tb >= B:
        tb = B          # single full-extent block (tiny batch) — always legal
    return tb


# --------------------------------------------------------------------------
# Forward wrapper
# --------------------------------------------------------------------------
def gnn_max_rnn_forward(inputs, hidden_state, fused, cfg, *,
                        block_b=512, donate_hidden=False):
    ne, na = cfg["enemies_num"], cfg["agents_num"]
    H, A = cfg["arn_hidden_size"], cfg["n_actions"]
    assert na >= 2, "agents_num must be >= 2 (need at least one ally)"
    assert ne >= 1, "enemies_num must be >= 1"

    x = inputs.astype(jnp.float32)                       # (B, F) raw observations
    h = hidden_state.astype(jnp.float32).reshape(-1, H)  # (B, H)
    B, F = x.shape

    TB = _choose_block_rows(B, block_b)
    grid = (pl.cdiv(B, TB),)       # ragged last block is masked by Pallas

    weights = [fused["w_emb"], fused["b_self"], fused["w_gf"], fused["w_gh"],
               fused["b_g"], fused["w_out"], fused["b_out"]]
    # weights stay VMEM-resident: same block index for every grid step
    w_specs = [
        pl.BlockSpec(fused["w_emb"].shape, lambda i: (0, 0, 0)),
        pl.BlockSpec(fused["b_self"].shape, lambda i: (0, 0)),
        pl.BlockSpec(fused["w_gf"].shape, lambda i: (0, 0)),
        pl.BlockSpec(fused["w_gh"].shape, lambda i: (0, 0)),
        pl.BlockSpec(fused["b_g"].shape, lambda i: (0, 0)),
        pl.BlockSpec(fused["w_out"].shape, lambda i: (0, 0)),
        pl.BlockSpec(fused["b_out"].shape, lambda i: (0, 0)),
    ]

    kernel = functools.partial(
        gnn_max_rnn_kernel, n_ally=na - 1, n_enemy=ne, H=H)

    q, h_new = pl.pallas_call(
        kernel,
        out_shape=(
            jax.ShapeDtypeStruct((B, A), jnp.float32),
            jax.ShapeDtypeStruct((B, H), jnp.float32),
        ),
        grid=grid,
        in_specs=[
            pl.BlockSpec((TB, F), lambda i: (i, 0)),
            pl.BlockSpec((TB, H), lambda i: (i, 0)),
            *w_specs,
        ],
        out_specs=(
            pl.BlockSpec((TB, A), lambda i: (i, 0)),
            pl.BlockSpec((TB, H), lambda i: (i, 0)),
        ),
        # h_in -> h_out aliasing for scan/rollout callers (no fresh HBM alloc)
        input_output_aliases=({1: 1} if donate_hidden else {}),
        compiler_params=pltpu.CompilerParams(
            dimension_semantics=("parallel",),   # v7x: batch blocks over both TCs
        ),
    )(x, h, *weights)

    return q, h_new


# --------------------------------------------------------------------------
# Deterministic parameter init (shapes from the module's __init__)
# --------------------------------------------------------------------------
def make_params(key, cfg):
    H = cfg["arn_hidden_size"]
    ef = cfg["enemy_feats_size"]
    af = cfg["agent_feats_size"]
    n_actions = cfg["n_actions"]

    keys = jax.random.split(key, 10)

    def u(k, shape, scale=0.1):
        return jax.random.uniform(k, shape, jnp.float32, -scale, scale)

    # stored already transposed (in_features, out_features); biases as (1, out)
    return {
        "w_self": u(keys[0], (5, H)),
        "b_self": u(keys[1], (1, H)),
        "w_ag": u(keys[2], (af, H)),
        "w_en": u(keys[3], (ef, H)),
        "w_ih": u(keys[4], (3 * H, 3 * H)),   # GRU input size = 3H
        "b_ih": u(keys[5], (1, 3 * H)),
        "w_hh": u(keys[6], (H, 3 * H)),
        "b_hh": u(keys[7], (1, 3 * H)),
        "w_out": u(keys[8], (H, n_actions)),
        "b_out": u(keys[9], (1, n_actions)),
    }


# --------------------------------------------------------------------------
# Pure-JAX reference (mirrors the PyTorch forward exactly)
# --------------------------------------------------------------------------
def reference_forward(inputs, hidden, p, cfg):
    move = cfg["move_feats_size"]
    ef, ne = cfg["enemy_feats_size"], cfg["enemies_num"]
    af, na = cfg["agent_feats_size"], cfg["agents_num"]
    H = cfg["arn_hidden_size"]
    enemies_feat_start = move
    agents_feat_start = move + ef * ne + 1
    blood_feat_start = move + ef * ne + 1 + af * (na - 1) + 1

    self_input = jnp.concatenate(
        [inputs[:, :move], inputs[:, blood_feat_start:blood_feat_start + 1]], 1)
    self_hidden = jax.nn.relu(self_input @ p["w_self"] + p["b_self"])

    ag = jnp.stack(
        [inputs[:, agents_feat_start + i * af: agents_feat_start + (i + 1) * af]
         for i in range(na - 1)], 1)
    en = jnp.stack(
        [inputs[:, enemies_feat_start + i * ef: enemies_feat_start + (i + 1) * ef]
         for i in range(ne)], 1)
    max_ag = jnp.max(jax.nn.relu(ag @ p["w_ag"]), axis=1)
    max_en = jnp.max(jax.nn.relu(en @ p["w_en"]), axis=1)

    # NOTE: agent_nums / enemy_nums in the PyTorch forward are dead code.
    all_feat = jnp.concatenate([self_hidden, max_ag, max_en], -1)
    h_in = hidden.reshape(-1, H)
    gi = all_feat @ p["w_ih"] + p["b_ih"]
    gh = h_in @ p["w_hh"] + p["b_hh"]
    r = jax.nn.sigmoid(gi[:, :H] + gh[:, :H])
    z = jax.nn.sigmoid(gi[:, H:2 * H] + gh[:, H:2 * H])
    n = jnp.tanh(gi[:, 2 * H:] + r * gh[:, 2 * H:])
    h_new = (1 - z) * n + z * h_in
    q = h_new @ p["w_out"] + p["b_out"]
    return q, h_new


# --------------------------------------------------------------------------
if __name__ == "__main__":
    # small config consistent with the module's feature layout
    cfg = dict(
        move_feats_size=4,     # + 1 blood feature -> Linear(5, H) matches
        enemy_feats_size=5,
        enemies_num=3,
        agent_feats_size=5,
        agents_num=4,          # 3 allies
        arn_hidden_size=32,
        n_actions=8,
    )
    # feature dim: move(4) + enemies(15) + 1 + allies(15) + 1 + blood(1) + other(3)
    F = (cfg["move_feats_size"]
         + cfg["enemy_feats_size"] * cfg["enemies_num"] + 1
         + cfg["agent_feats_size"] * (cfg["agents_num"] - 1) + 1
         + 1 + 3)              # = 40
    B = 200                    # not a multiple of the block -> exercises ragged block
    H = cfg["arn_hidden_size"]

    key = jax.random.PRNGKey(0)
    k_in, k_h, k_p = jax.random.split(key, 3)
    inputs = jax.random.uniform(k_in, (B, F), jnp.float32, 0.0, 1.0)
    hidden = jax.random.uniform(k_h, (B, H), jnp.float32, -0.5, 0.5)
    params = make_params(k_p, cfg)

    # fuse / embed weights ONCE; reuse across every forward call
    fused = fuse_params(params, cfg, input_dim=F)

    q, h_new = gnn_max_rnn_forward(inputs, hidden, fused, cfg, block_b=512)
    jax.block_until_ready((q, h_new))

    q_ref, h_ref = reference_forward(inputs, hidden, params, cfg)
    assert q.shape == (B, cfg["n_actions"]) and h_new.shape == (B, H)
    assert jnp.allclose(q, q_ref, atol=1e-4, rtol=1e-4), "q mismatch vs reference"
    assert jnp.allclose(h_new, h_ref, atol=1e-4, rtol=1e-4), "hidden mismatch vs reference"

    print("KERNEL_OK")
</pallas_src>

<mosaic_0001>
module attributes {stable_mosaic.version = 11 : i64} {
  func.func @gnn_max_rnn_kernel(%arg0: i32, %arg1: memref<128x40xf32, #tpu.memory_space<vmem>>, %arg2: memref<128x32xf32, #tpu.memory_space<vmem>>, %arg3: memref<7x40x128xf32, #tpu.memory_space<vmem>>, %arg4: memref<1x128xf32, #tpu.memory_space<vmem>>, %arg5: memref<128x128xf32, #tpu.memory_space<vmem>>, %arg6: memref<32x128xf32, #tpu.memory_space<vmem>>, %arg7: memref<1x128xf32, #tpu.memory_space<vmem>>, %arg8: memref<32x8xf32, #tpu.memory_space<vmem>>, %arg9: memref<1x8xf32, #tpu.memory_space<vmem>>, %arg10: memref<128x8xf32, #tpu.memory_space<vmem>>, %arg11: memref<128x32xf32, #tpu.memory_space<vmem>>) attributes {dimension_semantics = [#tpu.dimension_semantics<parallel>], iteration_bounds = array<i64: 2>, scalar_prefetch = 0 : i64, scratch_operands = 0 : i64, tpu.core_type = #tpu.core_type<tc>, window_params = [{transform_indices = @transform_0, window_bounds = array<i64: 128, 40>}, {transform_indices = @transform_1, window_bounds = array<i64: 128, 32>}, {pipeline_mode = #tpu.pipeline_mode<synchronous>, transform_indices = @transform_2, window_bounds = array<i64: 7, 40, 128>}, {pipeline_mode = #tpu.pipeline_mode<synchronous>, transform_indices = @transform_3, window_bounds = array<i64: 1, 128>}, {pipeline_mode = #tpu.pipeline_mode<synchronous>, transform_indices = @transform_4, window_bounds = array<i64: 128, 128>}, {pipeline_mode = #tpu.pipeline_mode<synchronous>, transform_indices = @transform_5, window_bounds = array<i64: 32, 128>}, {pipeline_mode = #tpu.pipeline_mode<synchronous>, transform_indices = @transform_6, window_bounds = array<i64: 1, 128>}, {pipeline_mode = #tpu.pipeline_mode<synchronous>, transform_indices = @transform_7, window_bounds = array<i64: 32, 8>}, {pipeline_mode = #tpu.pipeline_mode<synchronous>, transform_indices = @transform_8, window_bounds = array<i64: 1, 8>}, {transform_indices = @transform_9, window_bounds = array<i64: 128, 8>}, {transform_indices = @transform_10, window_bounds = array<i64: 128, 32>}]} {
    %c0 = arith.constant 0 : index
    %c0_0 = arith.constant 0 : index
    %0 = vector.load %arg1[%c0, %c0_0] : memref<128x40xf32, #tpu.memory_space<vmem>>, vector<128x40xf32>
    %c0_1 = arith.constant 0 : index
    %c0_2 = arith.constant 0 : index
    %1 = vector.load %arg2[%c0_1, %c0_2] : memref<128x32xf32, #tpu.memory_space<vmem>>, vector<128x32xf32>
    %c0_3 = arith.constant 0 : index
    %c0_4 = arith.constant 0 : index
    %c0_5 = arith.constant 0 : index
    %2 = vector.load %arg3[%c0_3, %c0_4, %c0_5] : memref<7x40x128xf32, #tpu.memory_space<vmem>>, vector<1x40x128xf32>
    %3 = vector.shape_cast %2 : vector<1x40x128xf32> to vector<40x128xf32>
    %cst = arith.constant dense<0.000000e+00> : vector<128x128xf32>
    %4 = tpu.matmul %0, %3, %cst {dimension_numbers = #tpu.dot_dimension_numbers<[1], [0], [0], [1], [0, 0, 1, 1], [], []>} : vector<128x40xf32>, vector<40x128xf32>, vector<128x128xf32> -> vector<128x128xf32>
    %c0_6 = arith.constant 0 : index
    %c0_7 = arith.constant 0 : index
    %5 = vector.load %arg4[%c0_6, %c0_7] : memref<1x128xf32, #tpu.memory_space<vmem>>, vector<1x128xf32>
    %6 = vector.broadcast %5 : vector<1x128xf32> to vector<128x128xf32>
    %7 = arith.addf %4, %6 : vector<128x128xf32>
    %cst_8 = arith.constant 0.000000e+00 : f32
    %8 = vector.broadcast %cst_8 : f32 to vector<128x128xf32>
    %9 = arith.maximumf %7, %8 : vector<128x128xf32>
    %c1 = arith.constant 1 : index
    %c0_9 = arith.constant 0 : index
    %c0_10 = arith.constant 0 : index
    %10 = vector.load %arg3[%c1, %c0_9, %c0_10] : memref<7x40x128xf32, #tpu.memory_space<vmem>>, vector<1x40x128xf32>
    %11 = vector.shape_cast %10 : vector<1x40x128xf32> to vector<40x128xf32>
    %cst_11 = arith.constant dense<0.000000e+00> : vector<128x128xf32>
    %12 = tpu.matmul %0, %11, %cst_11 {dimension_numbers = #tpu.dot_dimension_numbers<[1], [0], [0], [1], [0, 0, 1, 1], [], []>} : vector<128x40xf32>, vector<40x128xf32>, vector<128x128xf32> -> vector<128x128xf32>
    %c2 = arith.constant 2 : index
    %c0_12 = arith.constant 0 : index
    %c0_13 = arith.constant 0 : index
    %13 = vector.load %arg3[%c2, %c0_12, %c0_13] : memref<7x40x128xf32, #tpu.memory_space<vmem>>, vector<1x40x128xf32>
    %14 = vector.shape_cast %13 : vector<1x40x128xf32> to vector<40x128xf32>
    %cst_14 = arith.constant dense<0.000000e+00> : vector<128x128xf32>
    %15 = tpu.matmul %0, %14, %cst_14 {dimension_numbers = #tpu.dot_dimension_numbers<[1], [0], [0], [1], [0, 0, 1, 1], [], []>} : vector<128x40xf32>, vector<40x128xf32>, vector<128x128xf32> -> vector<128x128xf32>
    %16 = arith.maximumf %12, %15 : vector<128x128xf32>
    %c3 = arith.constant 3 : index
    %c0_15 = arith.constant 0 : index
    %c0_16 = arith.constant 0 : index
    %17 = vector.load %arg3[%c3, %c0_15, %c0_16] : memref<7x40x128xf32, #tpu.memory_space<vmem>>, vector<1x40x128xf32>
    %18 = vector.shape_cast %17 : vector<1x40x128xf32> to vector<40x128xf32>
    %cst_17 = arith.constant dense<0.000000e+00> : vector<128x128xf32>
    %19 = tpu.matmul %0, %18, %cst_17 {dimension_numbers = #tpu.dot_dimension_numbers<[1], [0], [0], [1], [0, 0, 1, 1], [], []>} : vector<128x40xf32>, vector<40x128xf32>, vector<128x128xf32> -> vector<128x128xf32>
    %20 = arith.maximumf %16, %19 : vector<128x128xf32>
    %c4 = arith.constant 4 : index
    %c0_18 = arith.constant 0 : index
    %c0_19 = arith.constant 0 : index
    %21 = vector.load %arg3[%c4, %c0_18, %c0_19] : memref<7x40x128xf32, #tpu.memory_space<vmem>>, vector<1x40x128xf32>
    %22 = vector.shape_cast %21 : vector<1x40x128xf32> to vector<40x128xf32>
    %cst_20 = arith.constant dense<0.000000e+00> : vector<128x128xf32>
    %23 = tpu.matmul %0, %22, %cst_20 {dimension_numbers = #tpu.dot_dimension_numbers<[1], [0], [0], [1], [0, 0, 1, 1], [], []>} : vector<128x40xf32>, vector<40x128xf32>, vector<128x128xf32> -> vector<128x128xf32>
    %c5 = arith.constant 5 : index
    %c0_21 = arith.constant 0 : index
    %c0_22 = arith.constant 0 : index
    %24 = vector.load %arg3[%c5, %c0_21, %c0_22] : memref<7x40x128xf32, #tpu.memory_space<vmem>>, vector<1x40x128xf32>
    %25 = vector.shape_cast %24 : vector<1x40x128xf32> to vector<40x128xf32>
    %cst_23 = arith.constant dense<0.000000e+00> : vector<128x128xf32>
    %26 = tpu.matmul %0, %25, %cst_23 {dimension_numbers = #tpu.dot_dimension_numbers<[1], [0], [0], [1], [0, 0, 1, 1], [], []>} : vector<128x40xf32>, vector<40x128xf32>, vector<128x128xf32> -> vector<128x128xf32>
    %27 = arith.maximumf %23, %26 : vector<128x128xf32>
    %c6 = arith.constant 6 : index
    %c0_24 = arith.constant 0 : index
    %c0_25 = arith.constant 0 : index
    %28 = vector.load %arg3[%c6, %c0_24, %c0_25] : memref<7x40x128xf32, #tpu.memory_space<vmem>>, vector<1x40x128xf32>
    %29 = vector.shape_cast %28 : vector<1x40x128xf32> to vector<40x128xf32>
    %cst_26 = arith.constant dense<0.000000e+00> : vector<128x128xf32>
    %30 = tpu.matmul %0, %29, %cst_26 {dimension_numbers = #tpu.dot_dimension_numbers<[1], [0], [0], [1], [0, 0, 1, 1], [], []>} : vector<128x40xf32>, vector<40x128xf32>, vector<128x128xf32> -> vector<128x128xf32>
    %31 = arith.maximumf %27, %30 : vector<128x128xf32>
    %cst_27 = arith.constant 0.000000e+00 : f32
    %32 = vector.broadcast %cst_27 : f32 to vector<128x128xf32>
    %33 = arith.maximumf %20, %32 : vector<128x128xf32>
    %34 = arith.addf %9, %33 : vector<128x128xf32>
    %cst_28 = arith.constant 0.000000e+00 : f32
    %35 = vector.broadcast %cst_28 : f32 to vector<128x128xf32>
    %36 = arith.maximumf %31, %35 : vector<128x128xf32>
    %37 = arith.addf %34, %36 : vector<128x128xf32>
    %c0_29 = arith.constant 0 : index
    %c0_30 = arith.constant 0 : index
    %38 = vector.load %arg5[%c0_29, %c0_30] : memref<128x128xf32, #tpu.memory_space<vmem>>, vector<128x128xf32>
    %cst_31 = arith.constant dense<0.000000e+00> : vector<128x128xf32>
    %39 = tpu.matmul %37, %38, %cst_31 {dimension_numbers = #tpu.dot_dimension_numbers<[1], [0], [0], [1], [0, 0, 1, 1], [], []>} : vector<128x128xf32>, vector<128x128xf32>, vector<128x128xf32> -> vector<128x128xf32>
    %c0_32 = arith.constant 0 : index
    %c0_33 = arith.constant 0 : index
    %40 = vector.load %arg6[%c0_32, %c0_33] : memref<32x128xf32, #tpu.memory_space<vmem>>, vector<32x128xf32>
    %cst_34 = arith.constant dense<0.000000e+00> : vector<128x128xf32>
    %41 = tpu.matmul %1, %40, %cst_34 {dimension_numbers = #tpu.dot_dimension_numbers<[1], [0], [0], [1], [0, 0, 1, 1], [], []>} : vector<128x32xf32>, vector<32x128xf32>, vector<128x128xf32> -> vector<128x128xf32>
    %42 = arith.addf %39, %41 : vector<128x128xf32>
    %c0_35 = arith.constant 0 : index
    %c0_36 = arith.constant 0 : index
    %43 = vector.load %arg7[%c0_35, %c0_36] : memref<1x128xf32, #tpu.memory_space<vmem>>, vector<1x128xf32>
    %44 = vector.broadcast %43 : vector<1x128xf32> to vector<128x128xf32>
    %45 = arith.addf %42, %44 : vector<128x128xf32>
    %46 = vector.extract_strided_slice %45 {offsets = [0, 0], sizes = [128, 32], strides = [1, 1]} : vector<128x128xf32> to vector<128x32xf32>
    %47 = arith.negf %46 : vector<128x32xf32>
    %48 = math.exp %47 : vector<128x32xf32>
    %cst_37 = arith.constant 1.000000e+00 : f32
    %49 = vector.broadcast %cst_37 : f32 to vector<128x32xf32>
    %50 = arith.addf %49, %48 : vector<128x32xf32>
    %51 = arith.divf %49, %50 : vector<128x32xf32>
    %52 = vector.extract_strided_slice %45 {offsets = [0, 32], sizes = [128, 32], strides = [1, 1]} : vector<128x128xf32> to vector<128x32xf32>
    %53 = arith.negf %52 : vector<128x32xf32>
    %54 = math.exp %53 : vector<128x32xf32>
    %cst_38 = arith.constant 1.000000e+00 : f32
    %55 = vector.broadcast %cst_38 : f32 to vector<128x32xf32>
    %56 = arith.addf %55, %54 : vector<128x32xf32>
    %57 = arith.divf %55, %56 : vector<128x32xf32>
    %58 = vector.extract_strided_slice %45 {offsets = [0, 64], sizes = [128, 32], strides = [1, 1]} : vector<128x128xf32> to vector<128x32xf32>
    %59 = vector.extract_strided_slice %45 {offsets = [0, 96], sizes = [128, 32], strides = [1, 1]} : vector<128x128xf32> to vector<128x32xf32>
    %60 = arith.mulf %51, %59 : vector<128x32xf32>
    %61 = arith.addf %58, %60 : vector<128x32xf32>
    %62 = math.tanh %61 : vector<128x32xf32>
    %cst_39 = arith.constant 1.000000e+00 : f32
    %63 = vector.broadcast %cst_39 : f32 to vector<128x32xf32>
    %64 = arith.subf %63, %57 : vector<128x32xf32>
    %65 = arith.mulf %64, %62 : vector<128x32xf32>
    %66 = arith.mulf %57, %1 : vector<128x32xf32>
    %67 = arith.addf %65, %66 : vector<128x32xf32>
    %c0_40 = arith.constant 0 : index
    %c0_41 = arith.constant 0 : index
    %68 = vector.load %arg8[%c0_40, %c0_41] : memref<32x8xf32, #tpu.memory_space<vmem>>, vector<32x8xf32>
    %cst_42 = arith.constant dense<0.000000e+00> : vector<128x8xf32>
    %69 = tpu.matmul %67, %68, %cst_42 {dimension_numbers = #tpu.dot_dimension_numbers<[1], [0], [0], [1], [0, 0, 1, 1], [], []>} : vector<128x32xf32>, vector<32x8xf32>, vector<128x8xf32> -> vector<128x8xf32>
    %c0_43 = arith.constant 0 : index
    %c0_44 = arith.constant 0 : index
    %70 = vector.load %arg9[%c0_43, %c0_44] : memref<1x8xf32, #tpu.memory_space<vmem>>, vector<1x8xf32>
    %71 = vector.broadcast %70 : vector<1x8xf32> to vector<128x8xf32>
    %72 = arith.addf %69, %71 : vector<128x8xf32>
    %c0_45 = arith.constant 0 : index
    %c0_46 = arith.constant 0 : index
    %73 = vector.load %arg10[%c0_45, %c0_46] : memref<128x8xf32, #tpu.memory_space<vmem>>, vector<128x8xf32>
    tpu.vector_store %arg10[%c0_45, %c0_46], %72 {strides = array<i32>} : memref<128x8xf32, #tpu.memory_space<vmem>>, vector<128x8xf32>,
    %c0_47 = arith.constant 0 : index
    %c0_48 = arith.constant 0 : index
    %74 = vector.load %arg11[%c0_47, %c0_48] : memref<128x32xf32, #tpu.memory_space<vmem>>, vector<128x32xf32>
    tpu.vector_store %arg11[%c0_47, %c0_48], %67 {strides = array<i32>} : memref<128x32xf32, #tpu.memory_space<vmem>>, vector<128x32xf32>,
    return
  }
  func.func @transform_0(%arg0: i32) -> (i32, i32) {
    %c0_i32 = arith.constant 0 : i32
    %c0_i32_0 = arith.constant 0 : i32
    return %arg0, %c0_i32 : i32, i32
  }
  func.func @transform_1(%arg0: i32) -> (i32, i32) {
    %c0_i32 = arith.constant 0 : i32
    %c0_i32_0 = arith.constant 0 : i32
    return %arg0, %c0_i32 : i32, i32
  }
  func.func @transform_2(%arg0: i32) -> (i32, i32, i32) {
    %c0_i32 = arith.constant 0 : i32
    %c0_i32_0 = arith.constant 0 : i32
    %c0_i32_1 = arith.constant 0 : i32
    %c0_i32_2 = arith.constant 0 : i32
    return %c0_i32, %c0_i32_0, %c0_i32_1 : i32, i32, i32
  }
  func.func @transform_3(%arg0: i32) -> (i32, i32) {
    %c0_i32 = arith.constant 0 : i32
    %c0_i32_0 = arith.constant 0 : i32
    %c0_i32_1 = arith.constant 0 : i32
    return %c0_i32, %c0_i32_0 : i32, i32
  }
  func.func @transform_4(%arg0: i32) -> (i32, i32) {
    %c0_i32 = arith.constant 0 : i32
    %c0_i32_0 = arith.constant 0 : i32
    %c0_i32_1 = arith.constant 0 : i32
    return %c0_i32, %c0_i32_0 : i32, i32
  }
  func.func @transform_5(%arg0: i32) -> (i32, i32) {
    %c0_i32 = arith.constant 0 : i32
    %c0_i32_0 = arith.constant 0 : i32
    %c0_i32_1 = arith.constant 0 : i32
    return %c0_i32, %c0_i32_0 : i32, i32
  }
  func.func @transform_6(%arg0: i32) -> (i32, i32) {
    %c0_i32 = arith.constant 0 : i32
    %c0_i32_0 = arith.constant 0 : i32
    %c0_i32_1 = arith.constant 0 : i32
    return %c0_i32, %c0_i32_0 : i32, i32
  }
  func.func @transform_7(%arg0: i32) -> (i32, i32) {
    %c0_i32 = arith.constant 0 : i32
    %c0_i32_0 = arith.constant 0 : i32
    %c0_i32_1 = arith.constant 0 : i32
    return %c0_i32, %c0_i32_0 : i32, i32
  }
  func.func @transform_8(%arg0: i32) -> (i32, i32) {
    %c0_i32 = arith.constant 0 : i32
    %c0_i32_0 = arith.constant 0 : i32
    %c0_i32_1 = arith.constant 0 : i32
    return %c0_i32, %c0_i32_0 : i32, i32
  }
  func.func @transform_9(%arg0: i32) -> (i32, i32) {
    %c0_i32 = arith.constant 0 : i32
    %c0_i32_0 = arith.constant 0 : i32
    return %arg0, %c0_i32 : i32, i32
  }
  func.func @transform_10(%arg0: i32) -> (i32, i32) {
    %c0_i32 = arith.constant 0 : i32
    %c0_i32_0 = arith.constant 0 : i32
    return %arg0, %c0_i32 : i32, i32
  }
}

</mosaic_0001>

<llo_original>
// kernel: tpu_custom_call.1
$region0: #{tpu_custom_call.1}
  #allocation0 [shape = 'u32[]', space=smem, size = 0x4, offset = 0x4, fixed_abs, tag = 'smem constant byte address 0x4 - core index']
  #allocation1 [shape = 'u32[144,128]{1,0:T(1,128)}', space=vmem, size = 0x12000, scoped, tag = 'internal scratch']
  %s0 = inlined_call_operand.vmem [shape: f32[200,40], index: 0, kind: input, shape index: {}]
  %s1 = inlined_call_operand.vmem [shape: f32[200,32], index: 1, kind: input, shape index: {}]
  %s2 = inlined_call_operand.vmem [shape: f32[7,40,128], index: 2, kind: input, shape index: {}]
  %s3 = inlined_call_operand.vmem [shape: f32[1,128], index: 3, kind: input, shape index: {}]
  %s4 = inlined_call_operand.vmem [shape: f32[128,128], index: 4, kind: input, shape index: {}]
  %s5 = inlined_call_operand.vmem [shape: f32[32,128], index: 5, kind: input, shape index: {}]
  %s6 = inlined_call_operand.vmem [shape: f32[1,128], index: 6, kind: input, shape index: {}]
  %s7 = inlined_call_operand.vmem [shape: f32[32,8], index: 7, kind: input, shape index: {}]
  %s8 = inlined_call_operand.vmem [shape: f32[1,8], index: 8, kind: input, shape index: {}]
  %s9 = inlined_call_operand.vmem [shape: f32[200,8], index: 9, kind: output, shape index: {0}]
  %s10 = inlined_call_operand.vmem [shape: f32[200,32], index: 10, kind: output, shape index: {1}]
  %11 = xla_tuple %s9, %s10
  %s12 = sld [smem:[#allocation0]]
  $region173: #{tpu_custom_call.1} parent=0
    _
  %s14 = ssub.s32 1, %s12
  %s15 = scalar_select 0, %s14, %s12
  $region1: #{tpu_custom_call.1} parent=0
    #allocation2 [shape = 'u8[131072]{0}', space=vmem, size = 0x20000, scoped, tag = 'output window, operand 0']
    #allocation3 [shape = 'u8[131072]{0}', space=vmem, size = 0x20000, scoped, tag = 'output window, operand 1']
    loop: start=0, step=1, limit=4
    $region2: #{tpu_custom_call.1} parent=1 // loop_pre_header
      _
    $region3: #{tpu_custom_call.1} parent=1 // loop_header
      %s17 = sphi 0, %s21
      %p18 = scmp.ge.s32.totalorder %s17, 4
      %s27 = sphi 0, %s29
      %s30 = sphi 0, %s27
      %s31 = sphi 0, %s30
      %s47 = sphi 0, %s31
      %s53 = sphi 0, %s55
      %s56 = sphi 0, %s53
      %s57 = sphi 0, %s56
      %s73 = sphi 0, %s57
      %s77 = sphi 0, %s77
      %s79 = sphi 0, %s77
      %s80 = sphi 0, %s79
      %s94 = sphi 0, %s80
      %s98 = sphi 0, %s98
      %s100 = sphi 0, %s98
      %s101 = sphi 0, %s100
      %s115 = sphi 0, %s101
      %s119 = sphi 0, %s119
      %s121 = sphi 0, %s119
      %s122 = sphi 0, %s121
      %s136 = sphi 0, %s122
      %s140 = sphi 0, %s140
      %s142 = sphi 0, %s140
      %s143 = sphi 0, %s142
      %s157 = sphi 0, %s143
      %s161 = sphi 0, %s161
      %s163 = sphi 0, %s161
      %s164 = sphi 0, %s163
      %s178 = sphi 0, %s164
      %s182 = sphi 0, %s182
      %s184 = sphi 0, %s182
      %s185 = sphi 0, %s184
      %s199 = sphi 0, %s185
      %s203 = sphi 0, %s203
      %s205 = sphi 0, %s203
      %s206 = sphi 0, %s205
      %s220 = sphi 0, %s206
      %s226 = sphi 0, %s228
      %s229 = sphi 0, %s226
      %s230 = sphi 0, %s229
      %s246 = sphi 0, %s230
      %s252 = sphi 0, %s254
      %s255 = sphi 0, %s252
      %s256 = sphi 0, %s255
      %s272 = sphi 0, %s256
    $region4: #{tpu_custom_call.1} parent=1 // loop_header_branch
      %20 = sbr.rel (%p18) target = $region8
    $region5: #{tpu_custom_call.1} parent=1 // loop_body
      %s22 = ssub.s32 %s17, 1
      %s23 = ssub.s32 %s17, 2
      %s24 = sadd.s32 %s17, 1
      %s25 = ssub.s32 %s17, %s24
      %p26 = scmp.eq.s32.totalorder %s25, 0
      %s28 = sadd.s32 %s27, 1
      %s29 = scalar_select %p26, %s27, %s28
      %p32 = pneg %p26
      %p33 = scmp.eq.s32.totalorder %s17, 1
      %p34 = por %p32, %p33
      %p35 = scmp.ne.s32.totalorder %s27, %s30
      %p36 = scmp.eq.s32.totalorder %s17, 0
      %p37 = por %p35, %p36
      %p38 = scmp.ne.s32.totalorder %s27, %s30
      %p39 = scmp.eq.s32.totalorder %s22, 1
      %p40 = por %p38, %p39
      %p41 = scmp.ne.s32.totalorder %s30, %s31
      %p42 = scmp.eq.s32.totalorder %s22, 0
      %p43 = por %p41, %p42
      %p44 = scmp.ne.s32.totalorder %s30, %s31
      %p45 = scmp.eq.s32.totalorder %s23, 1
      %p46 = por %p44, %p45
      %p48 = scmp.ne.s32.totalorder %s31, %s47
      %p49 = scmp.eq.s32.totalorder %s23, 0
      %p50 = por %p48, %p49
      %s51 = ssub.s32 %s17, %s24
      %p52 = scmp.eq.s32.totalorder %s51, 0
      %s54 = sadd.s32 %s53, 1
      %s55 = scalar_select %p52, %s53, %s54
      %p58 = pneg %p52
      %p59 = scmp.eq.s32.totalorder %s17, 1
      %p60 = por %p58, %p59
      %p61 = scmp.ne.s32.totalorder %s53, %s56
      %p62 = scmp.eq.s32.totalorder %s17, 0
      %p63 = por %p61, %p62
      %p64 = scmp.ne.s32.totalorder %s53, %s56
      %p65 = scmp.eq.s32.totalorder %s22, 1
      %p66 = por %p64, %p65
      %p67 = scmp.ne.s32.totalorder %s56, %s57
      %p68 = scmp.eq.s32.totalorder %s22, 0
      %p69 = por %p67, %p68
      %p70 = scmp.ne.s32.totalorder %s56, %s57
      %p71 = scmp.eq.s32.totalorder %s23, 1
      %p72 = por %p70, %p71
      %p74 = scmp.ne.s32.totalorder %s57, %s73
      %p75 = scmp.eq.s32.totalorder %s23, 0
      %p76 = por %p74, %p75
      %s78 = sadd.s32 %s77, 1
      %p81 = scmp.eq.s32.totalorder %s17, 1
      %p82 = scmp.ne.s32.totalorder %s77, %s79
      %p83 = scmp.eq.s32.totalorder %s17, 0
      %p84 = por %p82, %p83
      %p85 = scmp.ne.s32.totalorder %s77, %s79
      %p86 = scmp.eq.s32.totalorder %s22, 1
      %p87 = por %p85, %p86
      %p88 = scmp.ne.s32.totalorder %s79, %s80
      %p89 = scmp.eq.s32.totalorder %s22, 0
      %p90 = por %p88, %p89
      %p91 = scmp.ne.s32.totalorder %s79, %s80
      %p92 = scmp.eq.s32.totalorder %s23, 1
      %p93 = por %p91, %p92
      %p95 = scmp.ne.s32.totalorder %s80, %s94
      %p96 = scmp.eq.s32.totalorder %s23, 0
      %p97 = por %p95, %p96
      %s99 = sadd.s32 %s98, 1
      %p102 = scmp.eq.s32.totalorder %s17, 1
      %p103 = scmp.ne.s32.totalorder %s98, %s100
      %p104 = scmp.eq.s32.totalorder %s17, 0
      %p105 = por %p103, %p104
      %p106 = scmp.ne.s32.totalorder %s98, %s100
      %p107 = scmp.eq.s32.totalorder %s22, 1
      %p108 = por %p106, %p107
      %p109 = scmp.ne.s32.totalorder %s100, %s101
      %p110 = scmp.eq.s32.totalorder %s22, 0
      %p111 = por %p109, %p110
      %p112 = scmp.ne.s32.totalorder %s100, %s101
      %p113 = scmp.eq.s32.totalorder %s23, 1
      %p114 = por %p112, %p113
      %p116 = scmp.ne.s32.totalorder %s101, %s115
      %p117 = scmp.eq.s32.totalorder %s23, 0
      %p118 = por %p116, %p117
      %s120 = sadd.s32 %s119, 1
      %p123 = scmp.eq.s32.totalorder %s17, 1
      %p124 = scmp.ne.s32.totalorder %s119, %s121
      %p125 = scmp.eq.s32.totalorder %s17, 0
      %p126 = por %p124, %p125
      %p127 = scmp.ne.s32.totalorder %s119, %s121
      %p128 = scmp.eq.s32.totalorder %s22, 1
      %p129 = por %p127, %p128
      %p130 = scmp.ne.s32.totalorder %s121, %s122
      %p131 = scmp.eq.s32.totalorder %s22, 0
      %p132 = por %p130, %p131
      %p133 = scmp.ne.s32.totalorder %s121, %s122
      %p134 = scmp.eq.s32.totalorder %s23, 1
      %p135 = por %p133, %p134
      %p137 = scmp.ne.s32.totalorder %s122, %s136
      %p138 = scmp.eq.s32.totalorder %s23, 0
      %p139 = por %p137, %p138
      %s141 = sadd.s32 %s140, 1
      %p144 = scmp.eq.s32.totalorder %s17, 1
      %p145 = scmp.ne.s32.totalorder %s140, %s142
      %p146 = scmp.eq.s32.totalorder %s17, 0
      %p147 = por %p145, %p146
      %p148 = scmp.ne.s32.totalorder %s140, %s142
      %p149 = scmp.eq.s32.totalorder %s22, 1
      %p150 = por %p148, %p149
      %p151 = scmp.ne.s32.totalorder %s142, %s143
      %p152 = scmp.eq.s32.totalorder %s22, 0
      %p153 = por %p151, %p152
      %p154 = scmp.ne.s32.totalorder %s142, %s143
      %p155 = scmp.eq.s32.totalorder %s23, 1
      %p156 = por %p154, %p155
      %p158 = scmp.ne.s32.totalorder %s143, %s157
      %p159 = scmp.eq.s32.totalorder %s23, 0
      %p160 = por %p158, %p159
      %s162 = sadd.s32 %s161, 1
      %p165 = scmp.eq.s32.totalorder %s17, 1
      %p166 = scmp.ne.s32.totalorder %s161, %s163
      %p167 = scmp.eq.s32.totalorder %s17, 0
      %p168 = por %p166, %p167
      %p169 = scmp.ne.s32.totalorder %s161, %s163
      %p170 = scmp.eq.s32.totalorder %s22, 1
      %p171 = por %p169, %p170
      %p172 = scmp.ne.s32.totalorder %s163, %s164
      %p173 = scmp.eq.s32.totalorder %s22, 0
      %p174 = por %p172, %p173
      %p175 = scmp.ne.s32.totalorder %s163, %s164
      %p176 = scmp.eq.s32.totalorder %s23, 1
      %p177 = por %p175, %p176
      %p179 = scmp.ne.s32.totalorder %s164, %s178
      %p180 = scmp.eq.s32.totalorder %s23, 0
      %p181 = por %p179, %p180
      %s183 = sadd.s32 %s182, 1
      %p186 = scmp.eq.s32.totalorder %s17, 1
      %p187 = scmp.ne.s32.totalorder %s182, %s184
      %p188 = scmp.eq.s32.totalorder %s17, 0
      %p189 = por %p187, %p188
      %p190 = scmp.ne.s32.totalorder %s182, %s184
      %p191 = scmp.eq.s32.totalorder %s22, 1
      %p192 = por %p190, %p191
      %p193 = scmp.ne.s32.totalorder %s184, %s185
      %p194 = scmp.eq.s32.totalorder %s22, 0
      %p195 = por %p193, %p194
      %p196 = scmp.ne.s32.totalorder %s184, %s185
      %p197 = scmp.eq.s32.totalorder %s23, 1
      %p198 = por %p196, %p197
      %p200 = scmp.ne.s32.totalorder %s185, %s199
      %p201 = scmp.eq.s32.totalorder %s23, 0
      %p202 = por %p200, %p201
      %s204 = sadd.s32 %s203, 1
      %p207 = scmp.eq.s32.totalorder %s17, 1
      %p208 = scmp.ne.s32.totalorder %s203, %s205
      %p209 = scmp.eq.s32.totalorder %s17, 0
      %p210 = por %p208, %p209
      %p211 = scmp.ne.s32.totalorder %s203, %s205
      %p212 = scmp.eq.s32.totalorder %s22, 1
      %p213 = por %p211, %p212
      %p214 = scmp.ne.s32.totalorder %s205, %s206
      %p215 = scmp.eq.s32.totalorder %s22, 0
      %p216 = por %p214, %p215
      %p217 = scmp.ne.s32.totalorder %s205, %s206
      %p218 = scmp.eq.s32.totalorder %s23, 1
      %p219 = por %p217, %p218
      %p221 = scmp.ne.s32.totalorder %s206, %s220
      %p222 = scmp.eq.s32.totalorder %s23, 0
      %p223 = por %p221, %p222
      %s224 = ssub.s32 %s17, %s24
      %p225 = scmp.eq.s32.totalorder %s224, 0
      %s227 = sadd.s32 %s226, 1
      %s228 = scalar_select %p225, %s226, %s227
      %p231 = pneg %p225
      %p232 = scmp.eq.s32.totalorder %s17, 1
      %p233 = por %p231, %p232
      %p234 = scmp.ne.s32.totalorder %s226, %s229
      %p235 = scmp.eq.s32.totalorder %s17, 0
      %p236 = por %p234, %p235
      %p237 = scmp.ne.s32.totalorder %s226, %s229
      %p238 = scmp.eq.s32.totalorder %s22, 1
      %p239 = por %p237, %p238
      %p240 = scmp.ne.s32.totalorder %s229, %s230
      %p241 = scmp.eq.s32.totalorder %s22, 0
      %p242 = por %p240, %p241
      %p243 = scmp.ne.s32.totalorder %s229, %s230
      %p244 = scmp.eq.s32.totalorder %s23, 1
      %p245 = por %p243, %p244
      %p247 = scmp.ne.s32.totalorder %s230, %s246
      %p248 = scmp.eq.s32.totalorder %s23, 0
      %p249 = por %p247, %p248
      %s250 = ssub.s32 %s17, %s24
      %p251 = scmp.eq.s32.totalorder %s250, 0
      %s253 = sadd.s32 %s252, 1
      %s254 = scalar_select %p251, %s252, %s253
      %p257 = pneg %p251
      %p258 = scmp.eq.s32.totalorder %s17, 1
      %p259 = por %p257, %p258
      %p260 = scmp.ne.s32.totalorder %s252, %s255
      %p261 = scmp.eq.s32.totalorder %s17, 0
      %p262 = por %p260, %p261
      %p263 = scmp.ne.s32.totalorder %s252, %s255
      %p264 = scmp.eq.s32.totalorder %s22, 1
      %p265 = por %p263, %p264
      %p266 = scmp.ne.s32.totalorder %s255, %s256
      %p267 = scmp.eq.s32.totalorder %s22, 0
      %p268 = por %p266, %p267
      %p269 = scmp.ne.s32.totalorder %s255, %s256
      %p270 = scmp.eq.s32.totalorder %s23, 1
      %p271 = por %p269, %p270
      %p273 = scmp.ne.s32.totalorder %s256, %s272
      %p274 = scmp.eq.s32.totalorder %s23, 0
      %p275 = por %p273, %p274
      %p276 = scmp.le.s32.totalorder 1, %s17
      %p277 = scmp.lt.s32.totalorder %s17, 3
      %p278 = pnand %p276, %p277
      %p279 = pneg %p278
      // Predicated region
      $region9: #{tpu_custom_call.1} parent=5 // pred_check
        _
      $region10: #{tpu_custom_call.1} parent=5 // pred_check_branch
        %281 = sbr.rel (%p278) target = $region12
      $region11: #{tpu_custom_call.1} parent=5 // pred_region
        %s282 = ssub.s32 %s17, 1
        // Predicated region
        $region13: #{tpu_custom_call.1} parent=11 // pred_check
          %p283 = pneg %p90
        $region14: #{tpu_custom_call.1} parent=11 // pred_check_branch
          %285 = sbr.rel (%p283) target = $region16
        $region15: #{tpu_custom_call.1} parent=11 // pred_region
          _
        $region16: #{tpu_custom_call.1} parent=11 // pred_fallthru
          _
        // Predicated region
        $region17: #{tpu_custom_call.1} parent=11 // pred_check
          %p286 = pneg %p111
        $region18: #{tpu_custom_call.1} parent=11 // pred_check_branch
          %288 = sbr.rel (%p286) target = $region20
        $region19: #{tpu_custom_call.1} parent=11 // pred_region
          _
        $region20: #{tpu_custom_call.1} parent=11 // pred_fallthru
          _
        // Predicated region
        $region21: #{tpu_custom_call.1} parent=11 // pred_check
          %p289 = pneg %p132
        $region22: #{tpu_custom_call.1} parent=11 // pred_check_branch
          %291 = sbr.rel (%p289) target = $region24
        $region23: #{tpu_custom_call.1} parent=11 // pred_region
          _
        $region24: #{tpu_custom_call.1} parent=11 // pred_fallthru
          _
        // Predicated region
        $region25: #{tpu_custom_call.1} parent=11 // pred_check
          %p292 = pneg %p153
        $region26: #{tpu_custom_call.1} parent=11 // pred_check_branch
          %294 = sbr.rel (%p292) target = $region28
        $region27: #{tpu_custom_call.1} parent=11 // pred_region
          _
        $region28: #{tpu_custom_call.1} parent=11 // pred_fallthru
          _
        // Predicated region
        $region29: #{tpu_custom_call.1} parent=11 // pred_check
          %p295 = pneg %p174
        $region30: #{tpu_custom_call.1} parent=11 // pred_check_branch
          %297 = sbr.rel (%p295) target = $region32
        $region31: #{tpu_custom_call.1} parent=11 // pred_region
          _
        $region32: #{tpu_custom_call.1} parent=11 // pred_fallthru
          _
        // Predicated region
        $region33: #{tpu_custom_call.1} parent=11 // pred_check
          %p298 = pneg %p195
        $region34: #{tpu_custom_call.1} parent=11 // pred_check_branch
          %300 = sbr.rel (%p298) target = $region36
        $region35: #{tpu_custom_call.1} parent=11 // pred_region
          _
        $region36: #{tpu_custom_call.1} parent=11 // pred_fallthru
          _
        // Predicated region
        $region37: #{tpu_custom_call.1} parent=11 // pred_check
          %p301 = pneg %p216
        $region38: #{tpu_custom_call.1} parent=11 // pred_check_branch
          %303 = sbr.rel (%p301) target = $region40
        $region39: #{tpu_custom_call.1} parent=11 // pred_region
          _
        $region40: #{tpu_custom_call.1} parent=11 // pred_fallthru
          _
      $region12: #{tpu_custom_call.1} parent=5 // pred_fallthru
        _
      %p304 = scmp.lt.s32.totalorder %s17, 2
      // Predicated region
      $region41: #{tpu_custom_call.1} parent=5 // pred_check
        %p305 = pneg %p304
      $region42: #{tpu_custom_call.1} parent=5 // pred_check_branch
        %307 = sbr.rel (%p305) target = $region44
      $region43: #{tpu_custom_call.1} parent=5 // pred_region
        // Predicated region
        $region45: #{tpu_custom_call.1} parent=43 // pred_check
          %p308 = pneg %p37
        $region46: #{tpu_custom_call.1} parent=43 // pred_check_branch
          %310 = sbr.rel (%p308) target = $region48
        $region47: #{tpu_custom_call.1} parent=43 // pred_region
          %s311 = smul.u32 16, %s17
          %s312 = ssub.s32 25, %s311
          %p313 = scmp.lt.s32.totalorder %s312, 16
          %s314 = scalar_select %p313, %s312, 16
          %s315 = smul.u32 128, %s314
          %p316 = scmp.lt.s32.totalorder %s311, 24
          %s317 = scalar_select %p316, %s311, 24
          %s318 = smul.addr %s317, 8
          %s319 = scalar_lea.vmem %s0, %s318
          %s320 = smul.u32 16, %s17
          %s321 = ssub.s32 25, %s320
          %p322 = scmp.lt.s32.totalorder %s321, 16
          %s323 = scalar_select %p322, %s321, 16
          %s324 = smul.u32 128, %s323
        $region48: #{tpu_custom_call.1} parent=43 // pred_fallthru
          _
        // Predicated region
        $region49: #{tpu_custom_call.1} parent=43 // pred_check
          %p325 = pneg %p63
        $region50: #{tpu_custom_call.1} parent=43 // pred_check_branch
          %327 = sbr.rel (%p325) target = $region52
        $region51: #{tpu_custom_call.1} parent=43 // pred_region
          %s328 = smul.u32 16, %s17
          %s329 = ssub.s32 25, %s328
          %p330 = scmp.lt.s32.totalorder %s329, 16
          %s331 = scalar_select %p330, %s329, 16
          %s332 = smul.u32 128, %s331
          %p333 = scmp.lt.s32.totalorder %s328, 24
          %s334 = scalar_select %p333, %s328, 24
          %s335 = smul.addr %s334, 8
          %s336 = scalar_lea.vmem %s1, %s335
          %s337 = smul.u32 16, %s17
          %s338 = ssub.s32 25, %s337
          %p339 = scmp.lt.s32.totalorder %s338, 16
          %s340 = scalar_select %p339, %s338, 16
          %s341 = smul.u32 128, %s340
        $region52: #{tpu_custom_call.1} parent=43 // pred_fallthru
          _
      $region44: #{tpu_custom_call.1} parent=5 // pred_fallthru
        _
      %p342 = scmp.le.s32.totalorder 1, %s17
      %p343 = scmp.lt.s32.totalorder %s17, 3
      %p344 = pnand %p342, %p343
      %p345 = pneg %p344
      // Predicated region
      $region53: #{tpu_custom_call.1} parent=5 // pred_check
        _
      $region54: #{tpu_custom_call.1} parent=5 // pred_check_branch
        %347 = sbr.rel (%p344) target = $region56
      $region55: #{tpu_custom_call.1} parent=5 // pred_region
        %s348 = ssub.s32 %s17, 1
        %s349 = smul.u32 16, %s22
        %s350 = ssub.s32 25, %s349
        %p351 = scmp.lt.s32.totalorder %s350, 16
        %s352 = scalar_select %p351, %s350, 16
        %s353 = smul.u32 128, %s352
        %p354 = scmp.lt.s32.totalorder %s349, 24
        %s355 = scalar_select %p354, %s349, 24
        %s356 = smul.addr %s355, 8
        %s357 = scalar_lea.vmem %s0, %s356
        %p358 = pneg %p43
        %p359 = pneg %p40
        %s360 = smul.u32 16, %s22
        %s361 = ssub.s32 25, %s360
        %p362 = scmp.lt.s32.totalorder %s361, 16
        %s363 = scalar_select %p362, %s361, 16
        %s364 = smul.u32 128, %s363
        %p365 = scmp.lt.s32.totalorder %s360, 24
        %s366 = scalar_select %p365, %s360, 24
        %s367 = smul.addr %s366, 8
        %s368 = scalar_lea.vmem %s1, %s367
        %p369 = pneg %p69
        %p370 = pneg %p66
        %p371 = pneg %p90
        %p372 = pneg %p87
        %p373 = pneg %p111
        %p374 = pneg %p108
        %p375 = pneg %p132
        %p376 = pneg %p129
        %p377 = pneg %p153
        %p378 = pneg %p150
        %p379 = pneg %p174
        %p380 = pneg %p171
        %p381 = pneg %p195
        %p382 = pneg %p192
        %p383 = pneg %p216
        %p384 = pneg %p213
        %p385 = pneg %p242
        %p386 = pneg %p239
        %s387 = sand.u32 %s229, 1
        %s388 = sand.u32 %s229, 1
        %s389 = smul.addr %s388, 128
        %s390 = scalar_lea.vmem [#allocation2], %s389
        %p391 = pneg %p268
        %p392 = pneg %p265
        %s393 = sand.u32 %s255, 1
        %s394 = sand.u32 %s255, 1
        %s395 = smul.addr %s394, 128
        %s396 = scalar_lea.vmem [#allocation3], %s395
        %s397 = smul.u32 16, %s22
        %s398 = ssub.s32 25, %s397
        %p399 = scmp.lt.s32.totalorder %s398, 16
        %s400 = scalar_select %p399, %s398, 16
        %s401 = smul.u32 128, %s400
        %p402 = scmp.lt.s32.totalorder %s397, 24
        %s403 = scalar_select %p402, %s397, 24
        %s404 = smul.addr %s403, 8
        %s405 = scalar_lea.vmem %s0, %s404
        %s406 = smul.u32 16, %s22
        %s407 = ssub.s32 25, %s406
        %p408 = scmp.lt.s32.totalorder %s407, 16
        %s409 = scalar_select %p408, %s407, 16
        %s410 = smul.u32 128, %s409
        %s411 = smul.u32 16, %s22
        %s412 = ssub.s32 25, %s411
        %p413 = scmp.lt.s32.totalorder %s412, 16
        %s414 = scalar_select %p413, %s412, 16
        %s415 = smul.u32 128, %s414
        %p416 = scmp.lt.s32.totalorder %s411, 24
        %s417 = scalar_select %p416, %s411, 24
        %s418 = smul.addr %s417, 8
        %s419 = scalar_lea.vmem %s1, %s418
        %s420 = smul.u32 16, %s22
        %s421 = ssub.s32 25, %s420
        %p422 = scmp.lt.s32.totalorder %s421, 16
        %s423 = scalar_select %p422, %s421, 16
        %s424 = smul.u32 128, %s423
        %s425 = smul.u32 16, %s22
        %s426 = ssub.s32 25, %s425
        %p427 = scmp.lt.s32.totalorder %s426, 16
        %s428 = scalar_select %p427, %s426, 16
        %s429 = smul.u32 128, %s428
        %s430 = smul.u32 16, %s22
        %s431 = ssub.s32 25, %s430
        %p432 = scmp.lt.s32.totalorder %s431, 16
        %s433 = scalar_select %p432, %s431, 16
        %s434 = smul.u32 128, %s433
        %v435 = vld [vmem:[%s405] sm:$0xff]
        %v436 = vld [vmem:[%s405 + $0x8] sm:$0xff]
        %v437 = vld [vmem:[%s405 + $0x10] sm:$0xff]
        %v438 = vld [vmem:[%s405 + $0x18] sm:$0xff]
        %v439 = vld [vmem:[%s405 + $0x20] sm:$0xff]
        %v440 = vld [vmem:[%s405 + $0x28] sm:$0xff]
        %v441 = vld [vmem:[%s405 + $0x30] sm:$0xff]
        %v442 = vld [vmem:[%s405 + $0x38] sm:$0xff]
        %v443 = vld [vmem:[%s405 + $0x40] sm:$0xff]
        %v444 = vld [vmem:[%s405 + $0x48] sm:$0xff]
        %v445 = vld [vmem:[%s405 + $0x50] sm:$0xff]
        %v446 = vld [vmem:[%s405 + $0x58] sm:$0xff]
        %v447 = vld [vmem:[%s405 + $0x60] sm:$0xff]
        %v448 = vld [vmem:[%s405 + $0x68] sm:$0xff]
        %v449 = vld [vmem:[%s405 + $0x70] sm:$0xff]
        %v450 = vld [vmem:[%s405 + $0x78] sm:$0xff]
        %v451 = vld [vmem:[%s419] sm:$0xff]
        %v452 = vld [vmem:[%s419 + $0x8] sm:$0xff]
        %v453 = vld [vmem:[%s419 + $0x10] sm:$0xff]
        %v454 = vld [vmem:[%s419 + $0x18] sm:$0xff]
        %v455 = vld [vmem:[%s419 + $0x20] sm:$0xff]
        %v456 = vld [vmem:[%s419 + $0x28] sm:$0xff]
        %v457 = vld [vmem:[%s419 + $0x30] sm:$0xff]
        %v458 = vld [vmem:[%s419 + $0x38] sm:$0xff]
        %v459 = vld [vmem:[%s419 + $0x40] sm:$0xff]
        %v460 = vld [vmem:[%s419 + $0x48] sm:$0xff]
        %v461 = vld [vmem:[%s419 + $0x50] sm:$0xff]
        %v462 = vld [vmem:[%s419 + $0x58] sm:$0xff]
        %v463 = vld [vmem:[%s419 + $0x60] sm:$0xff]
        %v464 = vld [vmem:[%s419 + $0x68] sm:$0xff]
        %v465 = vld [vmem:[%s419 + $0x70] sm:$0xff]
        %v466 = vld [vmem:[%s419 + $0x78] sm:$0xff]
        %v467 = vld [vmem:[%s2] sm:$0xff]
        %v468 = vld [vmem:[%s2 + $0x8] sm:$0xff]
        %v469 = vld [vmem:[%s2 + $0x10] sm:$0xff]
        %v470 = vld [vmem:[%s2 + $0x18] sm:$0xff]
        %v471 = vld [vmem:[%s2 + $0x20] sm:$0xff]
        %v472 = vld [vmem:[%s3] sm:$0x1]
        %v474 = vlaneseq
        %v475 = vshrl.u32 %v474, 7
        %v476 = vsub.s32 0, %v475
        %v477 = vrot.slane %v472, %v476
        %vm479 = vcmask 326656
        %v481 = vsel %vm479, %v435, 0
        %v484 = vsel %vm479, %v436, 0
        %v487 = vsel %vm479, %v437, 0
        %v490 = vsel %vm479, %v438, 0
        %v493 = vsel %vm479, %v439, 0
        %v496 = vsel %vm479, %v440, 0
        %v499 = vsel %vm479, %v441, 0
        %v502 = vsel %vm479, %v442, 0
        %v505 = vsel %vm479, %v443, 0
        %v508 = vsel %vm479, %v444, 0
        %v511 = vsel %vm479, %v445, 0
        %v514 = vsel %vm479, %v446, 0
        %v517 = vsel %vm479, %v447, 0
        %v520 = vsel %vm479, %v448, 0
        %v523 = vsel %vm479, %v449, 0
        %v526 = vsel %vm479, %v450, 0
        %528 = vmatprep.subr.mxu0 0.0
        %529 = vmatpush1.msra.mxu0 %v467
        %530 = vmatprep.subr.mxu0 0.0
        %531 = vmatpush1.msra.mxu0 %v468
        %532 = vmatprep.subr.mxu0 0.0
        %533 = vmatpush1.msra.mxu0 %v469
        %534 = vmatprep.subr.mxu0 0.0
        %535 = vmatpush1.msra.mxu0 %v470
        %536 = vmatprep.subr.mxu0 0.0
        %537 = vmatpush1.msra.mxu0 %v471
        %538 = vmatprep.subr.mxu0 0.0
        %539 = vmatpush1.msra.mxu0 0.0
        %540 = vmatprep.subr.mxu0 0.0
        %541 = vmatpush1.msra.mxu0 0.0
        %542 = vmatprep.subr.mxu0 0.0
        %543 = vmatpush1.msra.mxu0 0.0
        %544 = vmatprep.subr.mxu0 0.0
        %545 = vmatpush1.msra.mxu0 0.0
        %546 = vmatprep.subr.mxu0 0.0
        %547 = vmatpush1.msra.mxu0 0.0
        %548 = vmatprep.subr.mxu0 0.0
        %549 = vmatpush1.msra.mxu0 0.0
        %550 = vmatprep.subr.mxu0 0.0
        %551 = vmatpush1.msra.mxu0 0.0
        %552 = vmatprep.subr.mxu0 0.0
        %553 = vmatpush1.msra.mxu0 0.0
        %554 = vmatprep.subr.mxu0 0.0
        %555 = vmatpush1.msra.mxu0 0.0
        %556 = vmatprep.subr.mxu0 0.0
        %557 = vmatpush1.msra.mxu0 0.0
        %558 = vmatprep.subr.mxu0 0.0
        %559 = vmatpush1.msra.mxu0 0.0
        %560 = vmatprep.subr.mxu0 0.0
        %561 = vmatpush1.msra.mxu0 0.0
        %562 = vmatprep.subr.mxu0 0.0
        %563 = vmatpush1.msra.mxu0 0.0
        %564 = vmatprep.subr.mxu0 0.0
        %565 = vmatpush1.msra.mxu0 0.0
        %566 = vmatprep.subr.mxu0 0.0
        %567 = vmatpush1.msra.mxu0 0.0
        %568 = vmatprep.subr.mxu0 0.0
        %569 = vmatpush1.msra.mxu0 0.0
        %570 = vmatprep.subr.mxu0 0.0
        %571 = vmatpush1.msra.mxu0 0.0
        %572 = vmatprep.subr.mxu0 0.0
        %573 = vmatpush1.msra.mxu0 0.0
        %574 = vmatprep.subr.mxu0 0.0
        %575 = vmatpush1.msra.mxu0 0.0
        %576 = vmatprep.subr.mxu0 0.0
        %577 = vmatpush1.msra.mxu0 0.0
        %578 = vmatprep.subr.mxu0 0.0
        %579 = vmatpush1.msra.mxu0 0.0
        %580 = vmatprep.subr.mxu0 0.0
        %581 = vmatpush1.msra.mxu0 0.0
        %582 = vmatprep.subr.mxu0 0.0
        %583 = vmatpush1.msra.mxu0 0.0
        %584 = vmatprep.subr.mxu0 0.0
        %585 = vmatpush1.msra.mxu0 0.0
        %586 = vmatprep.subr.mxu0 0.0
        %587 = vmatpush1.msra.mxu0 0.0
        %588 = vmatprep.subr.mxu0 0.0
        %589 = vmatpush1.msra.mxu0 0.0
        %590 = vmatprep.subr.mxu0 0.0
        %591 = vmatpush1.msra.mxu0 0.0
        %592 = vmatprep.mubr.f32.mxu0 0.0
        %593 = vmatmul.mubr.f32.gmra.mrb[0].mxu0 %v481
        %v594 = vpop.f32.mrb[0].mxu0
        %v595 = vadd.f32 %v477, %v594
        %v596 = vpop.f32.mrb[0].mxu0
        %597 = vmatprep.mubr.f32.mxu0 0.0
        %598 = vmatmul.mubr.f32.gmra.mrb[0].mxu0 %v484
        %v599 = vpop.f32.mrb[0].mxu0
        %v600 = vadd.f32 %v477, %v599
        %v601 = vpop.f32.mrb[0].mxu0
        %602 = vmatprep.mubr.f32.mxu0 0.0
        %603 = vmatmul.mubr.f32.gmra.mrb[0].mxu0 %v487
        %v604 = vpop.f32.mrb[0].mxu0
        %v605 = vadd.f32 %v477, %v604
        %v606 = vpop.f32.mrb[0].mxu0
        %607 = vmatprep.mubr.f32.mxu0 0.0
        %608 = vmatmul.mubr.f32.gmra.mrb[0].mxu0 %v490
        %v609 = vpop.f32.mrb[0].mxu0
        %v610 = vadd.f32 %v477, %v609
        %v611 = vpop.f32.mrb[0].mxu0
        %612 = vmatprep.mubr.f32.mxu0 0.0
        %613 = vmatmul.mubr.f32.gmra.mrb[0].mxu0 %v493
        %v614 = vpop.f32.mrb[0].mxu0
        %v615 = vadd.f32 %v477, %v614
        %v616 = vpop.f32.mrb[0].mxu0
        %617 = vmatprep.mubr.f32.mxu0 0.0
        %618 = vmatmul.mubr.f32.gmra.mrb[0].mxu0 %v496
        %v619 = vpop.f32.mrb[0].mxu0
        %v620 = vadd.f32 %v477, %v619
        %v621 = vpop.f32.mrb[0].mxu0
        %622 = vmatprep.mubr.f32.mxu0 0.0
        %623 = vmatmul.mubr.f32.gmra.mrb[0].mxu0 %v499
        %v624 = vpop.f32.mrb[0].mxu0
        %v625 = vadd.f32 %v477, %v624
        %v626 = vpop.f32.mrb[0].mxu0
        %627 = vmatprep.mubr.f32.mxu0 0.0
        %628 = vmatmul.mubr.f32.gmra.mrb[0].mxu0 %v502
        %v629 = vpop.f32.mrb[0].mxu0
        %v630 = vadd.f32 %v477, %v629
        %v631 = vpop.f32.mrb[0].mxu0
        %632 = vmatprep.mubr.f32.mxu0 0.0
        %633 = vmatmul.mubr.f32.gmra.mrb[0].mxu0 %v505
        %v634 = vpop.f32.mrb[0].mxu0
        %v635 = vadd.f32 %v477, %v634
        %v636 = vpop.f32.mrb[0].mxu0
        %637 = vmatprep.mubr.f32.mxu0 0.0
        %638 = vmatmul.mubr.f32.gmra.mrb[0].mxu0 %v508
        %v639 = vpop.f32.mrb[0].mxu0
        %v640 = vadd.f32 %v477, %v639
        %v641 = vpop.f32.mrb[0].mxu0
        %642 = vmatprep.mubr.f32.mxu0 0.0
        %643 = vmatmul.mubr.f32.gmra.mrb[0].mxu0 %v511
        %v644 = vpop.f32.mrb[0].mxu0
        %v645 = vadd.f32 %v477, %v644
        %v646 = vpop.f32.mrb[0].mxu0
        %647 = vmatprep.mubr.f32.mxu0 0.0
        %648 = vmatmul.mubr.f32.gmra.mrb[0].mxu0 %v514
        %v649 = vpop.f32.mrb[0].mxu0
        %v650 = vadd.f32 %v477, %v649
        %v651 = vpop.f32.mrb[0].mxu0
        %652 = vmatprep.mubr.f32.mxu0 0.0
        %653 = vmatmul.mubr.f32.gmra.mrb[0].mxu0 %v517
        %v654 = vpop.f32.mrb[0].mxu0
        %v655 = vadd.f32 %v477, %v654
        %v656 = vpop.f32.mrb[0].mxu0
        %657 = vmatprep.mubr.f32.mxu0 0.0
        %658 = vmatmul.mubr.f32.gmra.mrb[0].mxu0 %v520
        %v659 = vpop.f32.mrb[0].mxu0
        %v660 = vadd.f32 %v477, %v659
        %v661 = vpop.f32.mrb[0].mxu0
        %662 = vmatprep.mubr.f32.mxu0 0.0
        %663 = vmatmul.mubr.f32.gmra.mrb[0].mxu0 %v523
        %v664 = vpop.f32.mrb[0].mxu0
        %v665 = vadd.f32 %v477, %v664
        %v666 = vpop.f32.mrb[0].mxu0
        %667 = vmatprep.mubr.f32.mxu0 0.0
        %668 = vmatmul.mubr.f32.gmra.mrb[0].mxu0 %v526
        %v669 = vpop.f32.mrb[0].mxu0
        %v670 = vadd.f32 %v477, %v669
        %v671 = vpop.f32.mrb[0].mxu0
        %672 = vdwg.mxu0
        %v673 = vmax.f32 %v595, 0.0
        %v674 = vmax.f32 %v600, 0.0
        %v675 = vmax.f32 %v605, 0.0
        %v676 = vmax.f32 %v610, 0.0
        %v677 = vmax.f32 %v615, 0.0
        %v678 = vmax.f32 %v620, 0.0
        %v679 = vmax.f32 %v625, 0.0
        %v680 = vmax.f32 %v630, 0.0
        %v681 = vmax.f32 %v635, 0.0
        %v682 = vmax.f32 %v640, 0.0
        %v683 = vmax.f32 %v645, 0.0
        %v684 = vmax.f32 %v650, 0.0
        %v685 = vmax.f32 %v655, 0.0
        %v686 = vmax.f32 %v660, 0.0
        %v687 = vmax.f32 %v665, 0.0
        %v688 = vmax.f32 %v670, 0.0
        %s689 = scalar_lea.vmem %s2, 40
        %v690 = vld [vmem:[%s689] sm:$0xff]
        %v691 = vld [vmem:[%s689 + $0x8] sm:$0xff]
        %v692 = vld [vmem:[%s689 + $0x10] sm:$0xff]
        %v693 = vld [vmem:[%s689 + $0x18] sm:$0xff]
        %v694 = vld [vmem:[%s689 + $0x20] sm:$0xff]
        %695 = vmatprep.subr.mxu0 0.0
        %696 = vmatpush1.msra.mxu0 %v690
        %697 = vmatprep.subr.mxu0 0.0
        %698 = vmatpush1.msra.mxu0 %v691
        %699 = vmatprep.subr.mxu0 0.0
        %700 = vmatpush1.msra.mxu0 %v692
        %701 = vmatprep.subr.mxu0 0.0
        %702 = vmatpush1.msra.mxu0 %v693
        %703 = vmatprep.subr.mxu0 0.0
        %704 = vmatpush1.msra.mxu0 %v694
        %705 = vmatprep.subr.mxu0 0.0
        %706 = vmatpush1.msra.mxu0 0.0
        %707 = vmatprep.subr.mxu0 0.0
        %708 = vmatpush1.msra.mxu0 0.0
        %709 = vmatprep.subr.mxu0 0.0
        %710 = vmatpush1.msra.mxu0 0.0
        %711 = vmatprep.subr.mxu0 0.0
        %712 = vmatpush1.msra.mxu0 0.0
        %713 = vmatprep.subr.mxu0 0.0
        %714 = vmatpush1.msra.mxu0 0.0
        %715 = vmatprep.subr.mxu0 0.0
        %716 = vmatpush1.msra.mxu0 0.0
        %717 = vmatprep.subr.mxu0 0.0
        %718 = vmatpush1.msra.mxu0 0.0
        %719 = vmatprep.subr.mxu0 0.0
        %720 = vmatpush1.msra.mxu0 0.0
        %721 = vmatprep.subr.mxu0 0.0
        %722 = vmatpush1.msra.mxu0 0.0
        %723 = vmatprep.subr.mxu0 0.0
        %724 = vmatpush1.msra.mxu0 0.0
        %725 = vmatprep.subr.mxu0 0.0
        %726 = vmatpush1.msra.mxu0 0.0
        %727 = vmatprep.subr.mxu0 0.0
        %728 = vmatpush1.msra.mxu0 0.0
        %729 = vmatprep.subr.mxu0 0.0
        %730 = vmatpush1.msra.mxu0 0.0
        %731 = vmatprep.subr.mxu0 0.0
        %732 = vmatpush1.msra.mxu0 0.0
        %733 = vmatprep.subr.mxu0 0.0
        %734 = vmatpush1.msra.mxu0 0.0
        %735 = vmatprep.subr.mxu0 0.0
        %736 = vmatpush1.msra.mxu0 0.0
        %737 = vmatprep.subr.mxu0 0.0
        %738 = vmatpush1.msra.mxu0 0.0
        %739 = vmatprep.subr.mxu0 0.0
        %740 = vmatpush1.msra.mxu0 0.0
        %741 = vmatprep.subr.mxu0 0.0
        %742 = vmatpush1.msra.mxu0 0.0
        %743 = vmatprep.subr.mxu0 0.0
        %744 = vmatpush1.msra.mxu0 0.0
        %745 = vmatprep.subr.mxu0 0.0
        %746 = vmatpush1.msra.mxu0 0.0
        %747 = vmatprep.subr.mxu0 0.0
        %748 = vmatpush1.msra.mxu0 0.0
        %749 = vmatprep.subr.mxu0 0.0
        %750 = vmatpush1.msra.mxu0 0.0
        %751 = vmatprep.subr.mxu0 0.0
        %752 = vmatpush1.msra.mxu0 0.0
        %753 = vmatprep.subr.mxu0 0.0
        %754 = vmatpush1.msra.mxu0 0.0
        %755 = vmatprep.subr.mxu0 0.0
        %756 = vmatpush1.msra.mxu0 0.0
        %757 = vmatprep.subr.mxu0 0.0
        %758 = vmatpush1.msra.mxu0 0.0
        %759 = vmatprep.mubr.f32.mxu0 0.0
        %760 = vmatmul.mubr.f32.gmra.mrb[0].mxu0 %v481
        %v761 = vpop.f32.mrb[0].mxu0
        %v762 = vadd.f32 0.0, %v761
        %v763 = vpop.f32.mrb[0].mxu0
        %764 = vmatprep.mubr.f32.mxu0 0.0
        %765 = vmatmul.mubr.f32.gmra.mrb[0].mxu0 %v484
        %v766 = vpop.f32.mrb[0].mxu0
        %v767 = vadd.f32 0.0, %v766
        %v768 = vpop.f32.mrb[0].mxu0
        %769 = vmatprep.mubr.f32.mxu0 0.0
        %770 = vmatmul.mubr.f32.gmra.mrb[0].mxu0 %v487
        %v771 = vpop.f32.mrb[0].mxu0
        %v772 = vadd.f32 0.0, %v771
        %v773 = vpop.f32.mrb[0].mxu0
        %774 = vmatprep.mubr.f32.mxu0 0.0
        %775 = vmatmul.mubr.f32.gmra.mrb[0].mxu0 %v490
        %v776 = vpop.f32.mrb[0].mxu0
        %v777 = vadd.f32 0.0, %v776
        %v778 = vpop.f32.mrb[0].mxu0
        %779 = vmatprep.mubr.f32.mxu0 0.0
        %780 = vmatmul.mubr.f32.gmra.mrb[0].mxu0 %v493
        %v781 = vpop.f32.mrb[0].mxu0
        %v782 = vadd.f32 0.0, %v781
        %v783 = vpop.f32.mrb[0].mxu0
        %784 = vmatprep.mubr.f32.mxu0 0.0
        %785 = vmatmul.mubr.f32.gmra.mrb[0].mxu0 %v496
        %v786 = vpop.f32.mrb[0].mxu0
        %v787 = vadd.f32 0.0, %v786
        %v788 = vpop.f32.mrb[0].mxu0
        %789 = vmatprep.mubr.f32.mxu0 0.0
        %790 = vmatmul.mubr.f32.gmra.mrb[0].mxu0 %v499
        %v791 = vpop.f32.mrb[0].mxu0
        %v792 = vadd.f32 0.0, %v791
        %v793 = vpop.f32.mrb[0].mxu0
        %794 = vmatprep.mubr.f32.mxu0 0.0
        %795 = vmatmul.mubr.f32.gmra.mrb[0].mxu0 %v502
        %v796 = vpop.f32.mrb[0].mxu0
        %v797 = vadd.f32 0.0, %v796
        %v798 = vpop.f32.mrb[0].mxu0
        %799 = vmatprep.mubr.f32.mxu0 0.0
        %800 = vmatmul.mubr.f32.gmra.mrb[0].mxu0 %v505
        %v801 = vpop.f32.mrb[0].mxu0
        %v802 = vadd.f32 0.0, %v801
        %v803 = vpop.f32.mrb[0].mxu0
        %804 = vmatprep.mubr.f32.mxu0 0.0
        %805 = vmatmul.mubr.f32.gmra.mrb[0].mxu0 %v508
        %v806 = vpop.f32.mrb[0].mxu0
        %v807 = vadd.f32 0.0, %v806
        %v808 = vpop.f32.mrb[0].mxu0
        %809 = vmatprep.mubr.f32.mxu0 0.0
        %810 = vmatmul.mubr.f32.gmra.mrb[0].mxu0 %v511
        %v811 = vpop.f32.mrb[0].mxu0
        %v812 = vadd.f32 0.0, %v811
        %v813 = vpop.f32.mrb[0].mxu0
        %814 = vmatprep.mubr.f32.mxu0 0.0
        %815 = vmatmul.mubr.f32.gmra.mrb[0].mxu0 %v514
        %v816 = vpop.f32.mrb[0].mxu0
        %v817 = vadd.f32 0.0, %v816
        %v818 = vpop.f32.mrb[0].mxu0
        %819 = vmatprep.mubr.f32.mxu0 0.0
        %820 = vmatmul.mubr.f32.gmra.mrb[0].mxu0 %v517
        %v821 = vpop.f32.mrb[0].mxu0
        %v822 = vadd.f32 0.0, %v821
        %v823 = vpop.f32.mrb[0].mxu0
        %824 = vmatprep.mubr.f32.mxu0 0.0
        %825 = vmatmul.mubr.f32.gmra.mrb[0].mxu0 %v520
        %v826 = vpop.f32.mrb[0].mxu0
        %v827 = vadd.f32 0.0, %v826
        %v828 = vpop.f32.mrb[0].mxu0
        %829 = vmatprep.mubr.f32.mxu0 0.0
        %830 = vmatmul.mubr.f32.gmra.mrb[0].mxu0 %v523
        %v831 = vpop.f32.mrb[0].mxu0
        %v832 = vadd.f32 0.0, %v831
        %v833 = vpop.f32.mrb[0].mxu0
        %834 = vmatprep.mubr.f32.mxu0 0.0
        %835 = vmatmul.mubr.f32.gmra.mrb[0].mxu0 %v526
        %v836 = vpop.f32.mrb[0].mxu0
        %v837 = vadd.f32 0.0, %v836
        %v838 = vpop.f32.mrb[0].mxu0
        %839 = vdwg.mxu0
        %s840 = scalar_lea.vmem %s2, 80
        %v841 = vld [vmem:[%s840] sm:$0xff]
        %v842 = vld [vmem:[%s840 + $0x8] sm:$0xff]
        %v843 = vld [vmem:[%s840 + $0x10] sm:$0xff]
        %v844 = vld [vmem:[%s840 + $0x18] sm:$0xff]
        %v845 = vld [vmem:[%s840 + $0x20] sm:$0xff]
        %846 = vmatprep.subr.mxu0 0.0
        %847 = vmatpush1.msra.mxu0 %v841
        %848 = vmatprep.subr.mxu0 0.0
        %849 = vmatpush1.msra.mxu0 %v842
        %850 = vmatprep.subr.mxu0 0.0
        %851 = vmatpush1.msra.mxu0 %v843
        %852 = vmatprep.subr.mxu0 0.0
        %853 = vmatpush1.msra.mxu0 %v844
        %854 = vmatprep.subr.mxu0 0.0
        %855 = vmatpush1.msra.mxu0 %v845
        %856 = vmatprep.subr.mxu0 0.0
        %857 = vmatpush1.msra.mxu0 0.0
        %858 = vmatprep.subr.mxu0 0.0
        %859 = vmatpush1.msra.mxu0 0.0
        %860 = vmatprep.subr.mxu0 0.0
        %861 = vmatpush1.msra.mxu0 0.0
        %862 = vmatprep.subr.mxu0 0.0
        %863 = vmatpush1.msra.mxu0 0.0
        %864 = vmatprep.subr.mxu0 0.0
        %865 = vmatpush1.msra.mxu0 0.0
        %866 = vmatprep.subr.mxu0 0.0
        %867 = vmatpush1.msra.mxu0 0.0
        %868 = vmatprep.subr.mxu0 0.0
        %869 = vmatpush1.msra.mxu0 0.0
        %870 = vmatprep.subr.mxu0 0.0
        %871 = vmatpush1.msra.mxu0 0.0
        %872 = vmatprep.subr.mxu0 0.0
        %873 = vmatpush1.msra.mxu0 0.0
        %874 = vmatprep.subr.mxu0 0.0
        %875 = vmatpush1.msra.mxu0 0.0
        %876 = vmatprep.subr.mxu0 0.0
        %877 = vmatpush1.msra.mxu0 0.0
        %878 = vmatprep.subr.mxu0 0.0
        %879 = vmatpush1.msra.mxu0 0.0
        %880 = vmatprep.subr.mxu0 0.0
        %881 = vmatpush1.msra.mxu0 0.0
        %882 = vmatprep.subr.mxu0 0.0
        %883 = vmatpush1.msra.mxu0 0.0
        %884 = vmatprep.subr.mxu0 0.0
        %885 = vmatpush1.msra.mxu0 0.0
        %886 = vmatprep.subr.mxu0 0.0
        %887 = vmatpush1.msra.mxu0 0.0
        %888 = vmatprep.subr.mxu0 0.0
        %889 = vmatpush1.msra.mxu0 0.0
        %890 = vmatprep.subr.mxu0 0.0
        %891 = vmatpush1.msra.mxu0 0.0
        %892 = vmatprep.subr.mxu0 0.0
        %893 = vmatpush1.msra.mxu0 0.0
        %894 = vmatprep.subr.mxu0 0.0
        %895 = vmatpush1.msra.mxu0 0.0
        %896 = vmatprep.subr.mxu0 0.0
        %897 = vmatpush1.msra.mxu0 0.0
        %898 = vmatprep.subr.mxu0 0.0
        %899 = vmatpush1.msra.mxu0 0.0
        %900 = vmatprep.subr.mxu0 0.0
        %901 = vmatpush1.msra.mxu0 0.0
        %902 = vmatprep.subr.mxu0 0.0
        %903 = vmatpush1.msra.mxu0 0.0
        %904 = vmatprep.subr.mxu0 0.0
        %905 = vmatpush1.msra.mxu0 0.0
        %906 = vmatprep.subr.mxu0 0.0
        %907 = vmatpush1.msra.mxu0 0.0
        %908 = vmatprep.subr.mxu0 0.0
        %909 = vmatpush1.msra.mxu0 0.0
        %910 = vmatprep.mubr.f32.mxu0 0.0
        %911 = vmatmul.mubr.f32.gmra.mrb[0].mxu0 %v481
        %v912 = vpop.f32.mrb[0].mxu0
        %v913 = vadd.f32 0.0, %v912
        %v914 = vpop.f32.mrb[0].mxu0
        %915 = vmatprep.mubr.f32.mxu0 0.0
        %916 = vmatmul.mubr.f32.gmra.mrb[0].mxu0 %v484
        %v917 = vpop.f32.mrb[0].mxu0
        %v918 = vadd.f32 0.0, %v917
        %v919 = vpop.f32.mrb[0].mxu0
        %920 = vmatprep.mubr.f32.mxu0 0.0
        %921 = vmatmul.mubr.f32.gmra.mrb[0].mxu0 %v487
        %v922 = vpop.f32.mrb[0].mxu0
        %v923 = vadd.f32 0.0, %v922
        %v924 = vpop.f32.mrb[0].mxu0
        %925 = vmatprep.mubr.f32.mxu0 0.0
        %926 = vmatmul.mubr.f32.gmra.mrb[0].mxu0 %v490
        %v927 = vpop.f32.mrb[0].mxu0
        %v928 = vadd.f32 0.0, %v927
        %v929 = vpop.f32.mrb[0].mxu0
        %930 = vmatprep.mubr.f32.mxu0 0.0
        %931 = vmatmul.mubr.f32.gmra.mrb[0].mxu0 %v493
        %v932 = vpop.f32.mrb[0].mxu0
        %v933 = vadd.f32 0.0, %v932
        %v934 = vpop.f32.mrb[0].mxu0
        %935 = vmatprep.mubr.f32.mxu0 0.0
        %936 = vmatmul.mubr.f32.gmra.mrb[0].mxu0 %v496
        %v937 = vpop.f32.mrb[0].mxu0
        %v938 = vadd.f32 0.0, %v937
        %v939 = vpop.f32.mrb[0].mxu0
        %940 = vmatprep.mubr.f32.mxu0 0.0
        %941 = vmatmul.mubr.f32.gmra.mrb[0].mxu0 %v499
        %v942 = vpop.f32.mrb[0].mxu0
        %v943 = vadd.f32 0.0, %v942
        %v944 = vpop.f32.mrb[0].mxu0
        %945 = vmatprep.mubr.f32.mxu0 0.0
        %946 = vmatmul.mubr.f32.gmra.mrb[0].mxu0 %v502
        %v947 = vpop.f32.mrb[0].mxu0
        %v948 = vadd.f32 0.0, %v947
        %v949 = vpop.f32.mrb[0].mxu0
        %950 = vmatprep.mubr.f32.mxu0 0.0
        %951 = vmatmul.mubr.f32.gmra.mrb[0].mxu0 %v505
        %v952 = vpop.f32.mrb[0].mxu0
        %v953 = vadd.f32 0.0, %v952
        %v954 = vpop.f32.mrb[0].mxu0
        %955 = vmatprep.mubr.f32.mxu0 0.0
        %956 = vmatmul.mubr.f32.gmra.mrb[0].mxu0 %v508
        %v957 = vpop.f32.mrb[0].mxu0
        %v958 = vadd.f32 0.0, %v957
        %v959 = vpop.f32.mrb[0].mxu0
        %960 = vmatprep.mubr.f32.mxu0 0.0
        %961 = vmatmul.mubr.f32.gmra.mrb[0].mxu0 %v511
        %v962 = vpop.f32.mrb[0].mxu0
        %v963 = vadd.f32 0.0, %v962
        %v964 = vpop.f32.mrb[0].mxu0
        %965 = vmatprep.mubr.f32.mxu0 0.0
        %966 = vmatmul.mubr.f32.gmra.mrb[0].mxu0 %v514
        %v967 = vpop.f32.mrb[0].mxu0
        %v968 = vadd.f32 0.0, %v967
        %v969 = vpop.f32.mrb[0].mxu0
        %970 = vmatprep.mubr.f32.mxu0 0.0
        %971 = vmatmul.mubr.f32.gmra.mrb[0].mxu0 %v517
        %v972 = vpop.f32.mrb[0].mxu0
        %v973 = vadd.f32 0.0, %v972
        %v974 = vpop.f32.mrb[0].mxu0
        %975 = vmatprep.mubr.f32.mxu0 0.0
        %976 = vmatmul.mubr.f32.gmra.mrb[0].mxu0 %v520
        %v977 = vpop.f32.mrb[0].mxu0
        %v978 = vadd.f32 0.0, %v977
        %v979 = vpop.f32.mrb[0].mxu0
        %980 = vmatprep.mubr.f32.mxu0 0.0
        %981 = vmatmul.mubr.f32.gmra.mrb[0].mxu0 %v523
        %v982 = vpop.f32.mrb[0].mxu0
        %v983 = vadd.f32 0.0, %v982
        %v984 = vpop.f32.mrb[0].mxu0
        %985 = vmatprep.mubr.f32.mxu0 0.0
        %986 = vmatmul.mubr.f32.gmra.mrb[0].mxu0 %v526
        %v987 = vpop.f32.mrb[0].mxu0
        %v988 = vadd.f32 0.0, %v987
        %v989 = vpop.f32.mrb[0].mxu0
        %990 = vdwg.mxu0
        %v991 = vmax.f32 %v762, %v913
        %v992 = vmax.f32 %v767, %v918
        %v993 = vmax.f32 %v772, %v923
        %v994 = vmax.f32 %v777, %v928
        %v995 = vmax.f32 %v782, %v933
        %v996 = vmax.f32 %v787, %v938
        %v997 = vmax.f32 %v792, %v943
        %v998 = vmax.f32 %v797, %v948
        %v999 = vmax.f32 %v802, %v953
        %v1000 = vmax.f32 %v807, %v958
        %v1001 = vmax.f32 %v812, %v963
        %v1002 = vmax.f32 %v817, %v968
        %v1003 = vmax.f32 %v822, %v973
        %v1004 = vmax.f32 %v827, %v978
        %v1005 = vmax.f32 %v832, %v983
        %v1006 = vmax.f32 %v837, %v988
        %s1007 = scalar_lea.vmem %s2, 120
        %v1008 = vld [vmem:[%s1007] sm:$0xff]
        %v1009 = vld [vmem:[%s1007 + $0x8] sm:$0xff]
        %v1010 = vld [vmem:[%s1007 + $0x10] sm:$0xff]
        %v1011 = vld [vmem:[%s1007 + $0x18] sm:$0xff]
        %v1012 = vld [vmem:[%s1007 + $0x20] sm:$0xff]
        %1013 = vmatprep.subr.mxu0 0.0
        %1014 = vmatpush1.msra.mxu0 %v1008
        %1015 = vmatprep.subr.mxu0 0.0
        %1016 = vmatpush1.msra.mxu0 %v1009
        %1017 = vmatprep.subr.mxu0 0.0
        %1018 = vmatpush1.msra.mxu0 %v1010
        %1019 = vmatprep.subr.mxu0 0.0
        %1020 = vmatpush1.msra.mxu0 %v1011
        %1021 = vmatprep.subr.mxu0 0.0
        %1022 = vmatpush1.msra.mxu0 %v1012
        %1023 = vmatprep.subr.mxu0 0.0
        %1024 = vmatpush1.msra.mxu0 0.0
        %1025 = vmatprep.subr.mxu0 0.0
        %1026 = vmatpush1.msra.mxu0 0.0
        %1027 = vmatprep.subr.mxu0 0.0
        %1028 = vmatpush1.msra.mxu0 0.0
        %1029 = vmatprep.subr.mxu0 0.0
        %1030 = vmatpush1.msra.mxu0 0.0
        %1031 = vmatprep.subr.mxu0 0.0
        %1032 = vmatpush1.msra.mxu0 0.0
        %1033 = vmatprep.subr.mxu0 0.0
        %1034 = vmatpush1.msra.mxu0 0.0
        %1035 = vmatprep.subr.mxu0 0.0
        %1036 = vmatpush1.msra.mxu0 0.0
        %1037 = vmatprep.subr.mxu0 0.0
        %1038 = vmatpush1.msra.mxu0 0.0
        %1039 = vmatprep.subr.mxu0 0.0
        %1040 = vmatpush1.msra.mxu0 0.0
        %1041 = vmatprep.subr.mxu0 0.0
        %1042 = vmatpush1.msra.mxu0 0.0
        %1043 = vmatprep.subr.mxu0 0.0
        %1044 = vmatpush1.msra.mxu0 0.0
        %1045 = vmatprep.subr.mxu0 0.0
        %1046 = vmatpush1.msra.mxu0 0.0
        %1047 = vmatprep.subr.mxu0 0.0
        %1048 = vmatpush1.msra.mxu0 0.0
        %1049 = vmatprep.subr.mxu0 0.0
        %1050 = vmatpush1.msra.mxu0 0.0
        %1051 = vmatprep.subr.mxu0 0.0
        %1052 = vmatpush1.msra.mxu0 0.0
        %1053 = vmatprep.subr.mxu0 0.0
        %1054 = vmatpush1.msra.mxu0 0.0
        %1055 = vmatprep.subr.mxu0 0.0
        %1056 = vmatpush1.msra.mxu0 0.0
        %1057 = vmatprep.subr.mxu0 0.0
        %1058 = vmatpush1.msra.mxu0 0.0
        %1059 = vmatprep.subr.mxu0 0.0
        %1060 = vmatpush1.msra.mxu0 0.0
        %1061 = vmatprep.subr.mxu0 0.0
        %1062 = vmatpush1.msra.mxu0 0.0
        %1063 = vmatprep.subr.mxu0 0.0
        %1064 = vmatpush1.msra.mxu0 0.0
        %1065 = vmatprep.subr.mxu0 0.0
        %1066 = vmatpush1.msra.mxu0 0.0
        %1067 = vmatprep.subr.mxu0 0.0
        %1068 = vmatpush1.msra.mxu0 0.0
        %1069 = vmatprep.subr.mxu0 0.0
        %1070 = vmatpush1.msra.mxu0 0.0
        %1071 = vmatprep.subr.mxu0 0.0
        %1072 = vmatpush1.msra.mxu0 0.0
        %1073 = vmatprep.subr.mxu0 0.0
        %1074 = vmatpush1.msra.mxu0 0.0
        %1075 = vmatprep.subr.mxu0 0.0
        %1076 = vmatpush1.msra.mxu0 0.0
        %1077 = vmatprep.mubr.f32.mxu0 0.0
        %1078 = vmatmul.mubr.f32.gmra.mrb[0].mxu0 %v481
        %v1079 = vpop.f32.mrb[0].mxu0
        %v1080 = vadd.f32 0.0, %v1079
        %v1081 = vpop.f32.mrb[0].mxu0
        %1082 = vmatprep.mubr.f32.mxu0 0.0
        %1083 = vmatmul.mubr.f32.gmra.mrb[0].mxu0 %v484
        %v1084 = vpop.f32.mrb[0].mxu0
        %v1085 = vadd.f32 0.0, %v1084
        %v1086 = vpop.f32.mrb[0].mxu0
        %1087 = vmatprep.mubr.f32.mxu0 0.0
        %1088 = vmatmul.mubr.f32.gmra.mrb[0].mxu0 %v487
        %v1089 = vpop.f32.mrb[0].mxu0
        %v1090 = vadd.f32 0.0, %v1089
        %v1091 = vpop.f32.mrb[0].mxu0
        %1092 = vmatprep.mubr.f32.mxu0 0.0
        %1093 = vmatmul.mubr.f32.gmra.mrb[0].mxu0 %v490
        %v1094 = vpop.f32.mrb[0].mxu0
        %v1095 = vadd.f32 0.0, %v1094
        %v1096 = vpop.f32.mrb[0].mxu0
        %1097 = vmatprep.mubr.f32.mxu0 0.0
        %1098 = vmatmul.mubr.f32.gmra.mrb[0].mxu0 %v493
        %v1099 = vpop.f32.mrb[0].mxu0
        %v1100 = vadd.f32 0.0, %v1099
        %v1101 = vpop.f32.mrb[0].mxu0
        %1102 = vmatprep.mubr.f32.mxu0 0.0
        %1103 = vmatmul.mubr.f32.gmra.mrb[0].mxu0 %v496
        %v1104 = vpop.f32.mrb[0].mxu0
        %v1105 = vadd.f32 0.0, %v1104
        %v1106 = vpop.f32.mrb[0].mxu0
        %1107 = vmatprep.mubr.f32.mxu0 0.0
        %1108 = vmatmul.mubr.f32.gmra.mrb[0].mxu0 %v499
        %v1109 = vpop.f32.mrb[0].mxu0
        %v1110 = vadd.f32 0.0, %v1109
        %v1111 = vpop.f32.mrb[0].mxu0
        %1112 = vmatprep.mubr.f32.mxu0 0.0
        %1113 = vmatmul.mubr.f32.gmra.mrb[0].mxu0 %v502
        %v1114 = vpop.f32.mrb[0].mxu0
        %v1115 = vadd.f32 0.0, %v1114
        %v1116 = vpop.f32.mrb[0].mxu0
        %1117 = vmatprep.mubr.f32.mxu0 0.0
        %1118 = vmatmul.mubr.f32.gmra.mrb[0].mxu0 %v505
        %v1119 = vpop.f32.mrb[0].mxu0
        %v1120 = vadd.f32 0.0, %v1119
        %v1121 = vpop.f32.mrb[0].mxu0
        %1122 = vmatprep.mubr.f32.mxu0 0.0
        %1123 = vmatmul.mubr.f32.gmra.mrb[0].mxu0 %v508
        %v1124 = vpop.f32.mrb[0].mxu0
        %v1125 = vadd.f32 0.0, %v1124
        %v1126 = vpop.f32.mrb[0].mxu0
        %1127 = vmatprep.mubr.f32.mxu0 0.0
        %1128 = vmatmul.mubr.f32.gmra.mrb[0].mxu0 %v511
        %v1129 = vpop.f32.mrb[0].mxu0
        %v1130 = vadd.f32 0.0, %v1129
        %v1131 = vpop.f32.mrb[0].mxu0
        %1132 = vmatprep.mubr.f32.mxu0 0.0
        %1133 = vmatmul.mubr.f32.gmra.mrb[0].mxu0 %v514
        %v1134 = vpop.f32.mrb[0].mxu0
        %v1135 = vadd.f32 0.0, %v1134
        %v1136 = vpop.f32.mrb[0].mxu0
        %1137 = vmatprep.mubr.f32.mxu0 0.0
        %1138 = vmatmul.mubr.f32.gmra.mrb[0].mxu0 %v517
        %v1139 = vpop.f32.mrb[0].mxu0
        %v1140 = vadd.f32 0.0, %v1139
        %v1141 = vpop.f32.mrb[0].mxu0
        %1142 = vmatprep.mubr.f32.mxu0 0.0
        %1143 = vmatmul.mubr.f32.gmra.mrb[0].mxu0 %v520
        %v1144 = vpop.f32.mrb[0].mxu0
        %v1145 = vadd.f32 0.0, %v1144
        %v1146 = vpop.f32.mrb[0].mxu0
        %1147 = vmatprep.mubr.f32.mxu0 0.0
        %1148 = vmatmul.mubr.f32.gmra.mrb[0].mxu0 %v523
        %v1149 = vpop.f32.mrb[0].mxu0
        %v1150 = vadd.f32 0.0, %v1149
        %v1151 = vpop.f32.mrb[0].mxu0
        %1152 = vmatprep.mubr.f32.mxu0 0.0
        %1153 = vmatmul.mubr.f32.gmra.mrb[0].mxu0 %v526
        %v1154 = vpop.f32.mrb[0].mxu0
        %v1155 = vadd.f32 0.0, %v1154
        %v1156 = vpop.f32.mrb[0].mxu0
        %1157 = vdwg.mxu0
        %v1158 = vmax.f32 %v991, %v1080
        %v1159 = vmax.f32 %v992, %v1085
        %v1160 = vmax.f32 %v993, %v1090
        %v1161 = vmax.f32 %v994, %v1095
        %v1162 = vmax.f32 %v995, %v1100
        %v1163 = vmax.f32 %v996, %v1105
        %v1164 = vmax.f32 %v997, %v1110
        %v1165 = vmax.f32 %v998, %v1115
        %v1166 = vmax.f32 %v999, %v1120
        %v1167 = vmax.f32 %v1000, %v1125
        %v1168 = vmax.f32 %v1001, %v1130
        %v1169 = vmax.f32 %v1002, %v1135
        %v1170 = vmax.f32 %v1003, %v1140
        %v1171 = vmax.f32 %v1004, %v1145
        %v1172 = vmax.f32 %v1005, %v1150
        %v1173 = vmax.f32 %v1006, %v1155
        %s1174 = scalar_lea.vmem %s2, 160
        %v1175 = vld [vmem:[%s1174] sm:$0xff]
        %v1176 = vld [vmem:[%s1174 + $0x8] sm:$0xff]
        %v1177 = vld [vmem:[%s1174 + $0x10] sm:$0xff]
        %v1178 = vld [vmem:[%s1174 + $0x18] sm:$0xff]
        %v1179 = vld [vmem:[%s1174 + $0x20] sm:$0xff]
        %1180 = vmatprep.subr.mxu0 0.0
        %1181 = vmatpush1.msra.mxu0 %v1175
        %1182 = vmatprep.subr.mxu0 0.0
        %1183 = vmatpush1.msra.mxu0 %v1176
        %1184 = vmatprep.subr.mxu0 0.0
        %1185 = vmatpush1.msra.mxu0 %v1177
        %1186 = vmatprep.subr.mxu0 0.0
        %1187 = vmatpush1.msra.mxu0 %v1178
        %1188 = vmatprep.subr.mxu0 0.0
        %1189 = vmatpush1.msra.mxu0 %v1179
        %1190 = vmatprep.subr.mxu0 0.0
        %1191 = vmatpush1.msra.mxu0 0.0
        %1192 = vmatprep.subr.mxu0 0.0
        %1193 = vmatpush1.msra.mxu0 0.0
        %1194 = vmatprep.subr.mxu0 0.0
        %1195 = vmatpush1.msra.mxu0 0.0
        %1196 = vmatprep.subr.mxu0 0.0
        %1197 = vmatpush1.msra.mxu0 0.0
        %1198 = vmatprep.subr.mxu0 0.0
        %1199 = vmatpush1.msra.mxu0 0.0
        %1200 = vmatprep.subr.mxu0 0.0
        %1201 = vmatpush1.msra.mxu0 0.0
        %1202 = vmatprep.subr.mxu0 0.0
        %1203 = vmatpush1.msra.mxu0 0.0
        %1204 = vmatprep.subr.mxu0 0.0
        %1205 = vmatpush1.msra.mxu0 0.0
        %1206 = vmatprep.subr.mxu0 0.0
        %1207 = vmatpush1.msra.mxu0 0.0
        %1208 = vmatprep.subr.mxu0 0.0
        %1209 = vmatpush1.msra.mxu0 0.0
        %1210 = vmatprep.subr.mxu0 0.0
        %1211 = vmatpush1.msra.mxu0 0.0
        %1212 = vmatprep.subr.mxu0 0.0
        %1213 = vmatpush1.msra.mxu0 0.0
        %1214 = vmatprep.subr.mxu0 0.0
        %1215 = vmatpush1.msra.mxu0 0.0
        %1216 = vmatprep.subr.mxu0 0.0
        %1217 = vmatpush1.msra.mxu0 0.0
        %1218 = vmatprep.subr.mxu0 0.0
        %1219 = vmatpush1.msra.mxu0 0.0
        %1220 = vmatprep.subr.mxu0 0.0
        %1221 = vmatpush1.msra.mxu0 0.0
        %1222 = vmatprep.subr.mxu0 0.0
        %1223 = vmatpush1.msra.mxu0 0.0
        %1224 = vmatprep.subr.mxu0 0.0
        %1225 = vmatpush1.msra.mxu0 0.0
        %1226 = vmatprep.subr.mxu0 0.0
        %1227 = vmatpush1.msra.mxu0 0.0
        %1228 = vmatprep.subr.mxu0 0.0
        %1229 = vmatpush1.msra.mxu0 0.0
        %1230 = vmatprep.subr.mxu0 0.0
        %1231 = vmatpush1.msra.mxu0 0.0
        %1232 = vmatprep.subr.mxu0 0.0
        %1233 = vmatpush1.msra.mxu0 0.0
        %1234 = vmatprep.subr.mxu0 0.0
        %1235 = vmatpush1.msra.mxu0 0.0
        %1236 = vmatprep.subr.mxu0 0.0
        %1237 = vmatpush1.msra.mxu0 0.0
        %1238 = vmatprep.subr.mxu0 0.0
        %1239 = vmatpush1.msra.mxu0 0.0
        %1240 = vmatprep.subr.mxu0 0.0
        %1241 = vmatpush1.msra.mxu0 0.0
        %1242 = vmatprep.subr.mxu0 0.0
        %1243 = vmatpush1.msra.mxu0 0.0
        %1244 = vmatprep.mubr.f32.mxu0 0.0
        %1245 = vmatmul.mubr.f32.gmra.mrb[0].mxu0 %v481
        %v1246 = vpop.f32.mrb[0].mxu0
        %v1247 = vadd.f32 0.0, %v1246
        %v1248 = vpop.f32.mrb[0].mxu0
        %1249 = vmatprep.mubr.f32.mxu0 0.0
        %1250 = vmatmul.mubr.f32.gmra.mrb[0].mxu0 %v484
        %v1251 = vpop.f32.mrb[0].mxu0
        %v1252 = vadd.f32 0.0, %v1251
        %v1253 = vpop.f32.mrb[0].mxu0
        %1254 = vmatprep.mubr.f32.mxu0 0.0
        %1255 = vmatmul.mubr.f32.gmra.mrb[0].mxu0 %v487
        %v1256 = vpop.f32.mrb[0].mxu0
        %v1257 = vadd.f32 0.0, %v1256
        %v1258 = vpop.f32.mrb[0].mxu0
        %1259 = vmatprep.mubr.f32.mxu0 0.0
        %1260 = vmatmul.mubr.f32.gmra.mrb[0].mxu0 %v490
        %v1261 = vpop.f32.mrb[0].mxu0
        %v1262 = vadd.f32 0.0, %v1261
        %v1263 = vpop.f32.mrb[0].mxu0
        %1264 = vmatprep.mubr.f32.mxu0 0.0
        %1265 = vmatmul.mubr.f32.gmra.mrb[0].mxu0 %v493
        %v1266 = vpop.f32.mrb[0].mxu0
        %v1267 = vadd.f32 0.0, %v1266
        %v1268 = vpop.f32.mrb[0].mxu0
        %1269 = vmatprep.mubr.f32.mxu0 0.0
        %1270 = vmatmul.mubr.f32.gmra.mrb[0].mxu0 %v496
        %v1271 = vpop.f32.mrb[0].mxu0
        %v1272 = vadd.f32 0.0, %v1271
        %v1273 = vpop.f32.mrb[0].mxu0
        %1274 = vmatprep.mubr.f32.mxu0 0.0
        %1275 = vmatmul.mubr.f32.gmra.mrb[0].mxu0 %v499
        %v1276 = vpop.f32.mrb[0].mxu0
        %v1277 = vadd.f32 0.0, %v1276
        %v1278 = vpop.f32.mrb[0].mxu0
        %1279 = vmatprep.mubr.f32.mxu0 0.0
        %1280 = vmatmul.mubr.f32.gmra.mrb[0].mxu0 %v502
        %v1281 = vpop.f32.mrb[0].mxu0
        %v1282 = vadd.f32 0.0, %v1281
        %v1283 = vpop.f32.mrb[0].mxu0
        %1284 = vmatprep.mubr.f32.mxu0 0.0
        %1285 = vmatmul.mubr.f32.gmra.mrb[0].mxu0 %v505
        %v1286 = vpop.f32.mrb[0].mxu0
        %v1287 = vadd.f32 0.0, %v1286
        %v1288 = vpop.f32.mrb[0].mxu0
        %1289 = vmatprep.mubr.f32.mxu0 0.0
        %1290 = vmatmul.mubr.f32.gmra.mrb[0].mxu0 %v508
        %v1291 = vpop.f32.mrb[0].mxu0
        %v1292 = vadd.f32 0.0, %v1291
        %v1293 = vpop.f32.mrb[0].mxu0
        %1294 = vmatprep.mubr.f32.mxu0 0.0
        %1295 = vmatmul.mubr.f32.gmra.mrb[0].mxu0 %v511
        %v1296 = vpop.f32.mrb[0].mxu0
        %v1297 = vadd.f32 0.0, %v1296
        %v1298 = vpop.f32.mrb[0].mxu0
        %1299 = vmatprep.mubr.f32.mxu0 0.0
        %1300 = vmatmul.mubr.f32.gmra.mrb[0].mxu0 %v514
        %v1301 = vpop.f32.mrb[0].mxu0
        %v1302 = vadd.f32 0.0, %v1301
        %v1303 = vpop.f32.mrb[0].mxu0
        %1304 = vmatprep.mubr.f32.mxu0 0.0
        %1305 = vmatmul.mubr.f32.gmra.mrb[0].mxu0 %v517
        %v1306 = vpop.f32.mrb[0].mxu0
        %v1307 = vadd.f32 0.0, %v1306
        %v1308 = vpop.f32.mrb[0].mxu0
        %1309 = vmatprep.mubr.f32.mxu0 0.0
        %1310 = vmatmul.mubr.f32.gmra.mrb[0].mxu0 %v520
        %v1311 = vpop.f32.mrb[0].mxu0
        %v1312 = vadd.f32 0.0, %v1311
        %v1313 = vpop.f32.mrb[0].mxu0
        %1314 = vmatprep.mubr.f32.mxu0 0.0
        %1315 = vmatmul.mubr.f32.gmra.mrb[0].mxu0 %v523
        %v1316 = vpop.f32.mrb[0].mxu0
        %v1317 = vadd.f32 0.0, %v1316
        %v1318 = vpop.f32.mrb[0].mxu0
        %1319 = vmatprep.mubr.f32.mxu0 0.0
        %1320 = vmatmul.mubr.f32.gmra.mrb[0].mxu0 %v526
        %v1321 = vpop.f32.mrb[0].mxu0
        %v1322 = vadd.f32 0.0, %v1321
        %v1323 = vpop.f32.mrb[0].mxu0
        %1324 = vdwg.mxu0
        %s1325 = scalar_lea.vmem %s2, 200
        %v1326 = vld [vmem:[%s1325] sm:$0xff]
        %v1327 = vld [vmem:[%s1325 + $0x8] sm:$0xff]
        %v1328 = vld [vmem:[%s1325 + $0x10] sm:$0xff]
        %v1329 = vld [vmem:[%s1325 + $0x18] sm:$0xff]
        %v1330 = vld [vmem:[%s1325 + $0x20] sm:$0xff]
        %1331 = vmatprep.subr.mxu0 0.0
        %1332 = vmatpush1.msra.mxu0 %v1326
        %1333 = vmatprep.subr.mxu0 0.0
        %1334 = vmatpush1.msra.mxu0 %v1327
        %1335 = vmatprep.subr.mxu0 0.0
        %1336 = vmatpush1.msra.mxu0 %v1328
        %1337 = vmatprep.subr.mxu0 0.0
        %1338 = vmatpush1.msra.mxu0 %v1329
        %1339 = vmatprep.subr.mxu0 0.0
        %1340 = vmatpush1.msra.mxu0 %v1330
        %1341 = vmatprep.subr.mxu0 0.0
        %1342 = vmatpush1.msra.mxu0 0.0
        %1343 = vmatprep.subr.mxu0 0.0
        %1344 = vmatpush1.msra.mxu0 0.0
        %1345 = vmatprep.subr.mxu0 0.0
        %1346 = vmatpush1.msra.mxu0 0.0
        %1347 = vmatprep.subr.mxu0 0.0
        %1348 = vmatpush1.msra.mxu0 0.0
        %1349 = vmatprep.subr.mxu0 0.0
        %1350 = vmatpush1.msra.mxu0 0.0
        %1351 = vmatprep.subr.mxu0 0.0
        %1352 = vmatpush1.msra.mxu0 0.0
        %1353 = vmatprep.subr.mxu0 0.0
        %1354 = vmatpush1.msra.mxu0 0.0
        %1355 = vmatprep.subr.mxu0 0.0
        %1356 = vmatpush1.msra.mxu0 0.0
        %1357 = vmatprep.subr.mxu0 0.0
        %1358 = vmatpush1.msra.mxu0 0.0
        %1359 = vmatprep.subr.mxu0 0.0
        %1360 = vmatpush1.msra.mxu0 0.0
        %1361 = vmatprep.subr.mxu0 0.0
        %1362 = vmatpush1.msra.mxu0 0.0
        %1363 = vmatprep.subr.mxu0 0.0
        %1364 = vmatpush1.msra.mxu0 0.0
        %1365 = vmatprep.subr.mxu0 0.0
        %1366 = vmatpush1.msra.mxu0 0.0
        %1367 = vmatprep.subr.mxu0 0.0
        %1368 = vmatpush1.msra.mxu0 0.0
        %1369 = vmatprep.subr.mxu0 0.0
        %1370 = vmatpush1.msra.mxu0 0.0
        %1371 = vmatprep.subr.mxu0 0.0
        %1372 = vmatpush1.msra.mxu0 0.0
        %1373 = vmatprep.subr.mxu0 0.0
        %1374 = vmatpush1.msra.mxu0 0.0
        %1375 = vmatprep.subr.mxu0 0.0
        %1376 = vmatpush1.msra.mxu0 0.0
        %1377 = vmatprep.subr.mxu0 0.0
        %1378 = vmatpush1.msra.mxu0 0.0
        %1379 = vmatprep.subr.mxu0 0.0
        %1380 = vmatpush1.msra.mxu0 0.0
        %1381 = vmatprep.subr.mxu0 0.0
        %1382 = vmatpush1.msra.mxu0 0.0
        %1383 = vmatprep.subr.mxu0 0.0
        %1384 = vmatpush1.msra.mxu0 0.0
        %1385 = vmatprep.subr.mxu0 0.0
        %1386 = vmatpush1.msra.mxu0 0.0
        %1387 = vmatprep.subr.mxu0 0.0
        %1388 = vmatpush1.msra.mxu0 0.0
        %1389 = vmatprep.subr.mxu0 0.0
        %1390 = vmatpush1.msra.mxu0 0.0
        %1391 = vmatprep.subr.mxu0 0.0
        %1392 = vmatpush1.msra.mxu0 0.0
        %1393 = vmatprep.subr.mxu0 0.0
        %1394 = vmatpush1.msra.mxu0 0.0
        %1395 = vmatprep.mubr.f32.mxu0 0.0
        %1396 = vmatmul.mubr.f32.gmra.mrb[0].mxu0 %v481
        %v1397 = vpop.f32.mrb[0].mxu0
        %v1398 = vadd.f32 0.0, %v1397
        %v1399 = vpop.f32.mrb[0].mxu0
        %1400 = vmatprep.mubr.f32.mxu0 0.0
        %1401 = vmatmul.mubr.f32.gmra.mrb[0].mxu0 %v484
        %v1402 = vpop.f32.mrb[0].mxu0
        %v1403 = vadd.f32 0.0, %v1402
        %v1404 = vpop.f32.mrb[0].mxu0
        %1405 = vmatprep.mubr.f32.mxu0 0.0
        %1406 = vmatmul.mubr.f32.gmra.mrb[0].mxu0 %v487
        %v1407 = vpop.f32.mrb[0].mxu0
        %v1408 = vadd.f32 0.0, %v1407
        %v1409 = vpop.f32.mrb[0].mxu0
        %1410 = vmatprep.mubr.f32.mxu0 0.0
        %1411 = vmatmul.mubr.f32.gmra.mrb[0].mxu0 %v490
        %v1412 = vpop.f32.mrb[0].mxu0
        %v1413 = vadd.f32 0.0, %v1412
        %v1414 = vpop.f32.mrb[0].mxu0
        %1415 = vmatprep.mubr.f32.mxu0 0.0
        %1416 = vmatmul.mubr.f32.gmra.mrb[0].mxu0 %v493
        %v1417 = vpop.f32.mrb[0].mxu0
        %v1418 = vadd.f32 0.0, %v1417
        %v1419 = vpop.f32.mrb[0].mxu0
        %1420 = vmatprep.mubr.f32.mxu0 0.0
        %1421 = vmatmul.mubr.f32.gmra.mrb[0].mxu0 %v496
        %v1422 = vpop.f32.mrb[0].mxu0
        %v1423 = vadd.f32 0.0, %v1422
        %v1424 = vpop.f32.mrb[0].mxu0
        %1425 = vmatprep.mubr.f32.mxu0 0.0
        %1426 = vmatmul.mubr.f32.gmra.mrb[0].mxu0 %v499
        %v1427 = vpop.f32.mrb[0].mxu0
        %v1428 = vadd.f32 0.0, %v1427
        %v1429 = vpop.f32.mrb[0].mxu0
        %1430 = vmatprep.mubr.f32.mxu0 0.0
        %1431 = vmatmul.mubr.f32.gmra.mrb[0].mxu0 %v502
        %v1432 = vpop.f32.mrb[0].mxu0
        %v1433 = vadd.f32 0.0, %v1432
        %v1434 = vpop.f32.mrb[0].mxu0
        %1435 = vmatprep.mubr.f32.mxu0 0.0
        %1436 = vmatmul.mubr.f32.gmra.mrb[0].mxu0 %v505
        %v1437 = vpop.f32.mrb[0].mxu0
        %v1438 = vadd.f32 0.0, %v1437
        %v1439 = vpop.f32.mrb[0].mxu0
        %1440 = vmatprep.mubr.f32.mxu0 0.0
        %1441 = vmatmul.mubr.f32.gmra.mrb[0].mxu0 %v508
        %v1442 = vpop.f32.mrb[0].mxu0
        %v1443 = vadd.f32 0.0, %v1442
        %v1444 = vpop.f32.mrb[0].mxu0
        %1445 = vmatprep.mubr.f32.mxu0 0.0
        %1446 = vmatmul.mubr.f32.gmra.mrb[0].mxu0 %v511
        %v1447 = vpop.f32.mrb[0].mxu0
        %v1448 = vadd.f32 0.0, %v1447
        %v1449 = vpop.f32.mrb[0].mxu0
        %1450 = vmatprep.mubr.f32.mxu0 0.0
        %1451 = vmatmul.mubr.f32.gmra.mrb[0].mxu0 %v514
        %v1452 = vpop.f32.mrb[0].mxu0
        %v1453 = vadd.f32 0.0, %v1452
        %v1454 = vpop.f32.mrb[0].mxu0
        %1455 = vmatprep.mubr.f32.mxu0 0.0
        %1456 = vmatmul.mubr.f32.gmra.mrb[0].mxu0 %v517
        %v1457 = vpop.f32.mrb[0].mxu0
        %v1458 = vadd.f32 0.0, %v1457
        %v1459 = vpop.f32.mrb[0].mxu0
        %1460 = vmatprep.mubr.f32.mxu0 0.0
        %1461 = vmatmul.mubr.f32.gmra.mrb[0].mxu0 %v520
        %v1462 = vpop.f32.mrb[0].mxu0
        %v1463 = vadd.f32 0.0, %v1462
        %v1464 = vpop.f32.mrb[0].mxu0
        %1465 = vmatprep.mubr.f32.mxu0 0.0
        %1466 = vmatmul.mubr.f32.gmra.mrb[0].mxu0 %v523
        %v1467 = vpop.f32.mrb[0].mxu0
        %v1468 = vadd.f32 0.0, %v1467
        %v1469 = vpop.f32.mrb[0].mxu0
        %1470 = vmatprep.mubr.f32.mxu0 0.0
        %1471 = vmatmul.mubr.f32.gmra.mrb[0].mxu0 %v526
        %v1472 = vpop.f32.mrb[0].mxu0
        %v1473 = vadd.f32 0.0, %v1472
        %v1474 = vpop.f32.mrb[0].mxu0
        %1475 = vdwg.mxu0
        %v1476 = vmax.f32 %v1247, %v1398
        %v1477 = vmax.f32 %v1252, %v1403
        %v1478 = vmax.f32 %v1257, %v1408
        %v1479 = vmax.f32 %v1262, %v1413
        %v1480 = vmax.f32 %v1267, %v1418
        %v1481 = vmax.f32 %v1272, %v1423
        %v1482 = vmax.f32 %v1277, %v1428
        %v1483 = vmax.f32 %v1282, %v1433
        %v1484 = vmax.f32 %v1287, %v1438
        %v1485 = vmax.f32 %v1292, %v1443
        %v1486 = vmax.f32 %v1297, %v1448
        %v1487 = vmax.f32 %v1302, %v1453
        %v1488 = vmax.f32 %v1307, %v1458
        %v1489 = vmax.f32 %v1312, %v1463
        %v1490 = vmax.f32 %v1317, %v1468
        %v1491 = vmax.f32 %v1322, %v1473
        %s1492 = scalar_lea.vmem %s2, 240
        %v1493 = vld [vmem:[%s1492] sm:$0xff]
        %v1494 = vld [vmem:[%s1492 + $0x8] sm:$0xff]
        %v1495 = vld [vmem:[%s1492 + $0x10] sm:$0xff]
        %v1496 = vld [vmem:[%s1492 + $0x18] sm:$0xff]
        %v1497 = vld [vmem:[%s1492 + $0x20] sm:$0xff]
        %1498 = vmatprep.subr.mxu0 0.0
        %1499 = vmatpush1.msra.mxu0 %v1493
        %1500 = vmatprep.subr.mxu0 0.0
        %1501 = vmatpush1.msra.mxu0 %v1494
        %1502 = vmatprep.subr.mxu0 0.0
        %1503 = vmatpush1.msra.mxu0 %v1495
        %1504 = vmatprep.subr.mxu0 0.0
        %1505 = vmatpush1.msra.mxu0 %v1496
        %1506 = vmatprep.subr.mxu0 0.0
        %1507 = vmatpush1.msra.mxu0 %v1497
        %1508 = vmatprep.subr.mxu0 0.0
        %1509 = vmatpush1.msra.mxu0 0.0
        %1510 = vmatprep.subr.mxu0 0.0
        %1511 = vmatpush1.msra.mxu0 0.0
        %1512 = vmatprep.subr.mxu0 0.0
        %1513 = vmatpush1.msra.mxu0 0.0
        %1514 = vmatprep.subr.mxu0 0.0
        %1515 = vmatpush1.msra.mxu0 0.0
        %1516 = vmatprep.subr.mxu0 0.0
        %1517 = vmatpush1.msra.mxu0 0.0
        %1518 = vmatprep.subr.mxu0 0.0
        %1519 = vmatpush1.msra.mxu0 0.0
        %1520 = vmatprep.subr.mxu0 0.0
        %1521 = vmatpush1.msra.mxu0 0.0
        %1522 = vmatprep.subr.mxu0 0.0
        %1523 = vmatpush1.msra.mxu0 0.0
        %1524 = vmatprep.subr.mxu0 0.0
        %1525 = vmatpush1.msra.mxu0 0.0
        %1526 = vmatprep.subr.mxu0 0.0
        %1527 = vmatpush1.msra.mxu0 0.0
        %1528 = vmatprep.subr.mxu0 0.0
        %1529 = vmatpush1.msra.mxu0 0.0
        %1530 = vmatprep.subr.mxu0 0.0
        %1531 = vmatpush1.msra.mxu0 0.0
        %1532 = vmatprep.subr.mxu0 0.0
        %1533 = vmatpush1.msra.mxu0 0.0
        %1534 = vmatprep.subr.mxu0 0.0
        %1535 = vmatpush1.msra.mxu0 0.0
        %1536 = vmatprep.subr.mxu0 0.0
        %1537 = vmatpush1.msra.mxu0 0.0
        %1538 = vmatprep.subr.mxu0 0.0
        %1539 = vmatpush1.msra.mxu0 0.0
        %1540 = vmatprep.subr.mxu0 0.0
        %1541 = vmatpush1.msra.mxu0 0.0
        %1542 = vmatprep.subr.mxu0 0.0
        %1543 = vmatpush1.msra.mxu0 0.0
        %1544 = vmatprep.subr.mxu0 0.0
        %1545 = vmatpush1.msra.mxu0 0.0
        %1546 = vmatprep.subr.mxu0 0.0
        %1547 = vmatpush1.msra.mxu0 0.0
        %1548 = vmatprep.subr.mxu0 0.0
        %1549 = vmatpush1.msra.mxu0 0.0
        %1550 = vmatprep.subr.mxu0 0.0
        %1551 = vmatpush1.msra.mxu0 0.0
        %1552 = vmatprep.subr.mxu0 0.0
        %1553 = vmatpush1.msra.mxu0 0.0
        %1554 = vmatprep.subr.mxu0 0.0
        %1555 = vmatpush1.msra.mxu0 0.0
        %1556 = vmatprep.subr.mxu0 0.0
        %1557 = vmatpush1.msra.mxu0 0.0
        %1558 = vmatprep.subr.mxu0 0.0
        %1559 = vmatpush1.msra.mxu0 0.0
        %1560 = vmatprep.subr.mxu0 0.0
        %1561 = vmatpush1.msra.mxu0 0.0
        %1562 = vmatprep.mubr.f32.mxu0 0.0
        %1563 = vmatmul.mubr.f32.gmra.mrb[0].mxu0 %v481
        %v1564 = vpop.f32.mrb[0].mxu0
        %v1565 = vadd.f32 0.0, %v1564
        %v1566 = vpop.f32.mrb[0].mxu0
        %1567 = vmatprep.mubr.f32.mxu0 0.0
        %1568 = vmatmul.mubr.f32.gmra.mrb[0].mxu0 %v484
        %v1569 = vpop.f32.mrb[0].mxu0
        %v1570 = vadd.f32 0.0, %v1569
        %v1571 = vpop.f32.mrb[0].mxu0
        %1572 = vmatprep.mubr.f32.mxu0 0.0
        %1573 = vmatmul.mubr.f32.gmra.mrb[0].mxu0 %v487
        %v1574 = vpop.f32.mrb[0].mxu0
        %v1575 = vadd.f32 0.0, %v1574
        %v1576 = vpop.f32.mrb[0].mxu0
        %1577 = vmatprep.mubr.f32.mxu0 0.0
        %1578 = vmatmul.mubr.f32.gmra.mrb[0].mxu0 %v490
        %v1579 = vpop.f32.mrb[0].mxu0
        %v1580 = vadd.f32 0.0, %v1579
        %v1581 = vpop.f32.mrb[0].mxu0
        %1582 = vmatprep.mubr.f32.mxu0 0.0
        %1583 = vmatmul.mubr.f32.gmra.mrb[0].mxu0 %v493
        %v1584 = vpop.f32.mrb[0].mxu0
        %v1585 = vadd.f32 0.0, %v1584
        %v1586 = vpop.f32.mrb[0].mxu0
        %1587 = vmatprep.mubr.f32.mxu0 0.0
        %1588 = vmatmul.mubr.f32.gmra.mrb[0].mxu0 %v496
        %v1589 = vpop.f32.mrb[0].mxu0
        %v1590 = vadd.f32 0.0, %v1589
        %v1591 = vpop.f32.mrb[0].mxu0
        %1592 = vmatprep.mubr.f32.mxu0 0.0
        %1593 = vmatmul.mubr.f32.gmra.mrb[0].mxu0 %v499
        %v1594 = vpop.f32.mrb[0].mxu0
        %v1595 = vadd.f32 0.0, %v1594
        %v1596 = vpop.f32.mrb[0].mxu0
        %1597 = vmatprep.mubr.f32.mxu0 0.0
        %1598 = vmatmul.mubr.f32.gmra.mrb[0].mxu0 %v502
        %v1599 = vpop.f32.mrb[0].mxu0
        %v1600 = vadd.f32 0.0, %v1599
        %v1601 = vpop.f32.mrb[0].mxu0
        %1602 = vmatprep.mubr.f32.mxu0 0.0
        %1603 = vmatmul.mubr.f32.gmra.mrb[0].mxu0 %v505
        %v1604 = vpop.f32.mrb[0].mxu0
        %v1605 = vadd.f32 0.0, %v1604
        %v1606 = vpop.f32.mrb[0].mxu0
        %1607 = vmatprep.mubr.f32.mxu0 0.0
        %1608 = vmatmul.mubr.f32.gmra.mrb[0].mxu0 %v508
        %v1609 = vpop.f32.mrb[0].mxu0
        %v1610 = vadd.f32 0.0, %v1609
        %v1611 = vpop.f32.mrb[0].mxu0
        %1612 = vmatprep.mubr.f32.mxu0 0.0
        %1613 = vmatmul.mubr.f32.gmra.mrb[0].mxu0 %v511
        %v1614 = vpop.f32.mrb[0].mxu0
        %v1615 = vadd.f32 0.0, %v1614
        %v1616 = vpop.f32.mrb[0].mxu0
        %1617 = vmatprep.mubr.f32.mxu0 0.0
        %1618 = vmatmul.mubr.f32.gmra.mrb[0].mxu0 %v514
        %v1619 = vpop.f32.mrb[0].mxu0
        %v1620 = vadd.f32 0.0, %v1619
        %v1621 = vpop.f32.mrb[0].mxu0
        %1622 = vmatprep.mubr.f32.mxu0 0.0
        %1623 = vmatmul.mubr.f32.gmra.mrb[0].mxu0 %v517
        %v1624 = vpop.f32.mrb[0].mxu0
        %v1625 = vadd.f32 0.0, %v1624
        %v1626 = vpop.f32.mrb[0].mxu0
        %1627 = vmatprep.mubr.f32.mxu0 0.0
        %1628 = vmatmul.mubr.f32.gmra.mrb[0].mxu0 %v520
        %v1629 = vpop.f32.mrb[0].mxu0
        %v1630 = vadd.f32 0.0, %v1629
        %v1631 = vpop.f32.mrb[0].mxu0
        %1632 = vmatprep.mubr.f32.mxu0 0.0
        %1633 = vmatmul.mubr.f32.gmra.mrb[0].mxu0 %v523
        %v1634 = vpop.f32.mrb[0].mxu0
        %v1635 = vadd.f32 0.0, %v1634
        %v1636 = vpop.f32.mrb[0].mxu0
        %1637 = vmatprep.mubr.f32.mxu0 0.0
        %1638 = vmatmul.mubr.f32.gmra.mrb[0].mxu0 %v526
        %v1639 = vpop.f32.mrb[0].mxu0
        %v1640 = vadd.f32 0.0, %v1639
        %v1641 = vpop.f32.mrb[0].mxu0
        %1642 = vdwg.mxu0
        %v1643 = vmax.f32 %v1476, %v1565
        %v1644 = vmax.f32 %v1477, %v1570
        %v1645 = vmax.f32 %v1478, %v1575
        %v1646 = vmax.f32 %v1479, %v1580
        %v1647 = vmax.f32 %v1480, %v1585
        %v1648 = vmax.f32 %v1481, %v1590
        %v1649 = vmax.f32 %v1482, %v1595
        %v1650 = vmax.f32 %v1483, %v1600
        %v1651 = vmax.f32 %v1484, %v1605
        %v1652 = vmax.f32 %v1485, %v1610
        %v1653 = vmax.f32 %v1486, %v1615
        %v1654 = vmax.f32 %v1487, %v1620
        %v1655 = vmax.f32 %v1488, %v1625
        %v1656 = vmax.f32 %v1489, %v1630
        %v1657 = vmax.f32 %v1490, %v1635
        %v1658 = vmax.f32 %v1491, %v1640
        %v1659 = vmax.f32 %v1158, 0.0
        %v1660 = vmax.f32 %v1159, 0.0
        %v1661 = vmax.f32 %v1160, 0.0
        %v1662 = vmax.f32 %v1161, 0.0
        %v1663 = vmax.f32 %v1162, 0.0
        %v1664 = vmax.f32 %v1163, 0.0
        %v1665 = vmax.f32 %v1164, 0.0
        %v1666 = vmax.f32 %v1165, 0.0
        %v1667 = vmax.f32 %v1166, 0.0
        %v1668 = vmax.f32 %v1167, 0.0
        %v1669 = vmax.f32 %v1168, 0.0
        %v1670 = vmax.f32 %v1169, 0.0
        %v1671 = vmax.f32 %v1170, 0.0
        %v1672 = vmax.f32 %v1171, 0.0
        %v1673 = vmax.f32 %v1172, 0.0
        %v1674 = vmax.f32 %v1173, 0.0
        %v1675 = vadd.f32 %v673, %v1659
        %v1676 = vadd.f32 %v674, %v1660
        %v1677 = vadd.f32 %v675, %v1661
        %v1678 = vadd.f32 %v676, %v1662
        %v1679 = vadd.f32 %v677, %v1663
        %v1680 = vadd.f32 %v678, %v1664
        %v1681 = vadd.f32 %v679, %v1665
        %v1682 = vadd.f32 %v680, %v1666
        %v1683 = vadd.f32 %v681, %v1667
        %v1684 = vadd.f32 %v682, %v1668
        %v1685 = vadd.f32 %v683, %v1669
        %v1686 = vadd.f32 %v684, %v1670
        %v1687 = vadd.f32 %v685, %v1671
        %v1688 = vadd.f32 %v686, %v1672
        %v1689 = vadd.f32 %v687, %v1673
        %v1690 = vadd.f32 %v688, %v1674
        %v1691 = vmax.f32 %v1643, 0.0
        %v1692 = vmax.f32 %v1644, 0.0
        %v1693 = vmax.f32 %v1645, 0.0
        %v1694 = vmax.f32 %v1646, 0.0
        %v1695 = vmax.f32 %v1647, 0.0
        %v1696 = vmax.f32 %v1648, 0.0
        %v1697 = vmax.f32 %v1649, 0.0
        %v1698 = vmax.f32 %v1650, 0.0
        %v1699 = vmax.f32 %v1651, 0.0
        %v1700 = vmax.f32 %v1652, 0.0
        %v1701 = vmax.f32 %v1653, 0.0
        %v1702 = vmax.f32 %v1654, 0.0
        %v1703 = vmax.f32 %v1655, 0.0
        %v1704 = vmax.f32 %v1656, 0.0
        %v1705 = vmax.f32 %v1657, 0.0
        %v1706 = vmax.f32 %v1658, 0.0
        %v1707 = vadd.f32 %v1675, %v1691
        %v1708 = vadd.f32 %v1676, %v1692
        %v1709 = vadd.f32 %v1677, %v1693
        %v1710 = vadd.f32 %v1678, %v1694
        %v1711 = vadd.f32 %v1679, %v1695
        %v1712 = vadd.f32 %v1680, %v1696
        %v1713 = vadd.f32 %v1681, %v1697
        %v1714 = vadd.f32 %v1682, %v1698
        %v1715 = vadd.f32 %v1683, %v1699
        %v1716 = vadd.f32 %v1684, %v1700
        %v1717 = vadd.f32 %v1685, %v1701
        %v1718 = vadd.f32 %v1686, %v1702
        %v1719 = vadd.f32 %v1687, %v1703
        %v1720 = vadd.f32 %v1688, %v1704
        %v1721 = vadd.f32 %v1689, %v1705
        %v1722 = vadd.f32 %v1690, %v1706
        %v1723 = vld [vmem:[%s4] sm:$0xff]
        %v1724 = vld [vmem:[%s4 + $0x8] sm:$0xff]
        %v1725 = vld [vmem:[%s4 + $0x10] sm:$0xff]
        %v1726 = vld [vmem:[%s4 + $0x18] sm:$0xff]
        %v1727 = vld [vmem:[%s4 + $0x20] sm:$0xff]
        %v1728 = vld [vmem:[%s4 + $0x28] sm:$0xff]
        %v1729 = vld [vmem:[%s4 + $0x30] sm:$0xff]
        %v1730 = vld [vmem:[%s4 + $0x38] sm:$0xff]
        %v1731 = vld [vmem:[%s4 + $0x40] sm:$0xff]
        %v1732 = vld [vmem:[%s4 + $0x48] sm:$0xff]
        %v1733 = vld [vmem:[%s4 + $0x50] sm:$0xff]
        %v1734 = vld [vmem:[%s4 + $0x58] sm:$0xff]
        %v1735 = vld [vmem:[%s4 + $0x60] sm:$0xff]
        %v1736 = vld [vmem:[%s4 + $0x68] sm:$0xff]
        %v1737 = vld [vmem:[%s4 + $0x70] sm:$0xff]
        %v1738 = vld [vmem:[%s4 + $0x78] sm:$0xff]
        %v1739 = vld [vmem:[%s5] sm:$0xff]
        %v1740 = vld [vmem:[%s5 + $0x8] sm:$0xff]
        %v1741 = vld [vmem:[%s5 + $0x10] sm:$0xff]
        %v1742 = vld [vmem:[%s5 + $0x18] sm:$0xff]
        %vm1743 = vcmask 261120
        %v1745 = vsel %vm1743, %v451, 0
        %v1748 = vsel %vm1743, %v452, 0
        %v1751 = vsel %vm1743, %v453, 0
        %v1754 = vsel %vm1743, %v454, 0
        %v1757 = vsel %vm1743, %v455, 0
        %v1760 = vsel %vm1743, %v456, 0
        %v1763 = vsel %vm1743, %v457, 0
        %v1766 = vsel %vm1743, %v458, 0
        %v1769 = vsel %vm1743, %v459, 0
        %v1772 = vsel %vm1743, %v460, 0
        %v1775 = vsel %vm1743, %v461, 0
        %v1778 = vsel %vm1743, %v462, 0
        %v1781 = vsel %vm1743, %v463, 0
        %v1784 = vsel %vm1743, %v464, 0
        %v1787 = vsel %vm1743, %v465, 0
        %v1790 = vsel %vm1743, %v466, 0
        %1792 = vmatprep.subr.mxu0 0.0
        %1793 = vmatpush1.msra.mxu0 %v1739
        %1794 = vmatprep.subr.mxu0 0.0
        %1795 = vmatpush1.msra.mxu0 %v1740
        %1796 = vmatprep.subr.mxu0 0.0
        %1797 = vmatpush1.msra.mxu0 %v1741
        %1798 = vmatprep.subr.mxu0 0.0
        %1799 = vmatpush1.msra.mxu0 %v1742
        %1800 = vmatprep.subr.mxu0 0.0
        %1801 = vmatpush1.msra.mxu0 0.0
        %1802 = vmatprep.subr.mxu0 0.0
        %1803 = vmatpush1.msra.mxu0 0.0
        %1804 = vmatprep.subr.mxu0 0.0
        %1805 = vmatpush1.msra.mxu0 0.0
        %1806 = vmatprep.subr.mxu0 0.0
        %1807 = vmatpush1.msra.mxu0 0.0
        %1808 = vmatprep.subr.mxu0 0.0
        %1809 = vmatpush1.msra.mxu0 0.0
        %1810 = vmatprep.subr.mxu0 0.0
        %1811 = vmatpush1.msra.mxu0 0.0
        %1812 = vmatprep.subr.mxu0 0.0
        %1813 = vmatpush1.msra.mxu0 0.0
        %1814 = vmatprep.subr.mxu0 0.0
        %1815 = vmatpush1.msra.mxu0 0.0
        %1816 = vmatprep.subr.mxu0 0.0
        %1817 = vmatpush1.msra.mxu0 0.0
        %1818 = vmatprep.subr.mxu0 0.0
        %1819 = vmatpush1.msra.mxu0 0.0
        %1820 = vmatprep.subr.mxu0 0.0
        %1821 = vmatpush1.msra.mxu0 0.0
        %1822 = vmatprep.subr.mxu0 0.0
        %1823 = vmatpush1.msra.mxu0 0.0
        %1824 = vmatprep.subr.mxu0 0.0
        %1825 = vmatpush1.msra.mxu0 0.0
        %1826 = vmatprep.subr.mxu0 0.0
        %1827 = vmatpush1.msra.mxu0 0.0
        %1828 = vmatprep.subr.mxu0 0.0
        %1829 = vmatpush1.msra.mxu0 0.0
        %1830 = vmatprep.subr.mxu0 0.0
        %1831 = vmatpush1.msra.mxu0 0.0
        %1832 = vmatprep.subr.mxu0 0.0
        %1833 = vmatpush1.msra.mxu0 0.0
        %1834 = vmatprep.subr.mxu0 0.0
        %1835 = vmatpush1.msra.mxu0 0.0
        %1836 = vmatprep.subr.mxu0 0.0
        %1837 = vmatpush1.msra.mxu0 0.0
        %1838 = vmatprep.subr.mxu0 0.0
        %1839 = vmatpush1.msra.mxu0 0.0
        %1840 = vmatprep.subr.mxu0 0.0
        %1841 = vmatpush1.msra.mxu0 0.0
        %1842 = vmatprep.subr.mxu0 0.0
        %1843 = vmatpush1.msra.mxu0 0.0
        %1844 = vmatprep.subr.mxu0 0.0
        %1845 = vmatpush1.msra.mxu0 0.0
        %1846 = vmatprep.subr.mxu0 0.0
        %1847 = vmatpush1.msra.mxu0 0.0
        %1848 = vmatprep.subr.mxu0 0.0
        %1849 = vmatpush1.msra.mxu0 0.0
        %1850 = vmatprep.subr.mxu0 0.0
        %1851 = vmatpush1.msra.mxu0 0.0
        %1852 = vmatprep.subr.mxu0 0.0
        %1853 = vmatpush1.msra.mxu0 0.0
        %1854 = vmatprep.subr.mxu0 0.0
        %1855 = vmatpush1.msra.mxu0 0.0
        %1856 = vmatprep.mubr.f32.mxu0 0.0
        %1857 = vmatmul.mubr.f32.gmra.mrb[0].mxu0 %v1745
        %v1858 = vpop.f32.mrb[0].mxu0
        %v1859 = vadd.f32 0.0, %v1858
        %v1860 = vpop.f32.mrb[0].mxu0
        %1861 = vmatprep.mubr.f32.mxu0 0.0
        %1862 = vmatmul.mubr.f32.gmra.mrb[0].mxu0 %v1748
        %v1863 = vpop.f32.mrb[0].mxu0
        %v1864 = vadd.f32 0.0, %v1863
        %v1865 = vpop.f32.mrb[0].mxu0
        %1866 = vmatprep.mubr.f32.mxu0 0.0
        %1867 = vmatmul.mubr.f32.gmra.mrb[0].mxu0 %v1751
        %v1868 = vpop.f32.mrb[0].mxu0
        %v1869 = vadd.f32 0.0, %v1868
        %v1870 = vpop.f32.mrb[0].mxu0
        %1871 = vmatprep.mubr.f32.mxu0 0.0
        %1872 = vmatmul.mubr.f32.gmra.mrb[0].mxu0 %v1754
        %v1873 = vpop.f32.mrb[0].mxu0
        %v1874 = vadd.f32 0.0, %v1873
        %v1875 = vpop.f32.mrb[0].mxu0
        %1876 = vmatprep.mubr.f32.mxu0 0.0
        %1877 = vmatmul.mubr.f32.gmra.mrb[0].mxu0 %v1757
        %v1878 = vpop.f32.mrb[0].mxu0
        %v1879 = vadd.f32 0.0, %v1878
        %v1880 = vpop.f32.mrb[0].mxu0
        %1881 = vmatprep.mubr.f32.mxu0 0.0
        %1882 = vmatmul.mubr.f32.gmra.mrb[0].mxu0 %v1760
        %v1883 = vpop.f32.mrb[0].mxu0
        %v1884 = vadd.f32 0.0, %v1883
        %v1885 = vpop.f32.mrb[0].mxu0
        %1886 = vmatprep.mubr.f32.mxu0 0.0
        %1887 = vmatmul.mubr.f32.gmra.mrb[0].mxu0 %v1763
        %v1888 = vpop.f32.mrb[0].mxu0
        %v1889 = vadd.f32 0.0, %v1888
        %v1890 = vpop.f32.mrb[0].mxu0
        %1891 = vmatprep.mubr.f32.mxu0 0.0
        %1892 = vmatmul.mubr.f32.gmra.mrb[0].mxu0 %v1766
        %v1893 = vpop.f32.mrb[0].mxu0
        %v1894 = vadd.f32 0.0, %v1893
        %v1895 = vpop.f32.mrb[0].mxu0
        %1896 = vmatprep.mubr.f32.mxu0 0.0
        %1897 = vmatmul.mubr.f32.gmra.mrb[0].mxu0 %v1769
        %v1898 = vpop.f32.mrb[0].mxu0
        %v1899 = vadd.f32 0.0, %v1898
        %v1900 = vpop.f32.mrb[0].mxu0
        %1901 = vmatprep.mubr.f32.mxu0 0.0
        %1902 = vmatmul.mubr.f32.gmra.mrb[0].mxu0 %v1772
        %v1903 = vpop.f32.mrb[0].mxu0
        %v1904 = vadd.f32 0.0, %v1903
        %v1905 = vpop.f32.mrb[0].mxu0
        %1906 = vmatprep.mubr.f32.mxu0 0.0
        %1907 = vmatmul.mubr.f32.gmra.mrb[0].mxu0 %v1775
        %v1908 = vpop.f32.mrb[0].mxu0
        %v1909 = vadd.f32 0.0, %v1908
        %v1910 = vpop.f32.mrb[0].mxu0
        %1911 = vmatprep.mubr.f32.mxu0 0.0
        %1912 = vmatmul.mubr.f32.gmra.mrb[0].mxu0 %v1778
        %v1913 = vpop.f32.mrb[0].mxu0
        %v1914 = vadd.f32 0.0, %v1913
        %v1915 = vpop.f32.mrb[0].mxu0
        %1916 = vmatprep.mubr.f32.mxu0 0.0
        %1917 = vmatmul.mubr.f32.gmra.mrb[0].mxu0 %v1781
        %v1918 = vpop.f32.mrb[0].mxu0
        %v1919 = vadd.f32 0.0, %v1918
        %v1920 = vpop.f32.mrb[0].mxu0
        %1921 = vmatprep.mubr.f32.mxu0 0.0
        %1922 = vmatmul.mubr.f32.gmra.mrb[0].mxu0 %v1784
        %v1923 = vpop.f32.mrb[0].mxu0
        %v1924 = vadd.f32 0.0, %v1923
        %v1925 = vpop.f32.mrb[0].mxu0
        %1926 = vmatprep.mubr.f32.mxu0 0.0
        %1927 = vmatmul.mubr.f32.gmra.mrb[0].mxu0 %v1787
        %v1928 = vpop.f32.mrb[0].mxu0
        %v1929 = vadd.f32 0.0, %v1928
        %v1930 = vpop.f32.mrb[0].mxu0
        %1931 = vmatprep.mubr.f32.mxu0 0.0
        %1932 = vmatmul.mubr.f32.gmra.mrb[0].mxu0 %v1790
        %v1933 = vpop.f32.mrb[0].mxu0
        %v1934 = vadd.f32 0.0, %v1933
        %v1935 = vpop.f32.mrb[0].mxu0
        %1936 = vdwg.mxu0
        %1937 = vmatprep.subr.mxu0 0.0
        %1938 = vmatpush1.msra.mxu0 %v1723
        %1939 = vmatprep.subr.mxu0 0.0
        %1940 = vmatpush1.msra.mxu0 %v1724
        %1941 = vmatprep.subr.mxu0 0.0
        %1942 = vmatpush1.msra.mxu0 %v1725
        %1943 = vmatprep.subr.mxu0 0.0
        %1944 = vmatpush1.msra.mxu0 %v1726
        %1945 = vmatprep.subr.mxu0 0.0
        %1946 = vmatpush1.msra.mxu0 %v1727
        %1947 = vmatprep.subr.mxu0 0.0
        %1948 = vmatpush1.msra.mxu0 %v1728
        %1949 = vmatprep.subr.mxu0 0.0
        %1950 = vmatpush1.msra.mxu0 %v1729
        %1951 = vmatprep.subr.mxu0 0.0
        %1952 = vmatpush1.msra.mxu0 %v1730
        %1953 = vmatprep.subr.mxu0 0.0
        %1954 = vmatpush1.msra.mxu0 %v1731
        %1955 = vmatprep.subr.mxu0 0.0
        %1956 = vmatpush1.msra.mxu0 %v1732
        %1957 = vmatprep.subr.mxu0 0.0
        %1958 = vmatpush1.msra.mxu0 %v1733
        %1959 = vmatprep.subr.mxu0 0.0
        %1960 = vmatpush1.msra.mxu0 %v1734
        %1961 = vmatprep.subr.mxu0 0.0
        %1962 = vmatpush1.msra.mxu0 %v1735
        %1963 = vmatprep.subr.mxu0 0.0
        %1964 = vmatpush1.msra.mxu0 %v1736
        %1965 = vmatprep.subr.mxu0 0.0
        %1966 = vmatpush1.msra.mxu0 %v1737
        %1967 = vmatprep.subr.mxu0 0.0
        %1968 = vmatpush1.msra.mxu0 %v1738
        %1969 = vmatprep.subr.mxu0 0.0
        %1970 = vmatpush1.msra.mxu0 0.0
        %1971 = vmatprep.subr.mxu0 0.0
        %1972 = vmatpush1.msra.mxu0 0.0
        %1973 = vmatprep.subr.mxu0 0.0
        %1974 = vmatpush1.msra.mxu0 0.0
        %1975 = vmatprep.subr.mxu0 0.0
        %1976 = vmatpush1.msra.mxu0 0.0
        %1977 = vmatprep.subr.mxu0 0.0
        %1978 = vmatpush1.msra.mxu0 0.0
        %1979 = vmatprep.subr.mxu0 0.0
        %1980 = vmatpush1.msra.mxu0 0.0
        %1981 = vmatprep.subr.mxu0 0.0
        %1982 = vmatpush1.msra.mxu0 0.0
        %1983 = vmatprep.subr.mxu0 0.0
        %1984 = vmatpush1.msra.mxu0 0.0
        %1985 = vmatprep.subr.mxu0 0.0
        %1986 = vmatpush1.msra.mxu0 0.0
        %1987 = vmatprep.subr.mxu0 0.0
        %1988 = vmatpush1.msra.mxu0 0.0
        %1989 = vmatprep.subr.mxu0 0.0
        %1990 = vmatpush1.msra.mxu0 0.0
        %1991 = vmatprep.subr.mxu0 0.0
        %1992 = vmatpush1.msra.mxu0 0.0
        %1993 = vmatprep.subr.mxu0 0.0
        %1994 = vmatpush1.msra.mxu0 0.0
        %1995 = vmatprep.subr.mxu0 0.0
        %1996 = vmatpush1.msra.mxu0 0.0
        %1997 = vmatprep.subr.mxu0 0.0
        %1998 = vmatpush1.msra.mxu0 0.0
        %1999 = vmatprep.subr.mxu0 0.0
        %2000 = vmatpush1.msra.mxu0 0.0
        %2001 = vmatprep.mubr.f32.mxu0 0.0
        %2002 = vmatmul.mubr.f32.gmra.mrb[0].mxu0 %v1707
        %v2003 = vpop.f32.mrb[0].mxu0
        %v2004 = vadd.f32 %v1859, %v2003
        %v2005 = vpop.f32.mrb[0].mxu0
        %2006 = vmatprep.mubr.f32.mxu0 0.0
        %2007 = vmatmul.mubr.f32.gmra.mrb[0].mxu0 %v1708
        %v2008 = vpop.f32.mrb[0].mxu0
        %v2009 = vadd.f32 %v1864, %v2008
        %v2010 = vpop.f32.mrb[0].mxu0
        %2011 = vmatprep.mubr.f32.mxu0 0.0
        %2012 = vmatmul.mubr.f32.gmra.mrb[0].mxu0 %v1709
        %v2013 = vpop.f32.mrb[0].mxu0
        %v2014 = vadd.f32 %v1869, %v2013
        %v2015 = vpop.f32.mrb[0].mxu0
        %2016 = vmatprep.mubr.f32.mxu0 0.0
        %2017 = vmatmul.mubr.f32.gmra.mrb[0].mxu0 %v1710
        %v2018 = vpop.f32.mrb[0].mxu0
        %v2019 = vadd.f32 %v1874, %v2018
        %v2020 = vpop.f32.mrb[0].mxu0
        %2021 = vmatprep.mubr.f32.mxu0 0.0
        %2022 = vmatmul.mubr.f32.gmra.mrb[0].mxu0 %v1711
        %v2023 = vpop.f32.mrb[0].mxu0
        %v2024 = vadd.f32 %v1879, %v2023
        %v2025 = vpop.f32.mrb[0].mxu0
        %2026 = vmatprep.mubr.f32.mxu0 0.0
        %2027 = vmatmul.mubr.f32.gmra.mrb[0].mxu0 %v1712
        %v2028 = vpop.f32.mrb[0].mxu0
        %v2029 = vadd.f32 %v1884, %v2028
        %v2030 = vpop.f32.mrb[0].mxu0
        %2031 = vmatprep.mubr.f32.mxu0 0.0
        %2032 = vmatmul.mubr.f32.gmra.mrb[0].mxu0 %v1713
        %v2033 = vpop.f32.mrb[0].mxu0
        %v2034 = vadd.f32 %v1889, %v2033
        %v2035 = vpop.f32.mrb[0].mxu0
        %2036 = vmatprep.mubr.f32.mxu0 0.0
        %2037 = vmatmul.mubr.f32.gmra.mrb[0].mxu0 %v1714
        %v2038 = vpop.f32.mrb[0].mxu0
        %v2039 = vadd.f32 %v1894, %v2038
        %v2040 = vpop.f32.mrb[0].mxu0
        %2041 = vmatprep.mubr.f32.mxu0 0.0
        %2042 = vmatmul.mubr.f32.gmra.mrb[0].mxu0 %v1715
        %v2043 = vpop.f32.mrb[0].mxu0
        %v2044 = vadd.f32 %v1899, %v2043
        %v2045 = vpop.f32.mrb[0].mxu0
        %2046 = vmatprep.mubr.f32.mxu0 0.0
        %2047 = vmatmul.mubr.f32.gmra.mrb[0].mxu0 %v1716
        %v2048 = vpop.f32.mrb[0].mxu0
        %v2049 = vadd.f32 %v1904, %v2048
        %v2050 = vpop.f32.mrb[0].mxu0
        %2051 = vmatprep.mubr.f32.mxu0 0.0
        %2052 = vmatmul.mubr.f32.gmra.mrb[0].mxu0 %v1717
        %v2053 = vpop.f32.mrb[0].mxu0
        %v2054 = vadd.f32 %v1909, %v2053
        %v2055 = vpop.f32.mrb[0].mxu0
        %2056 = vmatprep.mubr.f32.mxu0 0.0
        %2057 = vmatmul.mubr.f32.gmra.mrb[0].mxu0 %v1718
        %v2058 = vpop.f32.mrb[0].mxu0
        %v2059 = vadd.f32 %v1914, %v2058
        %v2060 = vpop.f32.mrb[0].mxu0
        %2061 = vmatprep.mubr.f32.mxu0 0.0
        %2062 = vmatmul.mubr.f32.gmra.mrb[0].mxu0 %v1719
        %v2063 = vpop.f32.mrb[0].mxu0
        %v2064 = vadd.f32 %v1919, %v2063
        %v2065 = vpop.f32.mrb[0].mxu0
        %2066 = vmatprep.mubr.f32.mxu0 0.0
        %2067 = vmatmul.mubr.f32.gmra.mrb[0].mxu0 %v1720
        %v2068 = vpop.f32.mrb[0].mxu0
        %v2069 = vadd.f32 %v1924, %v2068
        %v2070 = vpop.f32.mrb[0].mxu0
        %2071 = vmatprep.mubr.f32.mxu0 0.0
        %2072 = vmatmul.mubr.f32.gmra.mrb[0].mxu0 %v1721
        %v2073 = vpop.f32.mrb[0].mxu0
        %v2074 = vadd.f32 %v1929, %v2073
        %v2075 = vpop.f32.mrb[0].mxu0
        %2076 = vmatprep.mubr.f32.mxu0 0.0
        %2077 = vmatmul.mubr.f32.gmra.mrb[0].mxu0 %v1722
        %v2078 = vpop.f32.mrb[0].mxu0
        %v2079 = vadd.f32 %v1934, %v2078
        %v2080 = vpop.f32.mrb[0].mxu0
        %2081 = vdwg.mxu0
        %v2082 = vld [vmem:[%s6] sm:$0x1]
        %v2084 = vlaneseq
        %v2085 = vshrl.u32 %v2084, 7
        %v2086 = vsub.s32 0, %v2085
        %v2087 = vrot.slane %v2082, %v2086
        %v2089 = vadd.f32 %v2004, %v2087
        %v2090 = vadd.f32 %v2009, %v2087
        %v2091 = vadd.f32 %v2014, %v2087
        %v2092 = vadd.f32 %v2019, %v2087
        %v2093 = vadd.f32 %v2024, %v2087
        %v2094 = vadd.f32 %v2029, %v2087
        %v2095 = vadd.f32 %v2034, %v2087
        %v2096 = vadd.f32 %v2039, %v2087
        %v2097 = vadd.f32 %v2044, %v2087
        %v2098 = vadd.f32 %v2049, %v2087
        %v2099 = vadd.f32 %v2054, %v2087
        %v2100 = vadd.f32 %v2059, %v2087
        %v2101 = vadd.f32 %v2064, %v2087
        %v2102 = vadd.f32 %v2069, %v2087
        %v2103 = vadd.f32 %v2074, %v2087
        %v2104 = vadd.f32 %v2079, %v2087
        %v2105 = vxor.u32 %v2089, 2147483648
        %v2106 = vxor.u32 %v2090, 2147483648
        %v2107 = vxor.u32 %v2091, 2147483648
        %v2108 = vxor.u32 %v2092, 2147483648
        %v2109 = vxor.u32 %v2093, 2147483648
        %v2110 = vxor.u32 %v2094, 2147483648
        %v2111 = vxor.u32 %v2095, 2147483648
        %v2112 = vxor.u32 %v2096, 2147483648
        %v2113 = vxor.u32 %v2097, 2147483648
        %v2114 = vxor.u32 %v2098, 2147483648
        %v2115 = vxor.u32 %v2099, 2147483648
        %v2116 = vxor.u32 %v2100, 2147483648
        %v2117 = vxor.u32 %v2101, 2147483648
        %v2118 = vxor.u32 %v2102, 2147483648
        %v2119 = vxor.u32 %v2103, 2147483648
        %v2120 = vxor.u32 %v2104, 2147483648
        %v2121 = vmul.f32 %v2105, 1.442695
        %v2122 = vpow.pop %v2121
        %v2123 = vmul.f32 %v2106, 1.442695
        %v2124 = vpow.pop %v2123
        %v2125 = vmul.f32 %v2107, 1.442695
        %v2126 = vpow.pop %v2125
        %v2127 = vmul.f32 %v2108, 1.442695
        %v2128 = vpow.pop %v2127
        %v2129 = vmul.f32 %v2109, 1.442695
        %v2130 = vpow.pop %v2129
        %v2131 = vmul.f32 %v2110, 1.442695
        %v2132 = vpow.pop %v2131
        %v2133 = vmul.f32 %v2111, 1.442695
        %v2134 = vpow.pop %v2133
        %v2135 = vmul.f32 %v2112, 1.442695
        %v2136 = vpow.pop %v2135
        %v2137 = vmul.f32 %v2113, 1.442695
        %v2138 = vpow.pop %v2137
        %v2139 = vmul.f32 %v2114, 1.442695
        %v2140 = vpow.pop %v2139
        %v2141 = vmul.f32 %v2115, 1.442695
        %v2142 = vpow.pop %v2141
        %v2143 = vmul.f32 %v2116, 1.442695
        %v2144 = vpow.pop %v2143
        %v2145 = vmul.f32 %v2117, 1.442695
        %v2146 = vpow.pop %v2145
        %v2147 = vmul.f32 %v2118, 1.442695
        %v2148 = vpow.pop %v2147
        %v2149 = vmul.f32 %v2119, 1.442695
        %v2150 = vpow.pop %v2149
        %v2151 = vmul.f32 %v2120, 1.442695
        %v2152 = vpow.pop %v2151
        %v2153 = vadd.f32 %v2122, 1.0
        %v2154 = vadd.f32 %v2124, 1.0
        %v2155 = vadd.f32 %v2126, 1.0
        %v2156 = vadd.f32 %v2128, 1.0
        %v2157 = vadd.f32 %v2130, 1.0
        %v2158 = vadd.f32 %v2132, 1.0
        %v2159 = vadd.f32 %v2134, 1.0
        %v2160 = vadd.f32 %v2136, 1.0
        %v2161 = vadd.f32 %v2138, 1.0
        %v2162 = vadd.f32 %v2140, 1.0
        %v2163 = vadd.f32 %v2142, 1.0
        %v2164 = vadd.f32 %v2144, 1.0
        %v2165 = vadd.f32 %v2146, 1.0
        %v2166 = vadd.f32 %v2148, 1.0
        %v2167 = vadd.f32 %v2150, 1.0
        %v2168 = vadd.f32 %v2152, 1.0
        %v2169 = vrcp.pop %v2153
        %v2170 = vmul.f32 1.0, %v2169
        %v2171 = vrcp.pop %v2154
        %v2172 = vmul.f32 1.0, %v2171
        %v2173 = vrcp.pop %v2155
        %v2174 = vmul.f32 1.0, %v2173
        %v2175 = vrcp.pop %v2156
        %v2176 = vmul.f32 1.0, %v2175
        %v2177 = vrcp.pop %v2157
        %v2178 = vmul.f32 1.0, %v2177
        %v2179 = vrcp.pop %v2158
        %v2180 = vmul.f32 1.0, %v2179
        %v2181 = vrcp.pop %v2159
        %v2182 = vmul.f32 1.0, %v2181
        %v2183 = vrcp.pop %v2160
        %v2184 = vmul.f32 1.0, %v2183
        %v2185 = vrcp.pop %v2161
        %v2186 = vmul.f32 1.0, %v2185
        %v2187 = vrcp.pop %v2162
        %v2188 = vmul.f32 1.0, %v2187
        %v2189 = vrcp.pop %v2163
        %v2190 = vmul.f32 1.0, %v2189
        %v2191 = vrcp.pop %v2164
        %v2192 = vmul.f32 1.0, %v2191
        %v2193 = vrcp.pop %v2165
        %v2194 = vmul.f32 1.0, %v2193
        %v2195 = vrcp.pop %v2166
        %v2196 = vmul.f32 1.0, %v2195
        %v2197 = vrcp.pop %v2167
        %v2198 = vmul.f32 1.0, %v2197
        %v2199 = vrcp.pop %v2168
        %v2200 = vmul.f32 1.0, %v2199
        %2217 = vrot.lane.b32.xlu0 %v2089, 32
        %v2218 = vpop.permute.xlu0 %2217
        %2219 = vrot.lane.b32.xlu0 %v2090, 32
        %v2220 = vpop.permute.xlu0 %2219
        %2221 = vrot.lane.b32.xlu0 %v2091, 32
        %v2222 = vpop.permute.xlu0 %2221
        %2223 = vrot.lane.b32.xlu0 %v2092, 32
        %v2224 = vpop.permute.xlu0 %2223
        %2225 = vrot.lane.b32.xlu0 %v2093, 32
        %v2226 = vpop.permute.xlu0 %2225
        %2227 = vrot.lane.b32.xlu0 %v2094, 32
        %v2228 = vpop.permute.xlu0 %2227
        %2229 = vrot.lane.b32.xlu0 %v2095, 32
        %v2230 = vpop.permute.xlu0 %2229
        %2231 = vrot.lane.b32.xlu0 %v2096, 32
        %v2232 = vpop.permute.xlu0 %2231
        %2233 = vrot.lane.b32.xlu0 %v2097, 32
        %v2234 = vpop.permute.xlu0 %2233
        %2235 = vrot.lane.b32.xlu0 %v2098, 32
        %v2236 = vpop.permute.xlu0 %2235
        %2237 = vrot.lane.b32.xlu0 %v2099, 32
        %v2238 = vpop.permute.xlu0 %2237
        %2239 = vrot.lane.b32.xlu0 %v2100, 32
        %v2240 = vpop.permute.xlu0 %2239
        %2241 = vrot.lane.b32.xlu0 %v2101, 32
        %v2242 = vpop.permute.xlu0 %2241
        %2243 = vrot.lane.b32.xlu0 %v2102, 32
        %v2244 = vpop.permute.xlu0 %2243
        %2245 = vrot.lane.b32.xlu0 %v2103, 32
        %v2246 = vpop.permute.xlu0 %2245
        %2247 = vrot.lane.b32.xlu0 %v2104, 32
        %v2248 = vpop.permute.xlu0 %2247
        %v2265 = vmul.f32 %v2170, %v2218
        %v2266 = vmul.f32 %v2172, %v2220
        %v2267 = vmul.f32 %v2174, %v2222
        %v2268 = vmul.f32 %v2176, %v2224
        %v2269 = vmul.f32 %v2178, %v2226
        %v2270 = vmul.f32 %v2180, %v2228
        %v2271 = vmul.f32 %v2182, %v2230
        %v2272 = vmul.f32 %v2184, %v2232
        %v2273 = vmul.f32 %v2186, %v2234
        %v2274 = vmul.f32 %v2188, %v2236
        %v2275 = vmul.f32 %v2190, %v2238
        %v2276 = vmul.f32 %v2192, %v2240
        %v2277 = vmul.f32 %v2194, %v2242
        %v2278 = vmul.f32 %v2196, %v2244
        %v2279 = vmul.f32 %v2198, %v2246
        %v2280 = vmul.f32 %v2200, %v2248
        %2297 = vrot.lane.b32.xlu0 %v2265, 64
        %v2298 = vpop.permute.xlu0 %2297
        %2299 = vrot.lane.b32.xlu0 %v2266, 64
        %v2300 = vpop.permute.xlu0 %2299
        %2301 = vrot.lane.b32.xlu0 %v2267, 64
        %v2302 = vpop.permute.xlu0 %2301
        %2303 = vrot.lane.b32.xlu0 %v2268, 64
        %v2304 = vpop.permute.xlu0 %2303
        %2305 = vrot.lane.b32.xlu0 %v2269, 64
        %v2306 = vpop.permute.xlu0 %2305
        %2307 = vrot.lane.b32.xlu0 %v2270, 64
        %v2308 = vpop.permute.xlu0 %2307
        %2309 = vrot.lane.b32.xlu0 %v2271, 64
        %v2310 = vpop.permute.xlu0 %2309
        %2311 = vrot.lane.b32.xlu0 %v2272, 64
        %v2312 = vpop.permute.xlu0 %2311
        %2313 = vrot.lane.b32.xlu0 %v2273, 64
        %v2314 = vpop.permute.xlu0 %2313
        %2315 = vrot.lane.b32.xlu0 %v2274, 64
        %v2316 = vpop.permute.xlu0 %2315
        %2317 = vrot.lane.b32.xlu0 %v2275, 64
        %v2318 = vpop.permute.xlu0 %2317
        %2319 = vrot.lane.b32.xlu0 %v2276, 64
        %v2320 = vpop.permute.xlu0 %2319
        %2321 = vrot.lane.b32.xlu0 %v2277, 64
        %v2322 = vpop.permute.xlu0 %2321
        %2323 = vrot.lane.b32.xlu0 %v2278, 64
        %v2324 = vpop.permute.xlu0 %2323
        %2325 = vrot.lane.b32.xlu0 %v2279, 64
        %v2326 = vpop.permute.xlu0 %2325
        %2327 = vrot.lane.b32.xlu0 %v2280, 64
        %v2328 = vpop.permute.xlu0 %2327
        %v2345 = vadd.f32 %v2089, %v2298
        %v2346 = vadd.f32 %v2090, %v2300
        %v2347 = vadd.f32 %v2091, %v2302
        %v2348 = vadd.f32 %v2092, %v2304
        %v2349 = vadd.f32 %v2093, %v2306
        %v2350 = vadd.f32 %v2094, %v2308
        %v2351 = vadd.f32 %v2095, %v2310
        %v2352 = vadd.f32 %v2096, %v2312
        %v2353 = vadd.f32 %v2097, %v2314
        %v2354 = vadd.f32 %v2098, %v2316
        %v2355 = vadd.f32 %v2099, %v2318
        %v2356 = vadd.f32 %v2100, %v2320
        %v2357 = vadd.f32 %v2101, %v2322
        %v2358 = vadd.f32 %v2102, %v2324
        %v2359 = vadd.f32 %v2103, %v2326
        %v2360 = vadd.f32 %v2104, %v2328
        %v2361 = vtanh.pop %v2345
        %v2362 = vtanh.pop %v2346
        %v2363 = vtanh.pop %v2347
        %v2364 = vtanh.pop %v2348
        %v2365 = vtanh.pop %v2349
        %v2366 = vtanh.pop %v2350
        %v2367 = vtanh.pop %v2351
        %v2368 = vtanh.pop %v2352
        %v2369 = vtanh.pop %v2353
        %v2370 = vtanh.pop %v2354
        %v2371 = vtanh.pop %v2355
        %v2372 = vtanh.pop %v2356
        %v2373 = vtanh.pop %v2357
        %v2374 = vtanh.pop %v2358
        %v2375 = vtanh.pop %v2359
        %v2376 = vtanh.pop %v2360
        %v2377 = vsub.f32 1.0, %v2170
        %v2378 = vsub.f32 1.0, %v2172
        %v2379 = vsub.f32 1.0, %v2174
        %v2380 = vsub.f32 1.0, %v2176
        %v2381 = vsub.f32 1.0, %v2178
        %v2382 = vsub.f32 1.0, %v2180
        %v2383 = vsub.f32 1.0, %v2182
        %v2384 = vsub.f32 1.0, %v2184
        %v2385 = vsub.f32 1.0, %v2186
        %v2386 = vsub.f32 1.0, %v2188
        %v2387 = vsub.f32 1.0, %v2190
        %v2388 = vsub.f32 1.0, %v2192
        %v2389 = vsub.f32 1.0, %v2194
        %v2390 = vsub.f32 1.0, %v2196
        %v2391 = vsub.f32 1.0, %v2198
        %v2392 = vsub.f32 1.0, %v2200
        %2409 = vrot.lane.b32.xlu0 %v2361, 96
        %v2410 = vpop.permute.xlu0 %2409
        %2411 = vrot.lane.b32.xlu0 %v2362, 96
        %v2412 = vpop.permute.xlu0 %2411
        %2413 = vrot.lane.b32.xlu0 %v2363, 96
        %v2414 = vpop.permute.xlu0 %2413
        %2415 = vrot.lane.b32.xlu0 %v2364, 96
        %v2416 = vpop.permute.xlu0 %2415
        %2417 = vrot.lane.b32.xlu0 %v2365, 96
        %v2418 = vpop.permute.xlu0 %2417
        %2419 = vrot.lane.b32.xlu0 %v2366, 96
        %v2420 = vpop.permute.xlu0 %2419
        %2421 = vrot.lane.b32.xlu0 %v2367, 96
        %v2422 = vpop.permute.xlu0 %2421
        %2423 = vrot.lane.b32.xlu0 %v2368, 96
        %v2424 = vpop.permute.xlu0 %2423
        %2425 = vrot.lane.b32.xlu0 %v2369, 96
        %v2426 = vpop.permute.xlu0 %2425
        %2427 = vrot.lane.b32.xlu0 %v2370, 96
        %v2428 = vpop.permute.xlu0 %2427
        %2429 = vrot.lane.b32.xlu0 %v2371, 96
        %v2430 = vpop.permute.xlu0 %2429
        %2431 = vrot.lane.b32.xlu0 %v2372, 96
        %v2432 = vpop.permute.xlu0 %2431
        %2433 = vrot.lane.b32.xlu0 %v2373, 96
        %v2434 = vpop.permute.xlu0 %2433
        %2435 = vrot.lane.b32.xlu0 %v2374, 96
        %v2436 = vpop.permute.xlu0 %2435
        %2437 = vrot.lane.b32.xlu0 %v2375, 96
        %v2438 = vpop.permute.xlu0 %2437
        %2439 = vrot.lane.b32.xlu0 %v2376, 96
        %v2440 = vpop.permute.xlu0 %2439
        %v2457 = vmul.f32 %v2377, %v2410
        %v2458 = vmul.f32 %v2378, %v2412
        %v2459 = vmul.f32 %v2379, %v2414
        %v2460 = vmul.f32 %v2380, %v2416
        %v2461 = vmul.f32 %v2381, %v2418
        %v2462 = vmul.f32 %v2382, %v2420
        %v2463 = vmul.f32 %v2383, %v2422
        %v2464 = vmul.f32 %v2384, %v2424
        %v2465 = vmul.f32 %v2385, %v2426
        %v2466 = vmul.f32 %v2386, %v2428
        %v2467 = vmul.f32 %v2387, %v2430
        %v2468 = vmul.f32 %v2388, %v2432
        %v2469 = vmul.f32 %v2389, %v2434
        %v2470 = vmul.f32 %v2390, %v2436
        %v2471 = vmul.f32 %v2391, %v2438
        %v2472 = vmul.f32 %v2392, %v2440
        %2473 = vrot.lane.b32.xlu0 %v451, 32
        %v2474 = vpop.permute.xlu0 %2473
        %2475 = vrot.lane.b32.xlu0 %v452, 32
        %v2476 = vpop.permute.xlu0 %2475
        %2477 = vrot.lane.b32.xlu0 %v453, 32
        %v2478 = vpop.permute.xlu0 %2477
        %2479 = vrot.lane.b32.xlu0 %v454, 32
        %v2480 = vpop.permute.xlu0 %2479
        %2481 = vrot.lane.b32.xlu0 %v455, 32
        %v2482 = vpop.permute.xlu0 %2481
        %2483 = vrot.lane.b32.xlu0 %v456, 32
        %v2484 = vpop.permute.xlu0 %2483
        %2485 = vrot.lane.b32.xlu0 %v457, 32
        %v2486 = vpop.permute.xlu0 %2485
        %2487 = vrot.lane.b32.xlu0 %v458, 32
        %v2488 = vpop.permute.xlu0 %2487
        %2489 = vrot.lane.b32.xlu0 %v459, 32
        %v2490 = vpop.permute.xlu0 %2489
        %2491 = vrot.lane.b32.xlu0 %v460, 32
        %v2492 = vpop.permute.xlu0 %2491
        %2493 = vrot.lane.b32.xlu0 %v461, 32
        %v2494 = vpop.permute.xlu0 %2493
        %2495 = vrot.lane.b32.xlu0 %v462, 32
        %v2496 = vpop.permute.xlu0 %2495
        %2497 = vrot.lane.b32.xlu0 %v463, 32
        %v2498 = vpop.permute.xlu0 %2497
        %2499 = vrot.lane.b32.xlu0 %v464, 32
        %v2500 = vpop.permute.xlu0 %2499
        %2501 = vrot.lane.b32.xlu0 %v465, 32
        %v2502 = vpop.permute.xlu0 %2501
        %2503 = vrot.lane.b32.xlu0 %v466, 32
        %v2504 = vpop.permute.xlu0 %2503
        %v2521 = vmul.f32 %v2170, %v2474
        %v2522 = vmul.f32 %v2172, %v2476
        %v2523 = vmul.f32 %v2174, %v2478
        %v2524 = vmul.f32 %v2176, %v2480
        %v2525 = vmul.f32 %v2178, %v2482
        %v2526 = vmul.f32 %v2180, %v2484
        %v2527 = vmul.f32 %v2182, %v2486
        %v2528 = vmul.f32 %v2184, %v2488
        %v2529 = vmul.f32 %v2186, %v2490
        %v2530 = vmul.f32 %v2188, %v2492
        %v2531 = vmul.f32 %v2190, %v2494
        %v2532 = vmul.f32 %v2192, %v2496
        %v2533 = vmul.f32 %v2194, %v2498
        %v2534 = vmul.f32 %v2196, %v2500
        %v2535 = vmul.f32 %v2198, %v2502
        %v2536 = vmul.f32 %v2200, %v2504
        %v2537 = vadd.f32 %v2457, %v2521
        %v2538 = vadd.f32 %v2458, %v2522
        %v2539 = vadd.f32 %v2459, %v2523
        %v2540 = vadd.f32 %v2460, %v2524
        %v2541 = vadd.f32 %v2461, %v2525
        %v2542 = vadd.f32 %v2462, %v2526
        %v2543 = vadd.f32 %v2463, %v2527
        %v2544 = vadd.f32 %v2464, %v2528
        %v2545 = vadd.f32 %v2465, %v2529
        %v2546 = vadd.f32 %v2466, %v2530
        %v2547 = vadd.f32 %v2467, %v2531
        %v2548 = vadd.f32 %v2468, %v2532
        %v2549 = vadd.f32 %v2469, %v2533
        %v2550 = vadd.f32 %v2470, %v2534
        %v2551 = vadd.f32 %v2471, %v2535
        %v2552 = vadd.f32 %v2472, %v2536
        %v2553 = vld [vmem:[%s7] sm:$0xff]
        %v2554 = vld [vmem:[%s7 + $0x8] sm:$0xff]
        %v2555 = vld [vmem:[%s7 + $0x10] sm:$0xff]
        %v2556 = vld [vmem:[%s7 + $0x18] sm:$0xff]
        %v2557 = vld [vmem:[%s8] sm:$0x1]
        %v2559 = vlaneseq
        %v2560 = vshrl.u32 %v2559, 7
        %v2561 = vsub.s32 0, %v2560
        %v2562 = vrot.slane %v2557, %v2561
        %2580 = vrot.lane.b32.xlu0 %v2537, 96
        %v2581 = vpop.permute.xlu0 %2580
        %2582 = vrot.lane.b32.xlu0 %v2538, 96
        %v2583 = vpop.permute.xlu0 %2582
        %2584 = vrot.lane.b32.xlu0 %v2539, 96
        %v2585 = vpop.permute.xlu0 %2584
        %2586 = vrot.lane.b32.xlu0 %v2540, 96
        %v2587 = vpop.permute.xlu0 %2586
        %2588 = vrot.lane.b32.xlu0 %v2541, 96
        %v2589 = vpop.permute.xlu0 %2588
        %2590 = vrot.lane.b32.xlu0 %v2542, 96
        %v2591 = vpop.permute.xlu0 %2590
        %2592 = vrot.lane.b32.xlu0 %v2543, 96
        %v2593 = vpop.permute.xlu0 %2592
        %2594 = vrot.lane.b32.xlu0 %v2544, 96
        %v2595 = vpop.permute.xlu0 %2594
        %2596 = vrot.lane.b32.xlu0 %v2545, 96
        %v2597 = vpop.permute.xlu0 %2596
        %2598 = vrot.lane.b32.xlu0 %v2546, 96
        %v2599 = vpop.permute.xlu0 %2598
        %2600 = vrot.lane.b32.xlu0 %v2547, 96
        %v2601 = vpop.permute.xlu0 %2600
        %2602 = vrot.lane.b32.xlu0 %v2548, 96
        %v2603 = vpop.permute.xlu0 %2602
        %2604 = vrot.lane.b32.xlu0 %v2549, 96
        %v2605 = vpop.permute.xlu0 %2604
        %2606 = vrot.lane.b32.xlu0 %v2550, 96
        %v2607 = vpop.permute.xlu0 %2606
        %2608 = vrot.lane.b32.xlu0 %v2551, 96
        %v2609 = vpop.permute.xlu0 %2608
        %2610 = vrot.lane.b32.xlu0 %v2552, 96
        %v2611 = vpop.permute.xlu0 %2610
        %v2612 = vsel %vm1743, %v2581, 0
        %v2614 = vsel %vm1743, %v2583, 0
        %v2616 = vsel %vm1743, %v2585, 0
        %v2618 = vsel %vm1743, %v2587, 0
        %v2620 = vsel %vm1743, %v2589, 0
        %v2622 = vsel %vm1743, %v2591, 0
        %v2624 = vsel %vm1743, %v2593, 0
        %v2626 = vsel %vm1743, %v2595, 0
        %v2628 = vsel %vm1743, %v2597, 0
        %v2630 = vsel %vm1743, %v2599, 0
        %v2632 = vsel %vm1743, %v2601, 0
        %v2634 = vsel %vm1743, %v2603, 0
        %v2636 = vsel %vm1743, %v2605, 0
        %v2638 = vsel %vm1743, %v2607, 0
        %v2640 = vsel %vm1743, %v2609, 0
        %v2642 = vsel %vm1743, %v2611, 0
        %2644 = vmatprep.subr.mxu0 0.0
        %2645 = vmatpush1.msra.mxu0 %v2553
        %2646 = vmatprep.subr.mxu0 0.0
        %2647 = vmatpush1.msra.mxu0 %v2554
        %2648 = vmatprep.subr.mxu0 0.0
        %2649 = vmatpush1.msra.mxu0 %v2555
        %2650 = vmatprep.subr.mxu0 0.0
        %2651 = vmatpush1.msra.mxu0 %v2556
        %2652 = vmatprep.subr.mxu0 0.0
        %2653 = vmatpush1.msra.mxu0 0.0
        %2654 = vmatprep.subr.mxu0 0.0
        %2655 = vmatpush1.msra.mxu0 0.0
        %2656 = vmatprep.subr.mxu0 0.0
        %2657 = vmatpush1.msra.mxu0 0.0
        %2658 = vmatprep.subr.mxu0 0.0
        %2659 = vmatpush1.msra.mxu0 0.0
        %2660 = vmatprep.subr.mxu0 0.0
        %2661 = vmatpush1.msra.mxu0 0.0
        %2662 = vmatprep.subr.mxu0 0.0
        %2663 = vmatpush1.msra.mxu0 0.0
        %2664 = vmatprep.subr.mxu0 0.0
        %2665 = vmatpush1.msra.mxu0 0.0
        %2666 = vmatprep.subr.mxu0 0.0
        %2667 = vmatpush1.msra.mxu0 0.0
        %2668 = vmatprep.subr.mxu0 0.0
        %2669 = vmatpush1.msra.mxu0 0.0
        %2670 = vmatprep.subr.mxu0 0.0
        %2671 = vmatpush1.msra.mxu0 0.0
        %2672 = vmatprep.subr.mxu0 0.0
        %2673 = vmatpush1.msra.mxu0 0.0
        %2674 = vmatprep.subr.mxu0 0.0
        %2675 = vmatpush1.msra.mxu0 0.0
        %2676 = vmatprep.subr.mxu0 0.0
        %2677 = vmatpush1.msra.mxu0 0.0
        %2678 = vmatprep.subr.mxu0 0.0
        %2679 = vmatpush1.msra.mxu0 0.0
        %2680 = vmatprep.subr.mxu0 0.0
        %2681 = vmatpush1.msra.mxu0 0.0
        %2682 = vmatprep.subr.mxu0 0.0
        %2683 = vmatpush1.msra.mxu0 0.0
        %2684 = vmatprep.subr.mxu0 0.0
        %2685 = vmatpush1.msra.mxu0 0.0
        %2686 = vmatprep.subr.mxu0 0.0
        %2687 = vmatpush1.msra.mxu0 0.0
        %2688 = vmatprep.subr.mxu0 0.0
        %2689 = vmatpush1.msra.mxu0 0.0
        %2690 = vmatprep.subr.mxu0 0.0
        %2691 = vmatpush1.msra.mxu0 0.0
        %2692 = vmatprep.subr.mxu0 0.0
        %2693 = vmatpush1.msra.mxu0 0.0
        %2694 = vmatprep.subr.mxu0 0.0
        %2695 = vmatpush1.msra.mxu0 0.0
        %2696 = vmatprep.subr.mxu0 0.0
        %2697 = vmatpush1.msra.mxu0 0.0
        %2698 = vmatprep.subr.mxu0 0.0
        %2699 = vmatpush1.msra.mxu0 0.0
        %2700 = vmatprep.subr.mxu0 0.0
        %2701 = vmatpush1.msra.mxu0 0.0
        %2702 = vmatprep.subr.mxu0 0.0
        %2703 = vmatpush1.msra.mxu0 0.0
        %2704 = vmatprep.subr.mxu0 0.0
        %2705 = vmatpush1.msra.mxu0 0.0
        %2706 = vmatprep.subr.mxu0 0.0
        %2707 = vmatpush1.msra.mxu0 0.0
        %2708 = vmatprep.mubr.f32.mxu0 0.0
        %2709 = vmatmul.mubr.f32.gmra.mrb[0].mxu0 %v2612
        %v2710 = vpop.f32.mrb[0].mxu0
        %v2711 = vadd.f32 %v2562, %v2710
        %v2712 = vpop.f32.mrb[0].mxu0
        %2713 = vmatprep.mubr.f32.mxu0 0.0
        %2714 = vmatmul.mubr.f32.gmra.mrb[0].mxu0 %v2614
        %v2715 = vpop.f32.mrb[0].mxu0
        %v2716 = vadd.f32 %v2562, %v2715
        %v2717 = vpop.f32.mrb[0].mxu0
        %2718 = vmatprep.mubr.f32.mxu0 0.0
        %2719 = vmatmul.mubr.f32.gmra.mrb[0].mxu0 %v2616
        %v2720 = vpop.f32.mrb[0].mxu0
        %v2721 = vadd.f32 %v2562, %v2720
        %v2722 = vpop.f32.mrb[0].mxu0
        %2723 = vmatprep.mubr.f32.mxu0 0.0
        %2724 = vmatmul.mubr.f32.gmra.mrb[0].mxu0 %v2618
        %v2725 = vpop.f32.mrb[0].mxu0
        %v2726 = vadd.f32 %v2562, %v2725
        %v2727 = vpop.f32.mrb[0].mxu0
        %2728 = vmatprep.mubr.f32.mxu0 0.0
        %2729 = vmatmul.mubr.f32.gmra.mrb[0].mxu0 %v2620
        %v2730 = vpop.f32.mrb[0].mxu0
        %v2731 = vadd.f32 %v2562, %v2730
        %v2732 = vpop.f32.mrb[0].mxu0
        %2733 = vmatprep.mubr.f32.mxu0 0.0
        %2734 = vmatmul.mubr.f32.gmra.mrb[0].mxu0 %v2622
        %v2735 = vpop.f32.mrb[0].mxu0
        %v2736 = vadd.f32 %v2562, %v2735
        %v2737 = vpop.f32.mrb[0].mxu0
        %2738 = vmatprep.mubr.f32.mxu0 0.0
        %2739 = vmatmul.mubr.f32.gmra.mrb[0].mxu0 %v2624
        %v2740 = vpop.f32.mrb[0].mxu0
        %v2741 = vadd.f32 %v2562, %v2740
        %v2742 = vpop.f32.mrb[0].mxu0
        %2743 = vmatprep.mubr.f32.mxu0 0.0
        %2744 = vmatmul.mubr.f32.gmra.mrb[0].mxu0 %v2626
        %v2745 = vpop.f32.mrb[0].mxu0
        %v2746 = vadd.f32 %v2562, %v2745
        %v2747 = vpop.f32.mrb[0].mxu0
        %2748 = vmatprep.mubr.f32.mxu0 0.0
        %2749 = vmatmul.mubr.f32.gmra.mrb[0].mxu0 %v2628
        %v2750 = vpop.f32.mrb[0].mxu0
        %v2751 = vadd.f32 %v2562, %v2750
        %v2752 = vpop.f32.mrb[0].mxu0
        %2753 = vmatprep.mubr.f32.mxu0 0.0
        %2754 = vmatmul.mubr.f32.gmra.mrb[0].mxu0 %v2630
        %v2755 = vpop.f32.mrb[0].mxu0
        %v2756 = vadd.f32 %v2562, %v2755
        %v2757 = vpop.f32.mrb[0].mxu0
        %2758 = vmatprep.mubr.f32.mxu0 0.0
        %2759 = vmatmul.mubr.f32.gmra.mrb[0].mxu0 %v2632
        %v2760 = vpop.f32.mrb[0].mxu0
        %v2761 = vadd.f32 %v2562, %v2760
        %v2762 = vpop.f32.mrb[0].mxu0
        %2763 = vmatprep.mubr.f32.mxu0 0.0
        %2764 = vmatmul.mubr.f32.gmra.mrb[0].mxu0 %v2634
        %v2765 = vpop.f32.mrb[0].mxu0
        %v2766 = vadd.f32 %v2562, %v2765
        %v2767 = vpop.f32.mrb[0].mxu0
        %2768 = vmatprep.mubr.f32.mxu0 0.0
        %2769 = vmatmul.mubr.f32.gmra.mrb[0].mxu0 %v2636
        %v2770 = vpop.f32.mrb[0].mxu0
        %v2771 = vadd.f32 %v2562, %v2770
        %v2772 = vpop.f32.mrb[0].mxu0
        %2773 = vmatprep.mubr.f32.mxu0 0.0
        %2774 = vmatmul.mubr.f32.gmra.mrb[0].mxu0 %v2638
        %v2775 = vpop.f32.mrb[0].mxu0
        %v2776 = vadd.f32 %v2562, %v2775
        %v2777 = vpop.f32.mrb[0].mxu0
        %2778 = vmatprep.mubr.f32.mxu0 0.0
        %2779 = vmatmul.mubr.f32.gmra.mrb[0].mxu0 %v2640
        %v2780 = vpop.f32.mrb[0].mxu0
        %v2781 = vadd.f32 %v2562, %v2780
        %v2782 = vpop.f32.mrb[0].mxu0
        %2783 = vmatprep.mubr.f32.mxu0 0.0
        %2784 = vmatmul.mubr.f32.gmra.mrb[0].mxu0 %v2642
        %v2785 = vpop.f32.mrb[0].mxu0
        %v2786 = vadd.f32 %v2562, %v2785
        %v2787 = vpop.f32.mrb[0].mxu0
        %2788 = vdwg.mxu0
        %vm2789 = vcmask 64512
        %2790 = vst.msk [vmem:[%s390] sm:$0xff] %vm2789, %v2711
        %2791 = vst.msk [vmem:[%s390 + $0x8] sm:$0xff] %vm2789, %v2716
        %2792 = vst.msk [vmem:[%s390 + $0x10] sm:$0xff] %vm2789, %v2721
        %2793 = vst.msk [vmem:[%s390 + $0x18] sm:$0xff] %vm2789, %v2726
        %2794 = vst.msk [vmem:[%s390 + $0x20] sm:$0xff] %vm2789, %v2731
        %2795 = vst.msk [vmem:[%s390 + $0x28] sm:$0xff] %vm2789, %v2736
        %2796 = vst.msk [vmem:[%s390 + $0x30] sm:$0xff] %vm2789, %v2741
        %2797 = vst.msk [vmem:[%s390 + $0x38] sm:$0xff] %vm2789, %v2746
        %2798 = vst.msk [vmem:[%s390 + $0x40] sm:$0xff] %vm2789, %v2751
        %2799 = vst.msk [vmem:[%s390 + $0x48] sm:$0xff] %vm2789, %v2756
        %2800 = vst.msk [vmem:[%s390 + $0x50] sm:$0xff] %vm2789, %v2761
        %2801 = vst.msk [vmem:[%s390 + $0x58] sm:$0xff] %vm2789, %v2766
        %2802 = vst.msk [vmem:[%s390 + $0x60] sm:$0xff] %vm2789, %v2771
        %2803 = vst.msk [vmem:[%s390 + $0x68] sm:$0xff] %vm2789, %v2776
        %2804 = vst.msk [vmem:[%s390 + $0x70] sm:$0xff] %vm2789, %v2781
        %2805 = vst.msk [vmem:[%s390 + $0x78] sm:$0xff] %vm2789, %v2786
        %2822 = vst.msk [vmem:[%s396] sm:$0xff] %vm1743, %v2581
        %2823 = vst.msk [vmem:[%s396 + $0x8] sm:$0xff] %vm1743, %v2583
        %2824 = vst.msk [vmem:[%s396 + $0x10] sm:$0xff] %vm1743, %v2585
        %2825 = vst.msk [vmem:[%s396 + $0x18] sm:$0xff] %vm1743, %v2587
        %2826 = vst.msk [vmem:[%s396 + $0x20] sm:$0xff] %vm1743, %v2589
        %2827 = vst.msk [vmem:[%s396 + $0x28] sm:$0xff] %vm1743, %v2591
        %2828 = vst.msk [vmem:[%s396 + $0x30] sm:$0xff] %vm1743, %v2593
        %2829 = vst.msk [vmem:[%s396 + $0x38] sm:$0xff] %vm1743, %v2595
        %2830 = vst.msk [vmem:[%s396 + $0x40] sm:$0xff] %vm1743, %v2597
        %2831 = vst.msk [vmem:[%s396 + $0x48] sm:$0xff] %vm1743, %v2599
        %2832 = vst.msk [vmem:[%s396 + $0x50] sm:$0xff] %vm1743, %v2601
        %2833 = vst.msk [vmem:[%s396 + $0x58] sm:$0xff] %vm1743, %v2603
        %2834 = vst.msk [vmem:[%s396 + $0x60] sm:$0xff] %vm1743, %v2605
        %2835 = vst.msk [vmem:[%s396 + $0x68] sm:$0xff] %vm1743, %v2607
        %2836 = vst.msk [vmem:[%s396 + $0x70] sm:$0xff] %vm1743, %v2609
        %2837 = vst.msk [vmem:[%s396 + $0x78] sm:$0xff] %vm1743, %v2611
        %s2838 = sand.u32 %s229, 1
        %s2839 = sand.u32 %s229, 1
        %s2840 = smul.addr %s2839, 128
        %s2841 = scalar_lea.vmem [#allocation2], %s2840
        %s2842 = sand.u32 %s255, 1
        %s2843 = sand.u32 %s255, 1
        %s2844 = smul.addr %s2843, 128
        %s2845 = scalar_lea.vmem [#allocation3], %s2844
        // Predicated region
        $region57: #{tpu_custom_call.1} parent=55 // pred_check
          %p2846 = pneg %p239
        $region58: #{tpu_custom_call.1} parent=55 // pred_check_branch
          %2848 = sbr.rel (%p2846) target = $region60
        $region59: #{tpu_custom_call.1} parent=55 // pred_region
          %s2849 = smul.u32 16, %s22
          %s2850 = ssub.s32 25, %s2849
          %p2851 = scmp.lt.s32.totalorder %s2850, 16
          %s2852 = scalar_select %p2851, %s2850, 16
          %s2853 = smul.u32 128, %s2852
          %p2854 = scmp.ne.s32.totalorder 0, %s2853
          %s2855 = smul.addr %s2849, 8
          %s2856 = scalar_lea.vmem %s9, %s2855
          // Predicated region
          $region61: #{tpu_custom_call.1} parent=59 // pred_check
            %p2857 = pneg %p2854
          $region62: #{tpu_custom_call.1} parent=59 // pred_check_branch
            %2859 = sbr.rel (%p2857) target = $region64
          $region63: #{tpu_custom_call.1} parent=59 // pred_region
            // Predicated region
            $region65: #{tpu_custom_call.1} parent=63 // pred_check
              _
            $region66: #{tpu_custom_call.1} parent=63 // pred_check_branch
              %2861 = sbr.rel (0) target = $region68
            $region67: #{tpu_custom_call.1} parent=63 // pred_region
              // Predicated region
              $region87: #{tpu_custom_call.1} parent=67 // pred_check
                _
              $region88: #{tpu_custom_call.1} parent=67 // pred_check_branch
                %2940 = sbr.rel (0) target = $region90
              $region89: #{tpu_custom_call.1} parent=67 // pred_region
                %s2941 = sshrl.u32 %s2852, 4
                // While loop
                $region91: #{tpu_custom_call.1} parent=89 // loop_pre_header
                  _
                $region92: #{tpu_custom_call.1} parent=89 // loop_header
                  %s2943 = sphi 0, %s2945
                  %p2944 = scmp.ge.s32.totalorder %s2943, %s2941
                  %s2948 = sphi 0, %s2985
                  %s2949 = sphi %s2841, %s2988
                  %s2950 = sphi %s2856, %s2989
                $region93: #{tpu_custom_call.1} parent=89 // loop_header_branch
                  %2947 = sbr.rel (%p2944) target = $region97
                $region94: #{tpu_custom_call.1} parent=89 // loop_body
                  %v2951 = vld [vmem:[%s2949] sm:$0xff]
                  %2952 = vst [vmem:[%s2950] sm:$0xff] %v2951
                  %v2953 = vld [vmem:[%s2949 + $0x8] sm:$0xff]
                  %2954 = vst [vmem:[%s2950 + $0x8] sm:$0xff] %v2953
                  %v2955 = vld [vmem:[%s2949 + $0x10] sm:$0xff]
                  %2956 = vst [vmem:[%s2950 + $0x10] sm:$0xff] %v2955
                  %v2957 = vld [vmem:[%s2949 + $0x18] sm:$0xff]
                  %2958 = vst [vmem:[%s2950 + $0x18] sm:$0xff] %v2957
                  %v2959 = vld [vmem:[%s2949 + $0x20] sm:$0xff]
                  %2960 = vst [vmem:[%s2950 + $0x20] sm:$0xff] %v2959
                  %v2961 = vld [vmem:[%s2949 + $0x28] sm:$0xff]
                  %2962 = vst [vmem:[%s2950 + $0x28] sm:$0xff] %v2961
                  %v2963 = vld [vmem:[%s2949 + $0x30] sm:$0xff]
                  %2964 = vst [vmem:[%s2950 + $0x30] sm:$0xff] %v2963
                  %v2965 = vld [vmem:[%s2949 + $0x38] sm:$0xff]
                  %2966 = vst [vmem:[%s2950 + $0x38] sm:$0xff] %v2965
                  %v2967 = vld [vmem:[%s2949 + $0x40] sm:$0xff]
                  %2968 = vst [vmem:[%s2950 + $0x40] sm:$0xff] %v2967
                  %v2969 = vld [vmem:[%s2949 + $0x48] sm:$0xff]
                  %2970 = vst [vmem:[%s2950 + $0x48] sm:$0xff] %v2969
                  %v2971 = vld [vmem:[%s2949 + $0x50] sm:$0xff]
                  %2972 = vst [vmem:[%s2950 + $0x50] sm:$0xff] %v2971
                  %v2973 = vld [vmem:[%s2949 + $0x58] sm:$0xff]
                  %2974 = vst [vmem:[%s2950 + $0x58] sm:$0xff] %v2973
                  %v2975 = vld [vmem:[%s2949 + $0x60] sm:$0xff]
                  %2976 = vst [vmem:[%s2950 + $0x60] sm:$0xff] %v2975
                  %v2977 = vld [vmem:[%s2949 + $0x68] sm:$0xff]
                  %2978 = vst [vmem:[%s2950 + $0x68] sm:$0xff] %v2977
                  %v2979 = vld [vmem:[%s2949 + $0x70] sm:$0xff]
                  %2980 = vst [vmem:[%s2950 + $0x70] sm:$0xff] %v2979
                  %v2981 = vld [vmem:[%s2949 + $0x78] sm:$0xff]
                  %2982 = vst [vmem:[%s2950 + $0x78] sm:$0xff] %v2981
                  %s2983 = sadd.s32 1, %s2948
                  %p2984 = scmp.ge.s32.totalorder %s2983, %s2941
                  %s2985 = scalar_select %p2984, 0, %s2983
                  %s2986 = smul.u32 %s2985, 128
                  %s2987 = smul.u32 %s2985, 128
                  %s2988 = scalar_lea.vmem %s2841, %s2986 [#allocation2]
                  %s2989 = scalar_lea.vmem %s2856, %s2987
                $region95: #{tpu_custom_call.1} parent=89 // loop_footer
                  %s2945 = sadd.s32 %s2943, 1
                $region96: #{tpu_custom_call.1} parent=89 // loop_footer_branch
                  %2942 = sbr.rel target = $region92
                $region97: #{tpu_custom_call.1} parent=89 // loop_exit
                  _
                %s2990 = sshrl.u32 %s2852, 4
                %s2991 = sand.u32 %s2852, 15
                %s2992 = smul.u32 %s2990, 16
                %s2993 = smul.u32 8, %s2992
                %s2994 = scalar_lea.vmem %s2841, %s2993 [#allocation2]
                %s2995 = smul.u32 8, %s2992
                %s2996 = scalar_lea.vmem %s2856, %s2995
                // While loop
                $region98: #{tpu_custom_call.1} parent=89 // loop_pre_header
                  _
                $region99: #{tpu_custom_call.1} parent=89 // loop_header
                  %s2998 = sphi 0, %s3000
                  %p2999 = scmp.ge.s32.totalorder %s2998, %s2991
                  %s3003 = sphi 0, %s3010
                  %s3004 = sphi %s2994, %s3013
                  %s3005 = sphi %s2996, %s3014
                $region100: #{tpu_custom_call.1} parent=89 // loop_header_branch
                  %3002 = sbr.rel (%p2999) target = $region104
                $region101: #{tpu_custom_call.1} parent=89 // loop_body
                  %v3006 = vld [vmem:[%s3004] sm:$0xff]
                  %3007 = vst [vmem:[%s3005] sm:$0xff] %v3006
                  %s3008 = sadd.s32 1, %s3003
                  %p3009 = scmp.ge.s32.totalorder %s3008, %s2991
                  %s3010 = scalar_select %p3009, 0, %s3008
                  %s3011 = smul.u32 %s3010, 8
                  %s3012 = smul.u32 %s3010, 8
                  %s3013 = scalar_lea.vmem %s2994, %s3011 [#allocation2]
                  %s3014 = scalar_lea.vmem %s2996, %s3012
                $region102: #{tpu_custom_call.1} parent=89 // loop_footer
                  %s3000 = sadd.s32 %s2998, 1
                $region103: #{tpu_custom_call.1} parent=89 // loop_footer_branch
                  %2997 = sbr.rel target = $region99
                $region104: #{tpu_custom_call.1} parent=89 // loop_exit
                  _
              $region90: #{tpu_custom_call.1} parent=67 // pred_fallthru
                _
              // Predicated region
              $region105: #{tpu_custom_call.1} parent=67 // pred_check
                _
              $region106: #{tpu_custom_call.1} parent=67 // pred_check_branch
                %3016 = sbr.rel target = $region108
              $region107: #{tpu_custom_call.1} parent=67 // pred_region
                _
              $region108: #{tpu_custom_call.1} parent=67 // pred_fallthru
                _
            $region68: #{tpu_custom_call.1} parent=63 // pred_fallthru
              _
            // Predicated region
            $region69: #{tpu_custom_call.1} parent=63 // pred_check
              _
            $region70: #{tpu_custom_call.1} parent=63 // pred_check_branch
              %2863 = sbr.rel target = $region72
            $region71: #{tpu_custom_call.1} parent=63 // pred_region
              %s2865 = sshrl.u32 %s2852, 4
              // While loop
              $region73: #{tpu_custom_call.1} parent=71 // loop_pre_header
                _
              $region74: #{tpu_custom_call.1} parent=71 // loop_header
                %s2867 = sphi 0, %s2869
                %p2868 = scmp.ge.s32.totalorder %s2867, %s2865
                %s2872 = sphi 0, %s2909
                %s2873 = sphi %s2841, %s2912
                %s2874 = sphi %s2856, %s2913
              $region75: #{tpu_custom_call.1} parent=71 // loop_header_branch
                %2871 = sbr.rel (%p2868) target = $region79
              $region76: #{tpu_custom_call.1} parent=71 // loop_body
                %v2875 = vld [vmem:[%s2873] sm:$0xff]
                %2876 = vst [vmem:[%s2874] sm:$0xff] %v2875
                %v2877 = vld [vmem:[%s2873 + $0x8] sm:$0xff]
                %2878 = vst [vmem:[%s2874 + $0x8] sm:$0xff] %v2877
                %v2879 = vld [vmem:[%s2873 + $0x10] sm:$0xff]
                %2880 = vst [vmem:[%s2874 + $0x10] sm:$0xff] %v2879
                %v2881 = vld [vmem:[%s2873 + $0x18] sm:$0xff]
                %2882 = vst [vmem:[%s2874 + $0x18] sm:$0xff] %v2881
                %v2883 = vld [vmem:[%s2873 + $0x20] sm:$0xff]
                %2884 = vst [vmem:[%s2874 + $0x20] sm:$0xff] %v2883
                %v2885 = vld [vmem:[%s2873 + $0x28] sm:$0xff]
                %2886 = vst [vmem:[%s2874 + $0x28] sm:$0xff] %v2885
                %v2887 = vld [vmem:[%s2873 + $0x30] sm:$0xff]
                %2888 = vst [vmem:[%s2874 + $0x30] sm:$0xff] %v2887
                %v2889 = vld [vmem:[%s2873 + $0x38] sm:$0xff]
                %2890 = vst [vmem:[%s2874 + $0x38] sm:$0xff] %v2889
                %v2891 = vld [vmem:[%s2873 + $0x40] sm:$0xff]
                %2892 = vst [vmem:[%s2874 + $0x40] sm:$0xff] %v2891
                %v2893 = vld [vmem:[%s2873 + $0x48] sm:$0xff]
                %2894 = vst [vmem:[%s2874 + $0x48] sm:$0xff] %v2893
                %v2895 = vld [vmem:[%s2873 + $0x50] sm:$0xff]
                %2896 = vst [vmem:[%s2874 + $0x50] sm:$0xff] %v2895
                %v2897 = vld [vmem:[%s2873 + $0x58] sm:$0xff]
                %2898 = vst [vmem:[%s2874 + $0x58] sm:$0xff] %v2897
                %v2899 = vld [vmem:[%s2873 + $0x60] sm:$0xff]
                %2900 = vst [vmem:[%s2874 + $0x60] sm:$0xff] %v2899
                %v2901 = vld [vmem:[%s2873 + $0x68] sm:$0xff]
                %2902 = vst [vmem:[%s2874 + $0x68] sm:$0xff] %v2901
                %v2903 = vld [vmem:[%s2873 + $0x70] sm:$0xff]
                %2904 = vst [vmem:[%s2874 + $0x70] sm:$0xff] %v2903
                %v2905 = vld [vmem:[%s2873 + $0x78] sm:$0xff]
                %2906 = vst [vmem:[%s2874 + $0x78] sm:$0xff] %v2905
                %s2907 = sadd.s32 1, %s2872
                %p2908 = scmp.ge.s32.totalorder %s2907, %s2865
                %s2909 = scalar_select %p2908, 0, %s2907
                %s2910 = smul.u32 %s2909, 128
                %s2911 = smul.u32 %s2909, 128
                %s2912 = scalar_lea.vmem %s2841, %s2910 [#allocation2]
                %s2913 = scalar_lea.vmem %s2856, %s2911
              $region77: #{tpu_custom_call.1} parent=71 // loop_footer
                %s2869 = sadd.s32 %s2867, 1
              $region78: #{tpu_custom_call.1} parent=71 // loop_footer_branch
                %2866 = sbr.rel target = $region74
              $region79: #{tpu_custom_call.1} parent=71 // loop_exit
                _
              %s2914 = sshrl.u32 %s2852, 4
              %s2915 = sand.u32 %s2852, 15
              %s2916 = smul.u32 %s2914, 16
              %s2917 = smul.u32 8, %s2916
              %s2918 = scalar_lea.vmem %s2841, %s2917 [#allocation2]
              %s2919 = smul.u32 8, %s2916
              %s2920 = scalar_lea.vmem %s2856, %s2919
              // While loop
              $region80: #{tpu_custom_call.1} parent=71 // loop_pre_header
                _
              $region81: #{tpu_custom_call.1} parent=71 // loop_header
                %s2922 = sphi 0, %s2924
                %p2923 = scmp.ge.s32.totalorder %s2922, %s2915
                %s2927 = sphi 0, %s2934
                %s2928 = sphi %s2918, %s2937
                %s2929 = sphi %s2920, %s2938
              $region82: #{tpu_custom_call.1} parent=71 // loop_header_branch
                %2926 = sbr.rel (%p2923) target = $region86
              $region83: #{tpu_custom_call.1} parent=71 // loop_body
                %v2930 = vld [vmem:[%s2928] sm:$0xff]
                %2931 = vst [vmem:[%s2929] sm:$0xff] %v2930
                %s2932 = sadd.s32 1, %s2927
                %p2933 = scmp.ge.s32.totalorder %s2932, %s2915
                %s2934 = scalar_select %p2933, 0, %s2932
                %s2935 = smul.u32 %s2934, 8
                %s2936 = smul.u32 %s2934, 8
                %s2937 = scalar_lea.vmem %s2918, %s2935 [#allocation2]
                %s2938 = scalar_lea.vmem %s2920, %s2936
              $region84: #{tpu_custom_call.1} parent=71 // loop_footer
                %s2924 = sadd.s32 %s2922, 1
              $region85: #{tpu_custom_call.1} parent=71 // loop_footer_branch
                %2921 = sbr.rel target = $region81
              $region86: #{tpu_custom_call.1} parent=71 // loop_exit
                _
            $region72: #{tpu_custom_call.1} parent=63 // pred_fallthru
              _
          $region64: #{tpu_custom_call.1} parent=59 // pred_fallthru
            _
          %3017 = vnop
        $region60: #{tpu_custom_call.1} parent=55 // pred_fallthru
          _
        // Predicated region
        $region109: #{tpu_custom_call.1} parent=55 // pred_check
          %p3018 = pneg %p265
        $region110: #{tpu_custom_call.1} parent=55 // pred_check_branch
          %3020 = sbr.rel (%p3018) target = $region112
        $region111: #{tpu_custom_call.1} parent=55 // pred_region
          %s3021 = smul.u32 16, %s22
          %s3022 = ssub.s32 25, %s3021
          %p3023 = scmp.lt.s32.totalorder %s3022, 16
          %s3024 = scalar_select %p3023, %s3022, 16
          %s3025 = smul.u32 128, %s3024
          %p3026 = scmp.ne.s32.totalorder 0, %s3025
          %s3027 = smul.addr %s3021, 8
          %s3028 = scalar_lea.vmem %s10, %s3027
          // Predicated region
          $region113: #{tpu_custom_call.1} parent=111 // pred_check
            %p3029 = pneg %p3026
          $region114: #{tpu_custom_call.1} parent=111 // pred_check_branch
            %3031 = sbr.rel (%p3029) target = $region116
          $region115: #{tpu_custom_call.1} parent=111 // pred_region
            // Predicated region
            $region117: #{tpu_custom_call.1} parent=115 // pred_check
              _
            $region118: #{tpu_custom_call.1} parent=115 // pred_check_branch
              %3033 = sbr.rel (0) target = $region120
            $region119: #{tpu_custom_call.1} parent=115 // pred_region
              // Predicated region
              $region139: #{tpu_custom_call.1} parent=119 // pred_check
                _
              $region140: #{tpu_custom_call.1} parent=119 // pred_check_branch
                %3112 = sbr.rel (0) target = $region142
              $region141: #{tpu_custom_call.1} parent=119 // pred_region
                %s3113 = sshrl.u32 %s3024, 4
                // While loop
                $region143: #{tpu_custom_call.1} parent=141 // loop_pre_header
                  _
                $region144: #{tpu_custom_call.1} parent=141 // loop_header
                  %s3115 = sphi 0, %s3117
                  %p3116 = scmp.ge.s32.totalorder %s3115, %s3113
                  %s3120 = sphi 0, %s3157
                  %s3121 = sphi %s2845, %s3160
                  %s3122 = sphi %s3028, %s3161
                $region145: #{tpu_custom_call.1} parent=141 // loop_header_branch
                  %3119 = sbr.rel (%p3116) target = $region149
                $region146: #{tpu_custom_call.1} parent=141 // loop_body
                  %v3123 = vld [vmem:[%s3121] sm:$0xff]
                  %3124 = vst [vmem:[%s3122] sm:$0xff] %v3123
                  %v3125 = vld [vmem:[%s3121 + $0x8] sm:$0xff]
                  %3126 = vst [vmem:[%s3122 + $0x8] sm:$0xff] %v3125
                  %v3127 = vld [vmem:[%s3121 + $0x10] sm:$0xff]
                  %3128 = vst [vmem:[%s3122 + $0x10] sm:$0xff] %v3127
                  %v3129 = vld [vmem:[%s3121 + $0x18] sm:$0xff]
                  %3130 = vst [vmem:[%s3122 + $0x18] sm:$0xff] %v3129
                  %v3131 = vld [vmem:[%s3121 + $0x20] sm:$0xff]
                  %3132 = vst [vmem:[%s3122 + $0x20] sm:$0xff] %v3131
                  %v3133 = vld [vmem:[%s3121 + $0x28] sm:$0xff]
                  %3134 = vst [vmem:[%s3122 + $0x28] sm:$0xff] %v3133
                  %v3135 = vld [vmem:[%s3121 + $0x30] sm:$0xff]
                  %3136 = vst [vmem:[%s3122 + $0x30] sm:$0xff] %v3135
                  %v3137 = vld [vmem:[%s3121 + $0x38] sm:$0xff]
                  %3138 = vst [vmem:[%s3122 + $0x38] sm:$0xff] %v3137
                  %v3139 = vld [vmem:[%s3121 + $0x40] sm:$0xff]
                  %3140 = vst [vmem:[%s3122 + $0x40] sm:$0xff] %v3139
                  %v3141 = vld [vmem:[%s3121 + $0x48] sm:$0xff]
                  %3142 = vst [vmem:[%s3122 + $0x48] sm:$0xff] %v3141
                  %v3143 = vld [vmem:[%s3121 + $0x50] sm:$0xff]
                  %3144 = vst [vmem:[%s3122 + $0x50] sm:$0xff] %v3143
                  %v3145 = vld [vmem:[%s3121 + $0x58] sm:$0xff]
                  %3146 = vst [vmem:[%s3122 + $0x58] sm:$0xff] %v3145
                  %v3147 = vld [vmem:[%s3121 + $0x60] sm:$0xff]
                  %3148 = vst [vmem:[%s3122 + $0x60] sm:$0xff] %v3147
                  %v3149 = vld [vmem:[%s3121 + $0x68] sm:$0xff]
                  %3150 = vst [vmem:[%s3122 + $0x68] sm:$0xff] %v3149
                  %v3151 = vld [vmem:[%s3121 + $0x70] sm:$0xff]
                  %3152 = vst [vmem:[%s3122 + $0x70] sm:$0xff] %v3151
                  %v3153 = vld [vmem:[%s3121 + $0x78] sm:$0xff]
                  %3154 = vst [vmem:[%s3122 + $0x78] sm:$0xff] %v3153
                  %s3155 = sadd.s32 1, %s3120
                  %p3156 = scmp.ge.s32.totalorder %s3155, %s3113
                  %s3157 = scalar_select %p3156, 0, %s3155
                  %s3158 = smul.u32 %s3157, 128
                  %s3159 = smul.u32 %s3157, 128
                  %s3160 = scalar_lea.vmem %s2845, %s3158 [#allocation3]
                  %s3161 = scalar_lea.vmem %s3028, %s3159
                $region147: #{tpu_custom_call.1} parent=141 // loop_footer
                  %s3117 = sadd.s32 %s3115, 1
                $region148: #{tpu_custom_call.1} parent=141 // loop_footer_branch
                  %3114 = sbr.rel target = $region144
                $region149: #{tpu_custom_call.1} parent=141 // loop_exit
                  _
                %s3162 = sshrl.u32 %s3024, 4
                %s3163 = sand.u32 %s3024, 15
                %s3164 = smul.u32 %s3162, 16
                %s3165 = smul.u32 8, %s3164
                %s3166 = scalar_lea.vmem %s2845, %s3165 [#allocation3]
                %s3167 = smul.u32 8, %s3164
                %s3168 = scalar_lea.vmem %s3028, %s3167
                // While loop
                $region150: #{tpu_custom_call.1} parent=141 // loop_pre_header
                  _
                $region151: #{tpu_custom_call.1} parent=141 // loop_header
                  %s3170 = sphi 0, %s3172
                  %p3171 = scmp.ge.s32.totalorder %s3170, %s3163
                  %s3175 = sphi 0, %s3182
                  %s3176 = sphi %s3166, %s3185
                  %s3177 = sphi %s3168, %s3186
                $region152: #{tpu_custom_call.1} parent=141 // loop_header_branch
                  %3174 = sbr.rel (%p3171) target = $region156
                $region153: #{tpu_custom_call.1} parent=141 // loop_body
                  %v3178 = vld [vmem:[%s3176] sm:$0xff]
                  %3179 = vst [vmem:[%s3177] sm:$0xff] %v3178
                  %s3180 = sadd.s32 1, %s3175
                  %p3181 = scmp.ge.s32.totalorder %s3180, %s3163
                  %s3182 = scalar_select %p3181, 0, %s3180
                  %s3183 = smul.u32 %s3182, 8
                  %s3184 = smul.u32 %s3182, 8
                  %s3185 = scalar_lea.vmem %s3166, %s3183 [#allocation3]
                  %s3186 = scalar_lea.vmem %s3168, %s3184
                $region154: #{tpu_custom_call.1} parent=141 // loop_footer
                  %s3172 = sadd.s32 %s3170, 1
                $region155: #{tpu_custom_call.1} parent=141 // loop_footer_branch
                  %3169 = sbr.rel target = $region151
                $region156: #{tpu_custom_call.1} parent=141 // loop_exit
                  _
              $region142: #{tpu_custom_call.1} parent=119 // pred_fallthru
                _
              // Predicated region
              $region157: #{tpu_custom_call.1} parent=119 // pred_check
                _
              $region158: #{tpu_custom_call.1} parent=119 // pred_check_branch
                %3188 = sbr.rel target = $region160
              $region159: #{tpu_custom_call.1} parent=119 // pred_region
                _
              $region160: #{tpu_custom_call.1} parent=119 // pred_fallthru
                _
            $region120: #{tpu_custom_call.1} parent=115 // pred_fallthru
              _
            // Predicated region
            $region121: #{tpu_custom_call.1} parent=115 // pred_check
              _
            $region122: #{tpu_custom_call.1} parent=115 // pred_check_branch
              %3035 = sbr.rel target = $region124
            $region123: #{tpu_custom_call.1} parent=115 // pred_region
              %s3037 = sshrl.u32 %s3024, 4
              // While loop
              $region125: #{tpu_custom_call.1} parent=123 // loop_pre_header
                _
              $region126: #{tpu_custom_call.1} parent=123 // loop_header
                %s3039 = sphi 0, %s3041
                %p3040 = scmp.ge.s32.totalorder %s3039, %s3037
                %s3044 = sphi 0, %s3081
                %s3045 = sphi %s2845, %s3084
                %s3046 = sphi %s3028, %s3085
              $region127: #{tpu_custom_call.1} parent=123 // loop_header_branch
                %3043 = sbr.rel (%p3040) target = $region131
              $region128: #{tpu_custom_call.1} parent=123 // loop_body
                %v3047 = vld [vmem:[%s3045] sm:$0xff]
                %3048 = vst [vmem:[%s3046] sm:$0xff] %v3047
                %v3049 = vld [vmem:[%s3045 + $0x8] sm:$0xff]
                %3050 = vst [vmem:[%s3046 + $0x8] sm:$0xff] %v3049
                %v3051 = vld [vmem:[%s3045 + $0x10] sm:$0xff]
                %3052 = vst [vmem:[%s3046 + $0x10] sm:$0xff] %v3051
                %v3053 = vld [vmem:[%s3045 + $0x18] sm:$0xff]
                %3054 = vst [vmem:[%s3046 + $0x18] sm:$0xff] %v3053
                %v3055 = vld [vmem:[%s3045 + $0x20] sm:$0xff]
                %3056 = vst [vmem:[%s3046 + $0x20] sm:$0xff] %v3055
                %v3057 = vld [vmem:[%s3045 + $0x28] sm:$0xff]
                %3058 = vst [vmem:[%s3046 + $0x28] sm:$0xff] %v3057
                %v3059 = vld [vmem:[%s3045 + $0x30] sm:$0xff]
                %3060 = vst [vmem:[%s3046 + $0x30] sm:$0xff] %v3059
                %v3061 = vld [vmem:[%s3045 + $0x38] sm:$0xff]
                %3062 = vst [vmem:[%s3046 + $0x38] sm:$0xff] %v3061
                %v3063 = vld [vmem:[%s3045 + $0x40] sm:$0xff]
                %3064 = vst [vmem:[%s3046 + $0x40] sm:$0xff] %v3063
                %v3065 = vld [vmem:[%s3045 + $0x48] sm:$0xff]
                %3066 = vst [vmem:[%s3046 + $0x48] sm:$0xff] %v3065
                %v3067 = vld [vmem:[%s3045 + $0x50] sm:$0xff]
                %3068 = vst [vmem:[%s3046 + $0x50] sm:$0xff] %v3067
                %v3069 = vld [vmem:[%s3045 + $0x58] sm:$0xff]
                %3070 = vst [vmem:[%s3046 + $0x58] sm:$0xff] %v3069
                %v3071 = vld [vmem:[%s3045 + $0x60] sm:$0xff]
                %3072 = vst [vmem:[%s3046 + $0x60] sm:$0xff] %v3071
                %v3073 = vld [vmem:[%s3045 + $0x68] sm:$0xff]
                %3074 = vst [vmem:[%s3046 + $0x68] sm:$0xff] %v3073
                %v3075 = vld [vmem:[%s3045 + $0x70] sm:$0xff]
                %3076 = vst [vmem:[%s3046 + $0x70] sm:$0xff] %v3075
                %v3077 = vld [vmem:[%s3045 + $0x78] sm:$0xff]
                %3078 = vst [vmem:[%s3046 + $0x78] sm:$0xff] %v3077
                %s3079 = sadd.s32 1, %s3044
                %p3080 = scmp.ge.s32.totalorder %s3079, %s3037
                %s3081 = scalar_select %p3080, 0, %s3079
                %s3082 = smul.u32 %s3081, 128
                %s3083 = smul.u32 %s3081, 128
                %s3084 = scalar_lea.vmem %s2845, %s3082 [#allocation3]
                %s3085 = scalar_lea.vmem %s3028, %s3083
              $region129: #{tpu_custom_call.1} parent=123 // loop_footer
                %s3041 = sadd.s32 %s3039, 1
              $region130: #{tpu_custom_call.1} parent=123 // loop_footer_branch
                %3038 = sbr.rel target = $region126
              $region131: #{tpu_custom_call.1} parent=123 // loop_exit
                _
              %s3086 = sshrl.u32 %s3024, 4
              %s3087 = sand.u32 %s3024, 15
              %s3088 = smul.u32 %s3086, 16
              %s3089 = smul.u32 8, %s3088
              %s3090 = scalar_lea.vmem %s2845, %s3089 [#allocation3]
              %s3091 = smul.u32 8, %s3088
              %s3092 = scalar_lea.vmem %s3028, %s3091
              // While loop
              $region132: #{tpu_custom_call.1} parent=123 // loop_pre_header
                _
              $region133: #{tpu_custom_call.1} parent=123 // loop_header
                %s3094 = sphi 0, %s3096
                %p3095 = scmp.ge.s32.totalorder %s3094, %s3087
                %s3099 = sphi 0, %s3106
                %s3100 = sphi %s3090, %s3109
                %s3101 = sphi %s3092, %s3110
              $region134: #{tpu_custom_call.1} parent=123 // loop_header_branch
                %3098 = sbr.rel (%p3095) target = $region138
              $region135: #{tpu_custom_call.1} parent=123 // loop_body
                %v3102 = vld [vmem:[%s3100] sm:$0xff]
                %3103 = vst [vmem:[%s3101] sm:$0xff] %v3102
                %s3104 = sadd.s32 1, %s3099
                %p3105 = scmp.ge.s32.totalorder %s3104, %s3087
                %s3106 = scalar_select %p3105, 0, %s3104
                %s3107 = smul.u32 %s3106, 8
                %s3108 = smul.u32 %s3106, 8
                %s3109 = scalar_lea.vmem %s3090, %s3107 [#allocation3]
                %s3110 = scalar_lea.vmem %s3092, %s3108
              $region136: #{tpu_custom_call.1} parent=123 // loop_footer
                %s3096 = sadd.s32 %s3094, 1
              $region137: #{tpu_custom_call.1} parent=123 // loop_footer_branch
                %3093 = sbr.rel target = $region133
              $region138: #{tpu_custom_call.1} parent=123 // loop_exit
                _
            $region124: #{tpu_custom_call.1} parent=115 // pred_fallthru
              _
          $region116: #{tpu_custom_call.1} parent=111 // pred_fallthru
            _
          %3189 = vnop
        $region112: #{tpu_custom_call.1} parent=55 // pred_fallthru
          _
      $region56: #{tpu_custom_call.1} parent=5 // pred_fallthru
        _
      %p3190 = scmp.le.s32.totalorder 2, %s17
      // Predicated region
      $region161: #{tpu_custom_call.1} parent=5 // pred_check
        %p3191 = pneg %p3190
      $region162: #{tpu_custom_call.1} parent=5 // pred_check_branch
        %3193 = sbr.rel (%p3191) target = $region164
      $region163: #{tpu_custom_call.1} parent=5 // pred_region
        %s3194 = ssub.s32 %s17, 2
        // Predicated region
        $region165: #{tpu_custom_call.1} parent=163 // pred_check
          %p3195 = pneg %p245
        $region166: #{tpu_custom_call.1} parent=163 // pred_check_branch
          %3197 = sbr.rel (%p3195) target = $region168
        $region167: #{tpu_custom_call.1} parent=163 // pred_region
          %s3198 = sand.u32 %s230, 1
          %s3199 = sand.u32 %s230, 1
          %s3200 = smul.addr %s3199, 128
          %s3201 = scalar_lea.vmem [#allocation2], %s3200
        $region168: #{tpu_custom_call.1} parent=163 // pred_fallthru
          _
        // Predicated region
        $region169: #{tpu_custom_call.1} parent=163 // pred_check
          %p3202 = pneg %p271
        $region170: #{tpu_custom_call.1} parent=163 // pred_check_branch
          %3204 = sbr.rel (%p3202) target = $region172
        $region171: #{tpu_custom_call.1} parent=163 // pred_region
          %s3205 = sand.u32 %s256, 1
          %s3206 = sand.u32 %s256, 1
          %s3207 = smul.addr %s3206, 128
          %s3208 = scalar_lea.vmem [#allocation3], %s3207
        $region172: #{tpu_custom_call.1} parent=163 // pred_fallthru
          _
      $region164: #{tpu_custom_call.1} parent=5 // pred_fallthru
        _
    $region6: #{tpu_custom_call.1} parent=1 // loop_footer
      %s21 = sadd.s32 1, %s17
    $region7: #{tpu_custom_call.1} parent=1 // loop_footer_branch
      %16 = sbr.rel target = $region3
    $region8: #{tpu_custom_call.1} parent=1 // loop_exit
      _

</llo_original>
